<compile_context>
chip_gen: v5e
topology: v5e:2x2
jax: 0.10.0
libtpu: 0.0.40
codegen_flags: <defaults>
</compile_context>

<pallas_src>
import functools

import jax
import jax.numpy as jnp
from jax.experimental import pallas as pl
from jax.experimental.pallas import tpu as pltpu

BN_EPS = 1e-5
_VMEM_LIMIT = 32 * 1024 * 1024


# --------------------------------------------------------------------------
# Kernel 1: fused [apply previous BN scale/shift + ReLU] -> zero-pad ->
#           stride-1 KxK conv (one wide im2col matmul) -> per-tile batch-stat
#           partials (sum, sum of squares) of the raw conv output.
# --------------------------------------------------------------------------
def _conv_bn_stats_kernel(x_ref, w_ref, ss_ref, out_ref, stats_ref, *scratch,
                          K, pad, apply_in_act):
    """One batch sample per grid step.

    x_ref:     (1, H, W, Cin)     raw previous-layer conv output (or stem input)
    w_ref:     (K*K*Cin, Cout)    conv weights in im2col layout
    ss_ref:    (2, Cin)           [scale; shift] of the previous BN
                                  (ignored when apply_in_act=False)
    out_ref:   (1, ho, wo, Cout)  raw conv output (pre-BN)
    stats_ref: (1, 2, Cout)       per-sample [sum; sum of squares] of out
    scratch:   optional VMEM (H+2p, W+2p, Cin) zero-padded activation buffer
    """
    _, H, W, cin = x_ref.shape
    kkc, cout = w_ref.shape
    ho, wo = out_ref.shape[1], out_ref.shape[2]

    x = x_ref[0]                                               # (H, W, Cin)
    if apply_in_act:
        # Previous layer's BatchNorm folded to a single FMA, then ReLU.
        scale = ss_ref[0:1, :].reshape(1, 1, cin)
        shift = ss_ref[1:2, :].reshape(1, 1, cin)
        x = jnp.maximum(x * scale + shift, 0.0)

    if pad > 0:
        xpad_ref = scratch[0]
        Hp, Wp = H + 2 * pad, W + 2 * pad
        # Re-zero every grid step (scratch is shared per core; with "parallel"
        # megacore splitting a one-time init via program_id==0 would be unsafe).
        xpad_ref[...] = jnp.zeros((Hp, Wp, cin), jnp.float32)
        xpad_ref[pad:pad + H, pad:pad + W, :] = x
        xp = xpad_ref[...]
    else:
        xp = x

    # im2col: K*K unit-stride taps concatenated on the lane axis -> ONE wide
    # MXU matmul (contraction K*K*Cin) instead of K*K narrow ones.
    taps = [xp[kh:kh + ho, kw:kw + wo, :] for kh in range(K) for kw in range(K)]
    patches = jnp.concatenate(taps, axis=-1)                   # (ho, wo, K*K*Cin)
    acc = jnp.dot(patches.reshape(ho * wo, kkc), w_ref[...],
                  preferred_element_type=jnp.float32)          # (ho*wo, Cout)

    col_sum = jnp.sum(acc, axis=0, keepdims=True)              # (1, Cout)
    col_sqs = jnp.sum(acc * acc, axis=0, keepdims=True)        # (1, Cout)
    stats_ref[...] = jnp.concatenate([col_sum, col_sqs], axis=0).reshape(1, 2, cout)
    out_ref[...] = acc.reshape(1, ho, wo, cout)


# --------------------------------------------------------------------------
# Kernel 2: fused [conv3 BN scale/shift + ReLU] -> 3x3 / stride-2 / pad-1
#           max pool, vectorized via parity-reshape taps (no per-pixel stores).
# --------------------------------------------------------------------------
def _bn_relu_maxpool_kernel(x_ref, ss_ref, o_ref, qpad_ref):
    """x_ref: (1, H, W, C) raw conv3 output, H and W even."""
    _, H, W, C = x_ref.shape
    ho, wo = o_ref.shape[1], o_ref.shape[2]
    Hp, Wp = qpad_ref.shape[0], qpad_ref.shape[1]

    scale = ss_ref[0:1, :].reshape(1, 1, C)
    shift = ss_ref[1:2, :].reshape(1, 1, C)
    y = jnp.maximum(x_ref[0] * scale + shift, 0.0)             # (H, W, C), >= 0

    # Zero padding is equivalent to torch's -inf padding here: every 3x3
    # window contains at least one real post-ReLU (>= 0) element.
    qpad_ref[...] = jnp.zeros((Hp, Wp, C), jnp.float32)
    qpad_ref[1:1 + H, 1:1 + W, :] = y
    q = qpad_ref[...]

    # out[i,j] = max_{di,dj in 0..2} q[2i+di, 2j+dj], computed as 3+3 unit-
    # stride taps on an even/odd parity split along W then H, 4 vmax ops,
    # and a single full-block store.
    qw = q.reshape(Hp, Wp // 2, 2, C)
    r = jnp.maximum(jnp.maximum(qw[:, 0:wo, 0, :], qw[:, 0:wo, 1, :]),
                    qw[:, 1:1 + wo, 0, :])                     # (Hp, wo, C)
    rh = r.reshape(Hp // 2, 2, wo, C)
    out = jnp.maximum(jnp.maximum(rh[0:ho, 0, :, :], rh[0:ho, 1, :, :]),
                      rh[1:1 + ho, 0, :, :])                   # (ho, wo, C)
    o_ref[...] = out.reshape(1, ho, wo, C)


# --------------------------------------------------------------------------
# pallas_call wrappers (batch-tiled, "parallel" grid)
# --------------------------------------------------------------------------
def conv_bn_stats(x, w2d, ss, *, K, pad, apply_in_act):
    N, H, W, cin = x.shape
    kkc, cout = w2d.shape
    assert kkc == K * K * cin
    ho = H + 2 * pad - K + 1
    wo = W + 2 * pad - K + 1
    kernel = functools.partial(_conv_bn_stats_kernel, K=K, pad=pad,
                               apply_in_act=apply_in_act)
    scratch = []
    if pad > 0:
        scratch.append(pltpu.VMEM((H + 2 * pad, W + 2 * pad, cin), jnp.float32))
    return pl.pallas_call(
        kernel,
        out_shape=(jax.ShapeDtypeStruct((N, ho, wo, cout), jnp.float32),
                   jax.ShapeDtypeStruct((N, 2, cout), jnp.float32)),
        grid=(N,),
        in_specs=[pl.BlockSpec((1, H, W, cin), lambda i: (i, 0, 0, 0)),
                  pl.BlockSpec((kkc, cout), lambda i: (0, 0)),
                  pl.BlockSpec((2, cin), lambda i: (0, 0))],
        out_specs=(pl.BlockSpec((1, ho, wo, cout), lambda i: (i, 0, 0, 0)),
                   pl.BlockSpec((1, 2, cout), lambda i: (i, 0, 0))),
        scratch_shapes=scratch,
        compiler_params=pltpu.CompilerParams(
            dimension_semantics=("parallel",),
            vmem_limit_bytes=_VMEM_LIMIT),
    )(x, w2d, ss)


def bn_relu_maxpool(x, ss):
    N, H, W, C = x.shape
    assert H % 2 == 0 and W % 2 == 0
    ho, wo = H // 2, W // 2
    return pl.pallas_call(
        _bn_relu_maxpool_kernel,
        out_shape=jax.ShapeDtypeStruct((N, ho, wo, C), jnp.float32),
        grid=(N,),
        in_specs=[pl.BlockSpec((1, H, W, C), lambda i: (i, 0, 0, 0)),
                  pl.BlockSpec((2, C), lambda i: (0, 0))],
        out_specs=pl.BlockSpec((1, ho, wo, C), lambda i: (i, 0, 0, 0)),
        scratch_shapes=[pltpu.VMEM((H + 2, W + 2, C), jnp.float32)],
        compiler_params=pltpu.CompilerParams(
            dimension_semantics=("parallel",),
            vmem_limit_bytes=_VMEM_LIMIT),
    )(x, ss)


# --------------------------------------------------------------------------
# Glue: BN batch-stat reduction -> single (scale, shift) FMA for the consumer
# --------------------------------------------------------------------------
def _bn_scale_shift(stats, gamma, beta, count):
    total = jnp.sum(stats, axis=0)                   # (2, Cout): [sum; sumsq]
    mean = total[0] / count
    var = total[1] / count - mean * mean             # biased, as torch BN train
    scale = gamma * jax.lax.rsqrt(var + BN_EPS)
    shift = beta - mean * scale
    return jnp.stack([scale, shift], axis=0)         # (2, Cout)


# --------------------------------------------------------------------------
# Glue: stride-2 conv1 -> stride-1 2x2 conv via space-to-depth
# --------------------------------------------------------------------------
def _space_to_depth(x):
    """(N, H, W, C), even H, W  ->  (N, H/2, W/2, 4C); channel order (a, b, c)."""
    n, h, w, c = x.shape
    x = x.reshape(n, h // 2, 2, w // 2, 2, c)
    x = jnp.transpose(x, (0, 1, 3, 2, 4, 5))
    return x.reshape(n, h // 2, w // 2, 4 * c)


def _s2d_conv_weights(w):
    """3x3 stride-2 HWIO weight (3,3,Cin,Cout) -> equivalent 2x2 stride-1
    weight (2,2,4*Cin,Cout) acting on the space-to-depth input."""
    K, cin, cout = w.shape[0], w.shape[2], w.shape[3]
    w2 = jnp.zeros((2, 2, 4 * cin, cout), w.dtype)
    for p in range(2):
        for q in range(2):
            for a in range(2):
                for b in range(2):
                    kh, kw = 2 * p + a, 2 * q + b
                    if kh < K and kw < K:
                        ph = 2 * a + b
                        w2 = w2.at[p, q, ph * cin:(ph + 1) * cin, :].set(w[kh, kw])
    return w2


def prepare_params(params):
    """One-time (outside jit) preprocessing: conv1 weights rewritten for the
    space-to-depth stride-1 form; all conv weights reshaped to im2col layout."""
    w1s = _s2d_conv_weights(params["w1"])                     # (2, 2, 12, 32)
    return {
        "w1": w1s.reshape(2 * 2 * 12, 32),
        "w2": params["w2"].reshape(3 * 3 * 32, 32),
        "w3": params["w3"].reshape(3 * 3 * 32, 64),
        "g1": params["g1"], "b1": params["b1"],
        "g2": params["g2"], "b2": params["b2"],
        "g3": params["g3"], "b3": params["b3"],
    }


# --------------------------------------------------------------------------
# Full HeadLayer_C forward
# --------------------------------------------------------------------------
@jax.jit
def head_layer_c(x_nchw, prepped):
    N, _, H, W = x_nchw.shape
    assert H % 4 == 0 and W % 4 == 0, "spatial dims must be multiples of 4"

    # NCHW -> NHWC relayout + conv1 zero pad + space-to-depth: one fused XLA
    # copy over the (smallest, 3-channel) input tensor.
    x = jnp.transpose(x_nchw, (0, 2, 3, 1)).astype(jnp.float32)
    xs = _space_to_depth(jnp.pad(x, ((0, 0), (1, 1), (1, 1), (0, 0))))

    # conv1 (as stride-1 2x2 conv, no preceding BN to apply).
    dummy = jnp.zeros((2, xs.shape[-1]), jnp.float32)
    r1, st1 = conv_bn_stats(xs, prepped["w1"], dummy, K=2, pad=0, apply_in_act=False)
    ss1 = _bn_scale_shift(st1, prepped["g1"], prepped["b1"],
                          r1.shape[0] * r1.shape[1] * r1.shape[2])

    # conv2 / conv3: BN+ReLU of the previous layer and zero-padding are fused
    # into the kernel (no standalone pad / BN / ReLU HBM passes).
    r2, st2 = conv_bn_stats(r1, prepped["w2"], ss1, K=3, pad=1, apply_in_act=True)
    ss2 = _bn_scale_shift(st2, prepped["g2"], prepped["b2"],
                          r2.shape[0] * r2.shape[1] * r2.shape[2])

    r3, st3 = conv_bn_stats(r2, prepped["w3"], ss2, K=3, pad=1, apply_in_act=True)
    ss3 = _bn_scale_shift(st3, prepped["g3"], prepped["b3"],
                          r3.shape[0] * r3.shape[1] * r3.shape[2])

    # BN3 + ReLU + maxpool 3x3/s2/p1, fused.
    y = bn_relu_maxpool(r3, ss3)
    return jnp.transpose(y, (0, 3, 1, 2))                      # NHWC -> NCHW


# --------------------------------------------------------------------------
# Pure-JAX reference for validation
# --------------------------------------------------------------------------
def reference_forward(x_nchw, params):
    def conv(x, w, stride):
        return jax.lax.conv_general_dilated(
            x, w, (stride, stride), ((1, 1), (1, 1)),
            dimension_numbers=("NHWC", "HWIO", "NHWC"))

    def bn_relu(x, gamma, beta):
        mean = jnp.mean(x, axis=(0, 1, 2), keepdims=True)
        var = jnp.mean(jnp.square(x - mean), axis=(0, 1, 2), keepdims=True)
        y = (x - mean) * jax.lax.rsqrt(var + BN_EPS) * gamma + beta
        return jnp.maximum(y, 0.0)

    x = jnp.transpose(x_nchw, (0, 2, 3, 1)).astype(jnp.float32)
    x = bn_relu(conv(x, params["w1"], 2), params["g1"], params["b1"])
    x = bn_relu(conv(x, params["w2"], 1), params["g2"], params["b2"])
    x = bn_relu(conv(x, params["w3"], 1), params["g3"], params["b3"])
    x = jax.lax.reduce_window(x, -jnp.inf, jax.lax.max,
                              (1, 3, 3, 1), (1, 2, 2, 1),
                              ((0, 0), (1, 1), (1, 1), (0, 0)))
    return jnp.transpose(x, (0, 3, 1, 2))


# --------------------------------------------------------------------------
if __name__ == "__main__":
    key = jax.random.PRNGKey(0)
    ks = jax.random.split(key, 10)

    # Deterministic synthetic parameters (shapes from HeadLayer_C.__init__),
    # conv weights stored HWIO (torch stores OIHW; only the layout differs).
    params = {
        "w1": 0.20 * jax.random.normal(ks[0], (3, 3, 3, 32), jnp.float32),
        "g1": 1.0 + 0.1 * jax.random.normal(ks[1], (32,), jnp.float32),
        "b1": 0.1 * jax.random.normal(ks[2], (32,), jnp.float32),
        "w2": 0.10 * jax.random.normal(ks[3], (3, 3, 32, 32), jnp.float32),
        "g2": 1.0 + 0.1 * jax.random.normal(ks[4], (32,), jnp.float32),
        "b2": 0.1 * jax.random.normal(ks[5], (32,), jnp.float32),
        "w3": 0.10 * jax.random.normal(ks[6], (3, 3, 32, 64), jnp.float32),
        "g3": 1.0 + 0.1 * jax.random.normal(ks[7], (64,), jnp.float32),
        "b3": 0.1 * jax.random.normal(ks[8], (64,), jnp.float32),
    }

    x = jax.random.normal(ks[9], (2, 3, 16, 16), jnp.float32)    # NCHW input

    prepped = prepare_params(params)                             # once, outside jit
    out = jax.block_until_ready(head_layer_c(x, prepped))
    ref = jax.block_until_ready(reference_forward(x, params))

    assert out.shape == (2, 64, 4, 4), out.shape
    if not bool(jnp.allclose(out, ref, atol=1e-2, rtol=1e-2)):
        raise AssertionError(
            f"mismatch vs reference, max abs err = {float(jnp.max(jnp.abs(out - ref)))}")

    print("KERNEL_OK")
</pallas_src>

<mosaic_0001>
module attributes {stable_mosaic.version = 11 : i64} {
  func.func @_conv_bn_stats_kernel(%arg0: i32, %arg1: memref<1x9x9x12xf32, #tpu.memory_space<vmem>>, %arg2: memref<48x32xf32, #tpu.memory_space<vmem>>, %arg3: memref<2x12xf32, #tpu.memory_space<vmem>>, %arg4: memref<1x8x8x32xf32, #tpu.memory_space<vmem>>, %arg5: memref<1x2x32xf32, #tpu.memory_space<vmem>>) attributes {dimension_semantics = [#tpu.dimension_semantics<parallel>], iteration_bounds = array<i64: 2>, scalar_prefetch = 0 : i64, scratch_operands = 0 : i64, tpu.core_type = #tpu.core_type<tc>, window_params = [{transform_indices = @transform_0, window_bounds = array<i64: 1, 9, 9, 12>}, {pipeline_mode = #tpu.pipeline_mode<synchronous>, transform_indices = @transform_1, window_bounds = array<i64: 48, 32>}, {pipeline_mode = #tpu.pipeline_mode<synchronous>, transform_indices = @transform_2, window_bounds = array<i64: 2, 12>}, {transform_indices = @transform_3, window_bounds = array<i64: 1, 8, 8, 32>}, {transform_indices = @transform_4, window_bounds = array<i64: 1, 2, 32>}]} {
    %c0 = arith.constant 0 : index
    %c0_0 = arith.constant 0 : index
    %c0_1 = arith.constant 0 : index
    %c0_2 = arith.constant 0 : index
    %0 = vector.load %arg1[%c0, %c0_0, %c0_1, %c0_2] : memref<1x9x9x12xf32, #tpu.memory_space<vmem>>, vector<1x9x9x12xf32>
    %1 = vector.shape_cast %0 : vector<1x9x9x12xf32> to vector<9x9x12xf32>
    %2 = vector.extract_strided_slice %1 {offsets = [0, 0, 0], sizes = [8, 8, 12], strides = [1, 1, 1]} : vector<9x9x12xf32> to vector<8x8x12xf32>
    %3 = vector.extract_strided_slice %1 {offsets = [0, 1, 0], sizes = [8, 8, 12], strides = [1, 1, 1]} : vector<9x9x12xf32> to vector<8x8x12xf32>
    %4 = vector.extract_strided_slice %1 {offsets = [1, 0, 0], sizes = [8, 8, 12], strides = [1, 1, 1]} : vector<9x9x12xf32> to vector<8x8x12xf32>
    %5 = vector.extract_strided_slice %1 {offsets = [1, 1, 0], sizes = [8, 8, 12], strides = [1, 1, 1]} : vector<9x9x12xf32> to vector<8x8x12xf32>
    %6 = tpu.concatenate %2, %3, %4, %5 in 2 : vector<8x8x12xf32>, vector<8x8x12xf32>, vector<8x8x12xf32>, vector<8x8x12xf32> -> vector<8x8x48xf32>
    %7 = vector.shape_cast %6 : vector<8x8x48xf32> to vector<64x48xf32>
    %c0_3 = arith.constant 0 : index
    %c0_4 = arith.constant 0 : index
    %8 = vector.load %arg2[%c0_3, %c0_4] : memref<48x32xf32, #tpu.memory_space<vmem>>, vector<48x32xf32>
    %cst = arith.constant dense<0.000000e+00> : vector<64x32xf32>
    %9 = tpu.matmul %7, %8, %cst {dimension_numbers = #tpu.dot_dimension_numbers<[1], [0], [0], [1], [0, 0, 1, 1], [], []>} : vector<64x48xf32>, vector<48x32xf32>, vector<64x32xf32> -> vector<64x32xf32>
    %cst_5 = arith.constant dense<0.000000e+00> : vector<32xf32>
    %10 = vector.multi_reduction <add>, %9, %cst_5 [0] : vector<64x32xf32> to vector<32xf32>
    %11 = vector.shape_cast %10 : vector<32xf32> to vector<1x32xf32>
    %12 = arith.mulf %9, %9 : vector<64x32xf32>
    %cst_6 = arith.constant dense<0.000000e+00> : vector<32xf32>
    %13 = vector.multi_reduction <add>, %12, %cst_6 [0] : vector<64x32xf32> to vector<32xf32>
    %14 = vector.shape_cast %13 : vector<32xf32> to vector<1x32xf32>
    %15 = tpu.concatenate %11, %14 in 0 : vector<1x32xf32>, vector<1x32xf32> -> vector<2x32xf32>
    %16 = vector.shape_cast %15 : vector<2x32xf32> to vector<1x2x32xf32>
    %c0_7 = arith.constant 0 : index
    %c0_8 = arith.constant 0 : index
    %c0_9 = arith.constant 0 : index
    %17 = vector.load %arg5[%c0_7, %c0_8, %c0_9] : memref<1x2x32xf32, #tpu.memory_space<vmem>>, vector<1x2x32xf32>
    tpu.vector_store %arg5[%c0_7, %c0_8, %c0_9], %16 {strides = array<i32>} : memref<1x2x32xf32, #tpu.memory_space<vmem>>, vector<1x2x32xf32>,
    %18 = vector.shape_cast %9 : vector<64x32xf32> to vector<1x8x8x32xf32>
    %c0_10 = arith.constant 0 : index
    %c0_11 = arith.constant 0 : index
    %c0_12 = arith.constant 0 : index
    %c0_13 = arith.constant 0 : index
    %19 = vector.load %arg4[%c0_10, %c0_11, %c0_12, %c0_13] : memref<1x8x8x32xf32, #tpu.memory_space<vmem>>, vector<1x8x8x32xf32>
    tpu.vector_store %arg4[%c0_10, %c0_11, %c0_12, %c0_13], %18 {strides = array<i32>} : memref<1x8x8x32xf32, #tpu.memory_space<vmem>>, vector<1x8x8x32xf32>,
    return
  }
  func.func @transform_0(%arg0: i32) -> (i32, i32, i32, i32) {
    %c0_i32 = arith.constant 0 : i32
    %c0_i32_0 = arith.constant 0 : i32
    %c0_i32_1 = arith.constant 0 : i32
    %c0_i32_2 = arith.constant 0 : i32
    return %arg0, %c0_i32, %c0_i32_0, %c0_i32_1 : i32, i32, i32, i32
  }
  func.func @transform_1(%arg0: i32) -> (i32, i32) {
    %c0_i32 = arith.constant 0 : i32
    %c0_i32_0 = arith.constant 0 : i32
    %c0_i32_1 = arith.constant 0 : i32
    return %c0_i32, %c0_i32_0 : i32, i32
  }
  func.func @transform_2(%arg0: i32) -> (i32, i32) {
    %c0_i32 = arith.constant 0 : i32
    %c0_i32_0 = arith.constant 0 : i32
    %c0_i32_1 = arith.constant 0 : i32
    return %c0_i32, %c0_i32_0 : i32, i32
  }
  func.func @transform_3(%arg0: i32) -> (i32, i32, i32, i32) {
    %c0_i32 = arith.constant 0 : i32
    %c0_i32_0 = arith.constant 0 : i32
    %c0_i32_1 = arith.constant 0 : i32
    %c0_i32_2 = arith.constant 0 : i32
    return %arg0, %c0_i32, %c0_i32_0, %c0_i32_1 : i32, i32, i32, i32
  }
  func.func @transform_4(%arg0: i32) -> (i32, i32, i32) {
    %c0_i32 = arith.constant 0 : i32
    %c0_i32_0 = arith.constant 0 : i32
    %c0_i32_1 = arith.constant 0 : i32
    return %arg0, %c0_i32, %c0_i32_0 : i32, i32, i32
  }
}

module attributes {stable_mosaic.version = 11 : i64} {
  func.func @_conv_bn_stats_kernel(%arg0: i32, %arg1: memref<1x8x8x32xf32, #tpu.memory_space<vmem>>, %arg2: memref<288x32xf32, #tpu.memory_space<vmem>>, %arg3: memref<2x32xf32, #tpu.memory_space<vmem>>, %arg4: memref<1x8x8x32xf32, #tpu.memory_space<vmem>>, %arg5: memref<1x2x32xf32, #tpu.memory_space<vmem>>, %arg6: memref<10x10x32xf32, #tpu.memory_space<vmem>>) attributes {dimension_semantics = [#tpu.dimension_semantics<parallel>], iteration_bounds = array<i64: 2>, scalar_prefetch = 0 : i64, scratch_operands = 1 : i64, tpu.core_type = #tpu.core_type<tc>, window_params = [{transform_indices = @transform_0, window_bounds = array<i64: 1, 8, 8, 32>}, {pipeline_mode = #tpu.pipeline_mode<synchronous>, transform_indices = @transform_1, window_bounds = array<i64: 288, 32>}, {pipeline_mode = #tpu.pipeline_mode<synchronous>, transform_indices = @transform_2, window_bounds = array<i64: 2, 32>}, {transform_indices = @transform_3, window_bounds = array<i64: 1, 8, 8, 32>}, {transform_indices = @transform_4, window_bounds = array<i64: 1, 2, 32>}]} {
    %c0 = arith.constant 0 : index
    %c0_0 = arith.constant 0 : index
    %c0_1 = arith.constant 0 : index
    %c0_2 = arith.constant 0 : index
    %0 = vector.load %arg1[%c0, %c0_0, %c0_1, %c0_2] : memref<1x8x8x32xf32, #tpu.memory_space<vmem>>, vector<1x8x8x32xf32>
    %1 = vector.shape_cast %0 : vector<1x8x8x32xf32> to vector<8x8x32xf32>
    %c0_3 = arith.constant 0 : index
    %c0_4 = arith.constant 0 : index
    %2 = vector.load %arg3[%c0_3, %c0_4] : memref<2x32xf32, #tpu.memory_space<vmem>>, vector<1x32xf32>
    %3 = vector.shape_cast %2 : vector<1x32xf32> to vector<1x1x32xf32>
    %c1 = arith.constant 1 : index
    %c0_5 = arith.constant 0 : index
    %4 = vector.load %arg3[%c1, %c0_5] : memref<2x32xf32, #tpu.memory_space<vmem>>, vector<1x32xf32>
    %5 = vector.shape_cast %4 : vector<1x32xf32> to vector<1x1x32xf32>
    %6 = vector.broadcast %3 : vector<1x1x32xf32> to vector<8x8x32xf32>
    %7 = arith.mulf %1, %6 : vector<8x8x32xf32>
    %8 = vector.broadcast %5 : vector<1x1x32xf32> to vector<8x8x32xf32>
    %9 = arith.addf %7, %8 : vector<8x8x32xf32>
    %cst = arith.constant 0.000000e+00 : f32
    %10 = vector.broadcast %cst : f32 to vector<8x8x32xf32>
    %11 = arith.maximumf %9, %10 : vector<8x8x32xf32>
    %cst_6 = arith.constant 0.000000e+00 : f32
    %12 = vector.broadcast %cst_6 : f32 to vector<10x10x32xf32>
    %c0_7 = arith.constant 0 : index
    %c0_8 = arith.constant 0 : index
    %c0_9 = arith.constant 0 : index
    %13 = vector.load %arg6[%c0_7, %c0_8, %c0_9] : memref<10x10x32xf32, #tpu.memory_space<vmem>>, vector<10x10x32xf32>
    tpu.vector_store %arg6[%c0_7, %c0_8, %c0_9], %12 {strides = array<i32>} : memref<10x10x32xf32, #tpu.memory_space<vmem>>, vector<10x10x32xf32>,
    %c1_10 = arith.constant 1 : index
    %c1_11 = arith.constant 1 : index
    %c0_12 = arith.constant 0 : index
    %14 = vector.load %arg6[%c1_10, %c1_11, %c0_12] : memref<10x10x32xf32, #tpu.memory_space<vmem>>, vector<8x8x32xf32>
    tpu.vector_store %arg6[%c1_10, %c1_11, %c0_12], %11 {strides = array<i32>} : memref<10x10x32xf32, #tpu.memory_space<vmem>>, vector<8x8x32xf32>,
    %c0_13 = arith.constant 0 : index
    %c0_14 = arith.constant 0 : index
    %c0_15 = arith.constant 0 : index
    %15 = vector.load %arg6[%c0_13, %c0_14, %c0_15] : memref<10x10x32xf32, #tpu.memory_space<vmem>>, vector<10x10x32xf32>
    %16 = vector.extract_strided_slice %15 {offsets = [0, 0, 0], sizes = [8, 8, 32], strides = [1, 1, 1]} : vector<10x10x32xf32> to vector<8x8x32xf32>
    %17 = vector.extract_strided_slice %15 {offsets = [0, 1, 0], sizes = [8, 8, 32], strides = [1, 1, 1]} : vector<10x10x32xf32> to vector<8x8x32xf32>
    %18 = vector.extract_strided_slice %15 {offsets = [0, 2, 0], sizes = [8, 8, 32], strides = [1, 1, 1]} : vector<10x10x32xf32> to vector<8x8x32xf32>
    %19 = vector.extract_strided_slice %15 {offsets = [1, 0, 0], sizes = [8, 8, 32], strides = [1, 1, 1]} : vector<10x10x32xf32> to vector<8x8x32xf32>
    %20 = vector.extract_strided_slice %15 {offsets = [1, 1, 0], sizes = [8, 8, 32], strides = [1, 1, 1]} : vector<10x10x32xf32> to vector<8x8x32xf32>
    %21 = vector.extract_strided_slice %15 {offsets = [1, 2, 0], sizes = [8, 8, 32], strides = [1, 1, 1]} : vector<10x10x32xf32> to vector<8x8x32xf32>
    %22 = vector.extract_strided_slice %15 {offsets = [2, 0, 0], sizes = [8, 8, 32], strides = [1, 1, 1]} : vector<10x10x32xf32> to vector<8x8x32xf32>
    %23 = vector.extract_strided_slice %15 {offsets = [2, 1, 0], sizes = [8, 8, 32], strides = [1, 1, 1]} : vector<10x10x32xf32> to vector<8x8x32xf32>
    %24 = vector.extract_strided_slice %15 {offsets = [2, 2, 0], sizes = [8, 8, 32], strides = [1, 1, 1]} : vector<10x10x32xf32> to vector<8x8x32xf32>
    %25 = tpu.concatenate %16, %17, %18, %19, %20, %21, %22, %23, %24 in 2 : vector<8x8x32xf32>, vector<8x8x32xf32>, vector<8x8x32xf32>, vector<8x8x32xf32>, vector<8x8x32xf32>, vector<8x8x32xf32>, vector<8x8x32xf32>, vector<8x8x32xf32>, vector<8x8x32xf32> -> vector<8x8x288xf32>
    %26 = vector.shape_cast %25 : vector<8x8x288xf32> to vector<64x288xf32>
    %c0_16 = arith.constant 0 : index
    %c0_17 = arith.constant 0 : index
    %27 = vector.load %arg2[%c0_16, %c0_17] : memref<288x32xf32, #tpu.memory_space<vmem>>, vector<288x32xf32>
    %cst_18 = arith.constant dense<0.000000e+00> : vector<64x32xf32>
    %28 = tpu.matmul %26, %27, %cst_18 {dimension_numbers = #tpu.dot_dimension_numbers<[1], [0], [0], [1], [0, 0, 1, 1], [], []>} : vector<64x288xf32>, vector<288x32xf32>, vector<64x32xf32> -> vector<64x32xf32>
    %cst_19 = arith.constant dense<0.000000e+00> : vector<32xf32>
    %29 = vector.multi_reduction <add>, %28, %cst_19 [0] : vector<64x32xf32> to vector<32xf32>
    %30 = vector.shape_cast %29 : vector<32xf32> to vector<1x32xf32>
    %31 = arith.mulf %28, %28 : vector<64x32xf32>
    %cst_20 = arith.constant dense<0.000000e+00> : vector<32xf32>
    %32 = vector.multi_reduction <add>, %31, %cst_20 [0] : vector<64x32xf32> to vector<32xf32>
    %33 = vector.shape_cast %32 : vector<32xf32> to vector<1x32xf32>
    %34 = tpu.concatenate %30, %33 in 0 : vector<1x32xf32>, vector<1x32xf32> -> vector<2x32xf32>
    %35 = vector.shape_cast %34 : vector<2x32xf32> to vector<1x2x32xf32>
    %c0_21 = arith.constant 0 : index
    %c0_22 = arith.constant 0 : index
    %c0_23 = arith.constant 0 : index
    %36 = vector.load %arg5[%c0_21, %c0_22, %c0_23] : memref<1x2x32xf32, #tpu.memory_space<vmem>>, vector<1x2x32xf32>
    tpu.vector_store %arg5[%c0_21, %c0_22, %c0_23], %35 {strides = array<i32>} : memref<1x2x32xf32, #tpu.memory_space<vmem>>, vector<1x2x32xf32>,
    %37 = vector.shape_cast %28 : vector<64x32xf32> to vector<1x8x8x32xf32>
    %c0_24 = arith.constant 0 : index
    %c0_25 = arith.constant 0 : index
    %c0_26 = arith.constant 0 : index
    %c0_27 = arith.constant 0 : index
    %38 = vector.load %arg4[%c0_24, %c0_25, %c0_26, %c0_27] : memref<1x8x8x32xf32, #tpu.memory_space<vmem>>, vector<1x8x8x32xf32>
    tpu.vector_store %arg4[%c0_24, %c0_25, %c0_26, %c0_27], %37 {strides = array<i32>} : memref<1x8x8x32xf32, #tpu.memory_space<vmem>>, vector<1x8x8x32xf32>,
    return
  }
  func.func @transform_0(%arg0: i32) -> (i32, i32, i32, i32) {
    %c0_i32 = arith.constant 0 : i32
    %c0_i32_0 = arith.constant 0 : i32
    %c0_i32_1 = arith.constant 0 : i32
    %c0_i32_2 = arith.constant 0 : i32
    return %arg0, %c0_i32, %c0_i32_0, %c0_i32_1 : i32, i32, i32, i32
  }
  func.func @transform_1(%arg0: i32) -> (i32, i32) {
    %c0_i32 = arith.constant 0 : i32
    %c0_i32_0 = arith.constant 0 : i32
    %c0_i32_1 = arith.constant 0 : i32
    return %c0_i32, %c0_i32_0 : i32, i32
  }
  func.func @transform_2(%arg0: i32) -> (i32, i32) {
    %c0_i32 = arith.constant 0 : i32
    %c0_i32_0 = arith.constant 0 : i32
    %c0_i32_1 = arith.constant 0 : i32
    return %c0_i32, %c0_i32_0 : i32, i32
  }
  func.func @transform_3(%arg0: i32) -> (i32, i32, i32, i32) {
    %c0_i32 = arith.constant 0 : i32
    %c0_i32_0 = arith.constant 0 : i32
    %c0_i32_1 = arith.constant 0 : i32
    %c0_i32_2 = arith.constant 0 : i32
    return %arg0, %c0_i32, %c0_i32_0, %c0_i32_1 : i32, i32, i32, i32
  }
  func.func @transform_4(%arg0: i32) -> (i32, i32, i32) {
    %c0_i32 = arith.constant 0 : i32
    %c0_i32_0 = arith.constant 0 : i32
    %c0_i32_1 = arith.constant 0 : i32
    return %arg0, %c0_i32, %c0_i32_0 : i32, i32, i32
  }
}

module attributes {stable_mosaic.version = 11 : i64} {
  func.func @_conv_bn_stats_kernel(%arg0: i32, %arg1: memref<1x8x8x32xf32, #tpu.memory_space<vmem>>, %arg2: memref<288x64xf32, #tpu.memory_space<vmem>>, %arg3: memref<2x32xf32, #tpu.memory_space<vmem>>, %arg4: memref<1x8x8x64xf32, #tpu.memory_space<vmem>>, %arg5: memref<1x2x64xf32, #tpu.memory_space<vmem>>, %arg6: memref<10x10x32xf32, #tpu.memory_space<vmem>>) attributes {dimension_semantics = [#tpu.dimension_semantics<parallel>], iteration_bounds = array<i64: 2>, scalar_prefetch = 0 : i64, scratch_operands = 1 : i64, tpu.core_type = #tpu.core_type<tc>, window_params = [{transform_indices = @transform_0, window_bounds = array<i64: 1, 8, 8, 32>}, {pipeline_mode = #tpu.pipeline_mode<synchronous>, transform_indices = @transform_1, window_bounds = array<i64: 288, 64>}, {pipeline_mode = #tpu.pipeline_mode<synchronous>, transform_indices = @transform_2, window_bounds = array<i64: 2, 32>}, {transform_indices = @transform_3, window_bounds = array<i64: 1, 8, 8, 64>}, {transform_indices = @transform_4, window_bounds = array<i64: 1, 2, 64>}]} {
    %c0 = arith.constant 0 : index
    %c0_0 = arith.constant 0 : index
    %c0_1 = arith.constant 0 : index
    %c0_2 = arith.constant 0 : index
    %0 = vector.load %arg1[%c0, %c0_0, %c0_1, %c0_2] : memref<1x8x8x32xf32, #tpu.memory_space<vmem>>, vector<1x8x8x32xf32>
    %1 = vector.shape_cast %0 : vector<1x8x8x32xf32> to vector<8x8x32xf32>
    %c0_3 = arith.constant 0 : index
    %c0_4 = arith.constant 0 : index
    %2 = vector.load %arg3[%c0_3, %c0_4] : memref<2x32xf32, #tpu.memory_space<vmem>>, vector<1x32xf32>
    %3 = vector.shape_cast %2 : vector<1x32xf32> to vector<1x1x32xf32>
    %c1 = arith.constant 1 : index
    %c0_5 = arith.constant 0 : index
    %4 = vector.load %arg3[%c1, %c0_5] : memref<2x32xf32, #tpu.memory_space<vmem>>, vector<1x32xf32>
    %5 = vector.shape_cast %4 : vector<1x32xf32> to vector<1x1x32xf32>
    %6 = vector.broadcast %3 : vector<1x1x32xf32> to vector<8x8x32xf32>
    %7 = arith.mulf %1, %6 : vector<8x8x32xf32>
    %8 = vector.broadcast %5 : vector<1x1x32xf32> to vector<8x8x32xf32>
    %9 = arith.addf %7, %8 : vector<8x8x32xf32>
    %cst = arith.constant 0.000000e+00 : f32
    %10 = vector.broadcast %cst : f32 to vector<8x8x32xf32>
    %11 = arith.maximumf %9, %10 : vector<8x8x32xf32>
    %cst_6 = arith.constant 0.000000e+00 : f32
    %12 = vector.broadcast %cst_6 : f32 to vector<10x10x32xf32>
    %c0_7 = arith.constant 0 : index
    %c0_8 = arith.constant 0 : index
    %c0_9 = arith.constant 0 : index
    %13 = vector.load %arg6[%c0_7, %c0_8, %c0_9] : memref<10x10x32xf32, #tpu.memory_space<vmem>>, vector<10x10x32xf32>
    tpu.vector_store %arg6[%c0_7, %c0_8, %c0_9], %12 {strides = array<i32>} : memref<10x10x32xf32, #tpu.memory_space<vmem>>, vector<10x10x32xf32>,
    %c1_10 = arith.constant 1 : index
    %c1_11 = arith.constant 1 : index
    %c0_12 = arith.constant 0 : index
    %14 = vector.load %arg6[%c1_10, %c1_11, %c0_12] : memref<10x10x32xf32, #tpu.memory_space<vmem>>, vector<8x8x32xf32>
    tpu.vector_store %arg6[%c1_10, %c1_11, %c0_12], %11 {strides = array<i32>} : memref<10x10x32xf32, #tpu.memory_space<vmem>>, vector<8x8x32xf32>,
    %c0_13 = arith.constant 0 : index
    %c0_14 = arith.constant 0 : index
    %c0_15 = arith.constant 0 : index
    %15 = vector.load %arg6[%c0_13, %c0_14, %c0_15] : memref<10x10x32xf32, #tpu.memory_space<vmem>>, vector<10x10x32xf32>
    %16 = vector.extract_strided_slice %15 {offsets = [0, 0, 0], sizes = [8, 8, 32], strides = [1, 1, 1]} : vector<10x10x32xf32> to vector<8x8x32xf32>
    %17 = vector.extract_strided_slice %15 {offsets = [0, 1, 0], sizes = [8, 8, 32], strides = [1, 1, 1]} : vector<10x10x32xf32> to vector<8x8x32xf32>
    %18 = vector.extract_strided_slice %15 {offsets = [0, 2, 0], sizes = [8, 8, 32], strides = [1, 1, 1]} : vector<10x10x32xf32> to vector<8x8x32xf32>
    %19 = vector.extract_strided_slice %15 {offsets = [1, 0, 0], sizes = [8, 8, 32], strides = [1, 1, 1]} : vector<10x10x32xf32> to vector<8x8x32xf32>
    %20 = vector.extract_strided_slice %15 {offsets = [1, 1, 0], sizes = [8, 8, 32], strides = [1, 1, 1]} : vector<10x10x32xf32> to vector<8x8x32xf32>
    %21 = vector.extract_strided_slice %15 {offsets = [1, 2, 0], sizes = [8, 8, 32], strides = [1, 1, 1]} : vector<10x10x32xf32> to vector<8x8x32xf32>
    %22 = vector.extract_strided_slice %15 {offsets = [2, 0, 0], sizes = [8, 8, 32], strides = [1, 1, 1]} : vector<10x10x32xf32> to vector<8x8x32xf32>
    %23 = vector.extract_strided_slice %15 {offsets = [2, 1, 0], sizes = [8, 8, 32], strides = [1, 1, 1]} : vector<10x10x32xf32> to vector<8x8x32xf32>
    %24 = vector.extract_strided_slice %15 {offsets = [2, 2, 0], sizes = [8, 8, 32], strides = [1, 1, 1]} : vector<10x10x32xf32> to vector<8x8x32xf32>
    %25 = tpu.concatenate %16, %17, %18, %19, %20, %21, %22, %23, %24 in 2 : vector<8x8x32xf32>, vector<8x8x32xf32>, vector<8x8x32xf32>, vector<8x8x32xf32>, vector<8x8x32xf32>, vector<8x8x32xf32>, vector<8x8x32xf32>, vector<8x8x32xf32>, vector<8x8x32xf32> -> vector<8x8x288xf32>
    %26 = vector.shape_cast %25 : vector<8x8x288xf32> to vector<64x288xf32>
    %c0_16 = arith.constant 0 : index
    %c0_17 = arith.constant 0 : index
    %27 = vector.load %arg2[%c0_16, %c0_17] : memref<288x64xf32, #tpu.memory_space<vmem>>, vector<288x64xf32>
    %cst_18 = arith.constant dense<0.000000e+00> : vector<64x64xf32>
    %28 = tpu.matmul %26, %27, %cst_18 {dimension_numbers = #tpu.dot_dimension_numbers<[1], [0], [0], [1], [0, 0, 1, 1], [], []>} : vector<64x288xf32>, vector<288x64xf32>, vector<64x64xf32> -> vector<64x64xf32>
    %cst_19 = arith.constant dense<0.000000e+00> : vector<64xf32>
    %29 = vector.multi_reduction <add>, %28, %cst_19 [0] : vector<64x64xf32> to vector<64xf32>
    %30 = vector.shape_cast %29 : vector<64xf32> to vector<1x64xf32>
    %31 = arith.mulf %28, %28 : vector<64x64xf32>
    %cst_20 = arith.constant dense<0.000000e+00> : vector<64xf32>
    %32 = vector.multi_reduction <add>, %31, %cst_20 [0] : vector<64x64xf32> to vector<64xf32>
    %33 = vector.shape_cast %32 : vector<64xf32> to vector<1x64xf32>
    %34 = tpu.concatenate %30, %33 in 0 : vector<1x64xf32>, vector<1x64xf32> -> vector<2x64xf32>
    %35 = vector.shape_cast %34 : vector<2x64xf32> to vector<1x2x64xf32>
    %c0_21 = arith.constant 0 : index
    %c0_22 = arith.constant 0 : index
    %c0_23 = arith.constant 0 : index
    %36 = vector.load %arg5[%c0_21, %c0_22, %c0_23] : memref<1x2x64xf32, #tpu.memory_space<vmem>>, vector<1x2x64xf32>
    tpu.vector_store %arg5[%c0_21, %c0_22, %c0_23], %35 {strides = array<i32>} : memref<1x2x64xf32, #tpu.memory_space<vmem>>, vector<1x2x64xf32>,
    %37 = vector.shape_cast %28 : vector<64x64xf32> to vector<1x8x8x64xf32>
    %c0_24 = arith.constant 0 : index
    %c0_25 = arith.constant 0 : index
    %c0_26 = arith.constant 0 : index
    %c0_27 = arith.constant 0 : index
    %38 = vector.load %arg4[%c0_24, %c0_25, %c0_26, %c0_27] : memref<1x8x8x64xf32, #tpu.memory_space<vmem>>, vector<1x8x8x64xf32>
    tpu.vector_store %arg4[%c0_24, %c0_25, %c0_26, %c0_27], %37 {strides = array<i32>} : memref<1x8x8x64xf32, #tpu.memory_space<vmem>>, vector<1x8x8x64xf32>,
    return
  }
  func.func @transform_0(%arg0: i32) -> (i32, i32, i32, i32) {
    %c0_i32 = arith.constant 0 : i32
    %c0_i32_0 = arith.constant 0 : i32
    %c0_i32_1 = arith.constant 0 : i32
    %c0_i32_2 = arith.constant 0 : i32
    return %arg0, %c0_i32, %c0_i32_0, %c0_i32_1 : i32, i32, i32, i32
  }
  func.func @transform_1(%arg0: i32) -> (i32, i32) {
    %c0_i32 = arith.constant 0 : i32
    %c0_i32_0 = arith.constant 0 : i32
    %c0_i32_1 = arith.constant 0 : i32
    return %c0_i32, %c0_i32_0 : i32, i32
  }
  func.func @transform_2(%arg0: i32) -> (i32, i32) {
    %c0_i32 = arith.constant 0 : i32
    %c0_i32_0 = arith.constant 0 : i32
    %c0_i32_1 = arith.constant 0 : i32
    return %c0_i32, %c0_i32_0 : i32, i32
  }
  func.func @transform_3(%arg0: i32) -> (i32, i32, i32, i32) {
    %c0_i32 = arith.constant 0 : i32
    %c0_i32_0 = arith.constant 0 : i32
    %c0_i32_1 = arith.constant 0 : i32
    %c0_i32_2 = arith.constant 0 : i32
    return %arg0, %c0_i32, %c0_i32_0, %c0_i32_1 : i32, i32, i32, i32
  }
  func.func @transform_4(%arg0: i32) -> (i32, i32, i32) {
    %c0_i32 = arith.constant 0 : i32
    %c0_i32_0 = arith.constant 0 : i32
    %c0_i32_1 = arith.constant 0 : i32
    return %arg0, %c0_i32, %c0_i32_0 : i32, i32, i32
  }
}

module attributes {stable_mosaic.version = 11 : i64} {
  func.func @_bn_relu_maxpool_kernel(%arg0: i32, %arg1: memref<1x8x8x64xf32, #tpu.memory_space<vmem>>, %arg2: memref<2x64xf32, #tpu.memory_space<vmem>>, %arg3: memref<1x4x4x64xf32, #tpu.memory_space<vmem>>, %arg4: memref<10x10x64xf32, #tpu.memory_space<vmem>>) attributes {dimension_semantics = [#tpu.dimension_semantics<parallel>], iteration_bounds = array<i64: 2>, scalar_prefetch = 0 : i64, scratch_operands = 1 : i64, tpu.core_type = #tpu.core_type<tc>, window_params = [{transform_indices = @transform_0, window_bounds = array<i64: 1, 8, 8, 64>}, {pipeline_mode = #tpu.pipeline_mode<synchronous>, transform_indices = @transform_1, window_bounds = array<i64: 2, 64>}, {transform_indices = @transform_2, window_bounds = array<i64: 1, 4, 4, 64>}]} {
    %c0 = arith.constant 0 : index
    %c0_0 = arith.constant 0 : index
    %0 = vector.load %arg2[%c0, %c0_0] : memref<2x64xf32, #tpu.memory_space<vmem>>, vector<1x64xf32>
    %1 = vector.shape_cast %0 : vector<1x64xf32> to vector<1x1x64xf32>
    %c1 = arith.constant 1 : index
    %c0_1 = arith.constant 0 : index
    %2 = vector.load %arg2[%c1, %c0_1] : memref<2x64xf32, #tpu.memory_space<vmem>>, vector<1x64xf32>
    %3 = vector.shape_cast %2 : vector<1x64xf32> to vector<1x1x64xf32>
    %c0_2 = arith.constant 0 : index
    %c0_3 = arith.constant 0 : index
    %c0_4 = arith.constant 0 : index
    %c0_5 = arith.constant 0 : index
    %4 = vector.load %arg1[%c0_2, %c0_3, %c0_4, %c0_5] : memref<1x8x8x64xf32, #tpu.memory_space<vmem>>, vector<1x8x8x64xf32>
    %5 = vector.shape_cast %4 : vector<1x8x8x64xf32> to vector<8x8x64xf32>
    %6 = vector.broadcast %1 : vector<1x1x64xf32> to vector<8x8x64xf32>
    %7 = arith.mulf %5, %6 : vector<8x8x64xf32>
    %8 = vector.broadcast %3 : vector<1x1x64xf32> to vector<8x8x64xf32>
    %9 = arith.addf %7, %8 : vector<8x8x64xf32>
    %cst = arith.constant 0.000000e+00 : f32
    %10 = vector.broadcast %cst : f32 to vector<8x8x64xf32>
    %11 = arith.maximumf %9, %10 : vector<8x8x64xf32>
    %cst_6 = arith.constant 0.000000e+00 : f32
    %12 = vector.broadcast %cst_6 : f32 to vector<10x10x64xf32>
    %c0_7 = arith.constant 0 : index
    %c0_8 = arith.constant 0 : index
    %c0_9 = arith.constant 0 : index
    %13 = vector.load %arg4[%c0_7, %c0_8, %c0_9] : memref<10x10x64xf32, #tpu.memory_space<vmem>>, vector<10x10x64xf32>
    tpu.vector_store %arg4[%c0_7, %c0_8, %c0_9], %12 {strides = array<i32>} : memref<10x10x64xf32, #tpu.memory_space<vmem>>, vector<10x10x64xf32>,
    %c1_10 = arith.constant 1 : index
    %c1_11 = arith.constant 1 : index
    %c0_12 = arith.constant 0 : index
    %14 = vector.load %arg4[%c1_10, %c1_11, %c0_12] : memref<10x10x64xf32, #tpu.memory_space<vmem>>, vector<8x8x64xf32>
    tpu.vector_store %arg4[%c1_10, %c1_11, %c0_12], %11 {strides = array<i32>} : memref<10x10x64xf32, #tpu.memory_space<vmem>>, vector<8x8x64xf32>,
    %c0_13 = arith.constant 0 : index
    %c0_14 = arith.constant 0 : index
    %c0_15 = arith.constant 0 : index
    %15 = vector.load %arg4[%c0_13, %c0_14, %c0_15] : memref<10x10x64xf32, #tpu.memory_space<vmem>>, vector<10x10x64xf32>
    %16 = vector.shape_cast %15 : vector<10x10x64xf32> to vector<10x5x2x64xf32>
    %17 = vector.extract_strided_slice %16 {offsets = [0, 0, 0, 0], sizes = [10, 4, 1, 64], strides = [1, 1, 1, 1]} : vector<10x5x2x64xf32> to vector<10x4x1x64xf32>
    %18 = vector.shape_cast %17 : vector<10x4x1x64xf32> to vector<10x4x64xf32>
    %19 = vector.extract_strided_slice %16 {offsets = [0, 0, 1, 0], sizes = [10, 4, 1, 64], strides = [1, 1, 1, 1]} : vector<10x5x2x64xf32> to vector<10x4x1x64xf32>
    %20 = vector.shape_cast %19 : vector<10x4x1x64xf32> to vector<10x4x64xf32>
    %21 = arith.maximumf %18, %20 : vector<10x4x64xf32>
    %22 = vector.extract_strided_slice %16 {offsets = [0, 1, 0, 0], sizes = [10, 4, 1, 64], strides = [1, 1, 1, 1]} : vector<10x5x2x64xf32> to vector<10x4x1x64xf32>
    %23 = vector.shape_cast %22 : vector<10x4x1x64xf32> to vector<10x4x64xf32>
    %24 = arith.maximumf %21, %23 : vector<10x4x64xf32>
    %25 = vector.shape_cast %24 : vector<10x4x64xf32> to vector<5x2x4x64xf32>
    %26 = vector.extract_strided_slice %25 {offsets = [0, 0, 0, 0], sizes = [4, 1, 4, 64], strides = [1, 1, 1, 1]} : vector<5x2x4x64xf32> to vector<4x1x4x64xf32>
    %27 = vector.shape_cast %26 : vector<4x1x4x64xf32> to vector<4x4x64xf32>
    %28 = vector.extract_strided_slice %25 {offsets = [0, 1, 0, 0], sizes = [4, 1, 4, 64], strides = [1, 1, 1, 1]} : vector<5x2x4x64xf32> to vector<4x1x4x64xf32>
    %29 = vector.shape_cast %28 : vector<4x1x4x64xf32> to vector<4x4x64xf32>
    %30 = arith.maximumf %27, %29 : vector<4x4x64xf32>
    %31 = vector.extract_strided_slice %25 {offsets = [1, 0, 0, 0], sizes = [4, 1, 4, 64], strides = [1, 1, 1, 1]} : vector<5x2x4x64xf32> to vector<4x1x4x64xf32>
    %32 = vector.shape_cast %31 : vector<4x1x4x64xf32> to vector<4x4x64xf32>
    %33 = arith.maximumf %30, %32 : vector<4x4x64xf32>
    %34 = vector.shape_cast %33 : vector<4x4x64xf32> to vector<1x4x4x64xf32>
    %c0_16 = arith.constant 0 : index
    %c0_17 = arith.constant 0 : index
    %c0_18 = arith.constant 0 : index
    %c0_19 = arith.constant 0 : index
    %35 = vector.load %arg3[%c0_16, %c0_17, %c0_18, %c0_19] : memref<1x4x4x64xf32, #tpu.memory_space<vmem>>, vector<1x4x4x64xf32>
    tpu.vector_store %arg3[%c0_16, %c0_17, %c0_18, %c0_19], %34 {strides = array<i32>} : memref<1x4x4x64xf32, #tpu.memory_space<vmem>>, vector<1x4x4x64xf32>,
    return
  }
  func.func @transform_0(%arg0: i32) -> (i32, i32, i32, i32) {
    %c0_i32 = arith.constant 0 : i32
    %c0_i32_0 = arith.constant 0 : i32
    %c0_i32_1 = arith.constant 0 : i32
    %c0_i32_2 = arith.constant 0 : i32
    return %arg0, %c0_i32, %c0_i32_0, %c0_i32_1 : i32, i32, i32, i32
  }
  func.func @transform_1(%arg0: i32) -> (i32, i32) {
    %c0_i32 = arith.constant 0 : i32
    %c0_i32_0 = arith.constant 0 : i32
    %c0_i32_1 = arith.constant 0 : i32
    return %c0_i32, %c0_i32_0 : i32, i32
  }
  func.func @transform_2(%arg0: i32) -> (i32, i32, i32, i32) {
    %c0_i32 = arith.constant 0 : i32
    %c0_i32_0 = arith.constant 0 : i32
    %c0_i32_1 = arith.constant 0 : i32
    %c0_i32_2 = arith.constant 0 : i32
    return %arg0, %c0_i32, %c0_i32_0, %c0_i32_1 : i32, i32, i32, i32
  }
}

</mosaic_0001>

<llo_original>
// kernel: head_layer_c.4
$region0: #{head_layer_c.4}
  #allocation0 [shape = 'u32[]', space=smem, size = 0x4, offset = 0x4, fixed_abs, tag = 'smem constant byte address 0x4 - core index']
  #allocation1 [shape = 'u32[72,128]{1,0:T(1,128)}', space=vmem, size = 0x9000, scoped, tag = 'internal scratch']
  %s0 = inlined_call_operand.vmem [shape: f32[2,9,9,12], index: 0, kind: input, shape index: {}]
  %s1 = inlined_call_operand.vmem [shape: f32[48,32], index: 1, kind: input, shape index: {}]
  %s2 = inlined_call_operand.vmem [shape: f32[2,12], index: 2, kind: input, shape index: {}]
  %s3 = inlined_call_operand.vmem [shape: f32[2,8,8,32], index: 3, kind: output, shape index: {0}]
  %s4 = inlined_call_operand.vmem [shape: f32[2,2,32], index: 4, kind: output, shape index: {1}]
  %5 = xla_tuple %s3, %s4
  %s6 = sld [smem:[#allocation0]]
  $region53: #{head_layer_c.4} parent=0
    _
  %s8 = ssub.s32 1, %s6
  %s9 = scalar_select 0, %s8, %s6
  loop: start=0, step=1, limit=4
  $region2: #{head_layer_c.4} parent=0 // loop_pre_header
    _
  $region3: #{head_layer_c.4} parent=0 // loop_header
    %s11 = sphi 0, %s15
    %p12 = scmp.ge.s32.totalorder %s11, 4
    %s21 = sphi 0, %s23
    %s24 = sphi 0, %s21
    %s25 = sphi 0, %s24
    %s41 = sphi 0, %s25
    %s45 = sphi 0, %s45
    %s47 = sphi 0, %s45
    %s48 = sphi 0, %s47
    %s62 = sphi 0, %s48
    %s66 = sphi 0, %s66
    %s68 = sphi 0, %s66
    %s69 = sphi 0, %s68
    %s83 = sphi 0, %s69
    %s89 = sphi 0, %s91
    %s92 = sphi 0, %s89
    %s93 = sphi 0, %s92
    %s109 = sphi 0, %s93
    %s115 = sphi 0, %s117
    %s118 = sphi 0, %s115
    %s119 = sphi 0, %s118
    %s135 = sphi 0, %s119
  $region4: #{head_layer_c.4} parent=0 // loop_header_branch
    %14 = sbr.rel (%p12) target = $region8
  $region5: #{head_layer_c.4} parent=0 // loop_body
    %s16 = ssub.s32 %s11, 1
    %s17 = ssub.s32 %s11, 2
    %s18 = sadd.s32 %s11, 1
    %s19 = ssub.s32 %s11, %s18
    %p20 = scmp.eq.s32.totalorder %s19, 0
    %s22 = sadd.s32 %s21, 1
    %s23 = scalar_select %p20, %s21, %s22
    %p26 = pneg %p20
    %p27 = scmp.eq.s32.totalorder %s11, 1
    %p28 = por %p26, %p27
    %p29 = scmp.ne.s32.totalorder %s21, %s24
    %p30 = scmp.eq.s32.totalorder %s11, 0
    %p31 = por %p29, %p30
    %p32 = scmp.ne.s32.totalorder %s21, %s24
    %p33 = scmp.eq.s32.totalorder %s16, 1
    %p34 = por %p32, %p33
    %p35 = scmp.ne.s32.totalorder %s24, %s25
    %p36 = scmp.eq.s32.totalorder %s16, 0
    %p37 = por %p35, %p36
    %p38 = scmp.ne.s32.totalorder %s24, %s25
    %p39 = scmp.eq.s32.totalorder %s17, 1
    %p40 = por %p38, %p39
    %p42 = scmp.ne.s32.totalorder %s25, %s41
    %p43 = scmp.eq.s32.totalorder %s17, 0
    %p44 = por %p42, %p43
    %s46 = sadd.s32 %s45, 1
    %p49 = scmp.eq.s32.totalorder %s11, 1
    %p50 = scmp.ne.s32.totalorder %s45, %s47
    %p51 = scmp.eq.s32.totalorder %s11, 0
    %p52 = por %p50, %p51
    %p53 = scmp.ne.s32.totalorder %s45, %s47
    %p54 = scmp.eq.s32.totalorder %s16, 1
    %p55 = por %p53, %p54
    %p56 = scmp.ne.s32.totalorder %s47, %s48
    %p57 = scmp.eq.s32.totalorder %s16, 0
    %p58 = por %p56, %p57
    %p59 = scmp.ne.s32.totalorder %s47, %s48
    %p60 = scmp.eq.s32.totalorder %s17, 1
    %p61 = por %p59, %p60
    %p63 = scmp.ne.s32.totalorder %s48, %s62
    %p64 = scmp.eq.s32.totalorder %s17, 0
    %p65 = por %p63, %p64
    %s67 = sadd.s32 %s66, 1
    %p70 = scmp.eq.s32.totalorder %s11, 1
    %p71 = scmp.ne.s32.totalorder %s66, %s68
    %p72 = scmp.eq.s32.totalorder %s11, 0
    %p73 = por %p71, %p72
    %p74 = scmp.ne.s32.totalorder %s66, %s68
    %p75 = scmp.eq.s32.totalorder %s16, 1
    %p76 = por %p74, %p75
    %p77 = scmp.ne.s32.totalorder %s68, %s69
    %p78 = scmp.eq.s32.totalorder %s16, 0
    %p79 = por %p77, %p78
    %p80 = scmp.ne.s32.totalorder %s68, %s69
    %p81 = scmp.eq.s32.totalorder %s17, 1
    %p82 = por %p80, %p81
    %p84 = scmp.ne.s32.totalorder %s69, %s83
    %p85 = scmp.eq.s32.totalorder %s17, 0
    %p86 = por %p84, %p85
    %s87 = ssub.s32 %s11, %s18
    %p88 = scmp.eq.s32.totalorder %s87, 0
    %s90 = sadd.s32 %s89, 1
    %s91 = scalar_select %p88, %s89, %s90
    %p94 = pneg %p88
    %p95 = scmp.eq.s32.totalorder %s11, 1
    %p96 = por %p94, %p95
    %p97 = scmp.ne.s32.totalorder %s89, %s92
    %p98 = scmp.eq.s32.totalorder %s11, 0
    %p99 = por %p97, %p98
    %p100 = scmp.ne.s32.totalorder %s89, %s92
    %p101 = scmp.eq.s32.totalorder %s16, 1
    %p102 = por %p100, %p101
    %p103 = scmp.ne.s32.totalorder %s92, %s93
    %p104 = scmp.eq.s32.totalorder %s16, 0
    %p105 = por %p103, %p104
    %p106 = scmp.ne.s32.totalorder %s92, %s93
    %p107 = scmp.eq.s32.totalorder %s17, 1
    %p108 = por %p106, %p107
    %p110 = scmp.ne.s32.totalorder %s93, %s109
    %p111 = scmp.eq.s32.totalorder %s17, 0
    %p112 = por %p110, %p111
    %s113 = ssub.s32 %s11, %s18
    %p114 = scmp.eq.s32.totalorder %s113, 0
    %s116 = sadd.s32 %s115, 1
    %s117 = scalar_select %p114, %s115, %s116
    %p120 = pneg %p114
    %p121 = scmp.eq.s32.totalorder %s11, 1
    %p122 = por %p120, %p121
    %p123 = scmp.ne.s32.totalorder %s115, %s118
    %p124 = scmp.eq.s32.totalorder %s11, 0
    %p125 = por %p123, %p124
    %p126 = scmp.ne.s32.totalorder %s115, %s118
    %p127 = scmp.eq.s32.totalorder %s16, 1
    %p128 = por %p126, %p127
    %p129 = scmp.ne.s32.totalorder %s118, %s119
    %p130 = scmp.eq.s32.totalorder %s16, 0
    %p131 = por %p129, %p130
    %p132 = scmp.ne.s32.totalorder %s118, %s119
    %p133 = scmp.eq.s32.totalorder %s17, 1
    %p134 = por %p132, %p133
    %p136 = scmp.ne.s32.totalorder %s119, %s135
    %p137 = scmp.eq.s32.totalorder %s17, 0
    %p138 = por %p136, %p137
    %p139 = scmp.le.s32.totalorder 1, %s11
    %p140 = scmp.lt.s32.totalorder %s11, 3
    %p141 = pnand %p139, %p140
    %p142 = pneg %p141
    // Predicated region
    $region9: #{head_layer_c.4} parent=5 // pred_check
      _
    $region10: #{head_layer_c.4} parent=5 // pred_check_branch
      %144 = sbr.rel (%p141) target = $region12
    $region11: #{head_layer_c.4} parent=5 // pred_region
      %s145 = ssub.s32 %s11, 1
      // Predicated region
      $region13: #{head_layer_c.4} parent=11 // pred_check
        %p146 = pneg %p58
      $region14: #{head_layer_c.4} parent=11 // pred_check_branch
        %148 = sbr.rel (%p146) target = $region16
      $region15: #{head_layer_c.4} parent=11 // pred_region
        _
      $region16: #{head_layer_c.4} parent=11 // pred_fallthru
        _
      // Predicated region
      $region17: #{head_layer_c.4} parent=11 // pred_check
        %p149 = pneg %p79
      $region18: #{head_layer_c.4} parent=11 // pred_check_branch
        %151 = sbr.rel (%p149) target = $region20
      $region19: #{head_layer_c.4} parent=11 // pred_region
        _
      $region20: #{head_layer_c.4} parent=11 // pred_fallthru
        _
    $region12: #{head_layer_c.4} parent=5 // pred_fallthru
      _
    %p152 = scmp.lt.s32.totalorder %s11, 2
    // Predicated region
    $region21: #{head_layer_c.4} parent=5 // pred_check
      %p153 = pneg %p152
    $region22: #{head_layer_c.4} parent=5 // pred_check_branch
      %155 = sbr.rel (%p153) target = $region24
    $region23: #{head_layer_c.4} parent=5 // pred_region
      // Predicated region
      $region25: #{head_layer_c.4} parent=23 // pred_check
        %p156 = pneg %p31
      $region26: #{head_layer_c.4} parent=23 // pred_check_branch
        %158 = sbr.rel (%p156) target = $region28
      $region27: #{head_layer_c.4} parent=23 // pred_region
        %p159 = scmp.lt.s32.totalorder %s11, 1
        %s160 = scalar_select %p159, %s11, 1
        %s161 = smul.addr %s160, 18
        %s162 = smul.addr %s161, 8
        %s163 = scalar_lea.vmem %s0, %s162
      $region28: #{head_layer_c.4} parent=23 // pred_fallthru
        _
    $region24: #{head_layer_c.4} parent=5 // pred_fallthru
      _
    %p164 = scmp.le.s32.totalorder 1, %s11
    %p165 = scmp.lt.s32.totalorder %s11, 3
    %p166 = pnand %p164, %p165
    %p167 = pneg %p166
    // Predicated region
    $region29: #{head_layer_c.4} parent=5 // pred_check
      _
    $region30: #{head_layer_c.4} parent=5 // pred_check_branch
      %169 = sbr.rel (%p166) target = $region32
    $region31: #{head_layer_c.4} parent=5 // pred_region
      %s170 = ssub.s32 %s11, 1
      %p171 = scmp.lt.s32.totalorder %s16, 1
      %s172 = scalar_select %p171, %s16, 1
      %s173 = smul.addr %s172, 18
      %s174 = smul.addr %s173, 8
      %s175 = scalar_lea.vmem %s0, %s174
      %p176 = pneg %p37
      %p177 = pneg %p34
      %p178 = pneg %p58
      %p179 = pneg %p55
      %p180 = pneg %p79
      %p181 = pneg %p76
      %p182 = pneg %p105
      %p183 = pneg %p102
      %p184 = scmp.lt.s32.totalorder %s16, 1
      %s185 = scalar_select %p184, %s16, 1
      %s186 = smul.addr %s185, 8
      %s187 = smul.addr %s186, 8
      %s188 = scalar_lea.vmem %s3, %s187
      %p189 = pneg %p131
      %p190 = pneg %p128
      %p191 = scmp.lt.s32.totalorder %s16, 1
      %s192 = scalar_select %p191, %s16, 1
      %s193 = smul.addr %s192, 2
      %s194 = scalar_lea.vmem %s4, %s193
      %p195 = scmp.lt.s32.totalorder %s16, 1
      %s196 = scalar_select %p195, %s16, 1
      %s197 = smul.addr %s196, 18
      %s198 = smul.addr %s197, 8
      %s199 = scalar_lea.vmem %s0, %s198
      %p200 = scmp.lt.s32.totalorder %s16, 1
      %s201 = scalar_select %p200, %s16, 1
      %s202 = smul.addr %s201, 8
      %s203 = smul.addr %s202, 8
      %s204 = scalar_lea.vmem %s3, %s203
      %p205 = scmp.lt.s32.totalorder %s16, 1
      %s206 = scalar_select %p205, %s16, 1
      %s207 = smul.addr %s206, 2
      %s208 = scalar_lea.vmem %s4, %s207
      %v209 = vld [vmem:[%s199] sm:$0xff]
      %v210 = vld [vmem:[%s199 + $0x8] sm:$0x1]
      %v211 = vld [vmem:[%s199 + $0x10] sm:$0xff]
      %v212 = vld [vmem:[%s199 + $0x18] sm:$0x1]
      %v213 = vld [vmem:[%s199 + $0x20] sm:$0xff]
      %v214 = vld [vmem:[%s199 + $0x28] sm:$0x1]
      %v215 = vld [vmem:[%s199 + $0x30] sm:$0xff]
      %v216 = vld [vmem:[%s199 + $0x38] sm:$0x1]
      %v217 = vld [vmem:[%s199 + $0x40] sm:$0xff]
      %v218 = vld [vmem:[%s199 + $0x48] sm:$0x1]
      %v219 = vld [vmem:[%s199 + $0x50] sm:$0xff]
      %v220 = vld [vmem:[%s199 + $0x58] sm:$0x1]
      %v221 = vld [vmem:[%s199 + $0x60] sm:$0xff]
      %v222 = vld [vmem:[%s199 + $0x68] sm:$0x1]
      %v223 = vld [vmem:[%s199 + $0x70] sm:$0xff]
      %v224 = vld [vmem:[%s199 + $0x78] sm:$0x1]
      %v225 = vld [vmem:[%s199 + $0x80] sm:$0xff]
      %v226 = vld [vmem:[%s199 + $0x88] sm:$0x1]
      %vm243 = vcmask 1046528
      %v244 = vrot.slane %v209, 1
      %v245 = vrot.slane %v210, 1
      %v246 = vsel %vm243, %v244, %v245
      %v247 = vrot.slane %v211, 1
      %v248 = vrot.slane %v212, 1
      %v249 = vsel %vm243, %v247, %v248
      %v250 = vrot.slane %v213, 1
      %v251 = vrot.slane %v214, 1
      %v252 = vsel %vm243, %v250, %v251
      %v253 = vrot.slane %v215, 1
      %v254 = vrot.slane %v216, 1
      %v255 = vsel %vm243, %v253, %v254
      %v256 = vrot.slane %v217, 1
      %v257 = vrot.slane %v218, 1
      %v258 = vsel %vm243, %v256, %v257
      %v259 = vrot.slane %v219, 1
      %v260 = vrot.slane %v220, 1
      %v261 = vsel %vm243, %v259, %v260
      %v262 = vrot.slane %v221, 1
      %v263 = vrot.slane %v222, 1
      %v264 = vsel %vm243, %v262, %v263
      %v265 = vrot.slane %v223, 1
      %v266 = vrot.slane %v224, 1
      %v267 = vsel %vm243, %v265, %v266
      %268 = vrot.lane.b32.xlu0 %v246, 12
      %v269 = vpop.permute.xlu0 %268
      %270 = vrot.lane.b32.xlu0 %v249, 12
      %v271 = vpop.permute.xlu0 %270
      %272 = vrot.lane.b32.xlu0 %v252, 12
      %v273 = vpop.permute.xlu0 %272
      %274 = vrot.lane.b32.xlu0 %v255, 12
      %v275 = vpop.permute.xlu0 %274
      %276 = vrot.lane.b32.xlu0 %v258, 12
      %v277 = vpop.permute.xlu0 %276
      %278 = vrot.lane.b32.xlu0 %v261, 12
      %v279 = vpop.permute.xlu0 %278
      %280 = vrot.lane.b32.xlu0 %v264, 12
      %v281 = vpop.permute.xlu0 %280
      %282 = vrot.lane.b32.xlu0 %v267, 12
      %v283 = vpop.permute.xlu0 %282
      %293 = vrot.lane.b32.xlu0 %v211, 24
      %v294 = vpop.permute.xlu0 %293
      %295 = vrot.lane.b32.xlu0 %v213, 24
      %v296 = vpop.permute.xlu0 %295
      %297 = vrot.lane.b32.xlu0 %v215, 24
      %v298 = vpop.permute.xlu0 %297
      %299 = vrot.lane.b32.xlu0 %v217, 24
      %v300 = vpop.permute.xlu0 %299
      %301 = vrot.lane.b32.xlu0 %v219, 24
      %v302 = vpop.permute.xlu0 %301
      %303 = vrot.lane.b32.xlu0 %v221, 24
      %v304 = vpop.permute.xlu0 %303
      %305 = vrot.lane.b32.xlu0 %v223, 24
      %v306 = vpop.permute.xlu0 %305
      %307 = vrot.lane.b32.xlu0 %v225, 24
      %v308 = vpop.permute.xlu0 %307
      %v318 = vrot.slane %v225, 1
      %v319 = vrot.slane %v226, 1
      %v320 = vsel %vm243, %v318, %v319
      %321 = vrot.lane.b32.xlu0 %v249, 36
      %v322 = vpop.permute.xlu0 %321
      %323 = vrot.lane.b32.xlu0 %v252, 36
      %v324 = vpop.permute.xlu0 %323
      %325 = vrot.lane.b32.xlu0 %v255, 36
      %v326 = vpop.permute.xlu0 %325
      %327 = vrot.lane.b32.xlu0 %v258, 36
      %v328 = vpop.permute.xlu0 %327
      %329 = vrot.lane.b32.xlu0 %v261, 36
      %v330 = vpop.permute.xlu0 %329
      %331 = vrot.lane.b32.xlu0 %v264, 36
      %v332 = vpop.permute.xlu0 %331
      %333 = vrot.lane.b32.xlu0 %v267, 36
      %v334 = vpop.permute.xlu0 %333
      %335 = vrot.lane.b32.xlu0 %v320, 36
      %v336 = vpop.permute.xlu0 %335
      %vm345 = vcmask 97280
      %v346 = vsel %vm345, %v209, %v269
      %v347 = vsel %vm345, %v211, %v271
      %v348 = vsel %vm345, %v213, %v273
      %v349 = vsel %vm345, %v215, %v275
      %v350 = vsel %vm345, %v217, %v277
      %v351 = vsel %vm345, %v219, %v279
      %v352 = vsel %vm345, %v221, %v281
      %v353 = vsel %vm345, %v223, %v283
      %vm354 = vcmask 195584
      %v355 = vsel %vm354, %v346, %v294
      %v356 = vsel %vm354, %v347, %v296
      %v357 = vsel %vm354, %v348, %v298
      %v358 = vsel %vm354, %v349, %v300
      %v359 = vsel %vm354, %v350, %v302
      %v360 = vsel %vm354, %v351, %v304
      %v361 = vsel %vm354, %v352, %v306
      %v362 = vsel %vm354, %v353, %v308
      %vm363 = vcmask 293888
      %v364 = vsel %vm363, %v355, %v322
      %v365 = vsel %vm363, %v356, %v324
      %v366 = vsel %vm363, %v357, %v326
      %v367 = vsel %vm363, %v358, %v328
      %v368 = vsel %vm363, %v359, %v330
      %v369 = vsel %vm363, %v360, %v332
      %v370 = vsel %vm363, %v361, %v334
      %v371 = vsel %vm363, %v362, %v336
      %v372 = vld [vmem:[%s1] sm:$0xff]
      %v373 = vld [vmem:[%s1 + $0x8] sm:$0xff]
      %v374 = vld [vmem:[%s1 + $0x10] sm:$0xff]
      %v375 = vld [vmem:[%s1 + $0x18] sm:$0xff]
      %v376 = vld [vmem:[%s1 + $0x20] sm:$0xff]
      %v377 = vld [vmem:[%s1 + $0x28] sm:$0xff]
      %vm378 = vcmask 392192
      %v380 = vsel %vm378, %v364, 0
      %v383 = vsel %vm378, %v365, 0
      %v386 = vsel %vm378, %v366, 0
      %v389 = vsel %vm378, %v367, 0
      %v392 = vsel %vm378, %v368, 0
      %v395 = vsel %vm378, %v369, 0
      %v398 = vsel %vm378, %v370, 0
      %v401 = vsel %vm378, %v371, 0
      %403 = vmatpush.msra.mxu0 0.0
      %404 = vmatpush.msra.mxu0 0.0
      %405 = vmatpush.msra.mxu0 0.0
      %406 = vmatpush.msra.mxu0 0.0
      %407 = vmatpush.msra.mxu0 0.0
      %408 = vmatpush.msra.mxu0 0.0
      %409 = vmatpush.msra.mxu0 0.0
      %410 = vmatpush.msra.mxu0 0.0
      %411 = vmatpush.msra.mxu0 0.0
      %412 = vmatpush.msra.mxu0 0.0
      %413 = vmatpush.msra.mxu0 %v377
      %414 = vmatpush.msra.mxu0 %v376
      %415 = vmatpush.msra.mxu0 %v375
      %416 = vmatpush.msra.mxu0 %v374
      %417 = vmatpush.msra.mxu0 %v373
      %418 = vmatpush.msra.mxu0 %v372
      %419 = vmatmul.f32.gmra.mxu0 %v380
      %v420 = vpop.f32.mrf.mxu0
      %v421 = vadd.f32 0.0, %v420
      %422 = vmatmul.f32.gmra.mxu0 %v383
      %v423 = vpop.f32.mrf.mxu0
      %v424 = vadd.f32 0.0, %v423
      %425 = vmatmul.f32.gmra.mxu0 %v386
      %v426 = vpop.f32.mrf.mxu0
      %v427 = vadd.f32 0.0, %v426
      %428 = vmatmul.f32.gmra.mxu0 %v389
      %v429 = vpop.f32.mrf.mxu0
      %v430 = vadd.f32 0.0, %v429
      %431 = vmatmul.f32.gmra.mxu0 %v392
      %v432 = vpop.f32.mrf.mxu0
      %v433 = vadd.f32 0.0, %v432
      %434 = vmatmul.f32.gmra.mxu0 %v395
      %v435 = vpop.f32.mrf.mxu0
      %v436 = vadd.f32 0.0, %v435
      %437 = vmatmul.f32.gmra.mxu0 %v398
      %v438 = vpop.f32.mrf.mxu0
      %v439 = vadd.f32 0.0, %v438
      %440 = vmatmul.f32.gmra.mxu0 %v401
      %v441 = vpop.f32.mrf.mxu0
      %v442 = vadd.f32 0.0, %v441
      %443 = vdwg.mxu0
      %vm444 = vcmask 261120
      %v445 = vsel %vm444, %v421, 0.0
      %v446 = vsel %vm444, %v424, 0.0
      %v447 = vadd.f32 %v445, %v446
      %v448 = vsel %vm444, %v427, 0.0
      %v449 = vadd.f32 %v447, %v448
      %v450 = vsel %vm444, %v430, 0.0
      %v451 = vadd.f32 %v449, %v450
      %v452 = vsel %vm444, %v433, 0.0
      %v453 = vadd.f32 %v451, %v452
      %v454 = vsel %vm444, %v436, 0.0
      %v455 = vadd.f32 %v453, %v454
      %v456 = vsel %vm444, %v439, 0.0
      %v457 = vadd.f32 %v455, %v456
      %v458 = vsel %vm444, %v442, 0.0
      %v459 = vadd.f32 %v457, %v458
      %v460 = vrot.slane %v459, 4
      %v461 = vadd.f32 %v459, %v460
      %v462 = vrot.slane %v461, 2
      %v463 = vadd.f32 %v461, %v462
      %v464 = vrot.slane %v463, 1
      %v465 = vadd.f32 %v463, %v464
      %v466 = vmul.f32 %v421, %v421
      %v467 = vmul.f32 %v424, %v424
      %v468 = vmul.f32 %v427, %v427
      %v469 = vmul.f32 %v430, %v430
      %v470 = vmul.f32 %v433, %v433
      %v471 = vmul.f32 %v436, %v436
      %v472 = vmul.f32 %v439, %v439
      %v473 = vmul.f32 %v442, %v442
      %v474 = vsel %vm444, %v466, 0.0
      %v475 = vsel %vm444, %v467, 0.0
      %v476 = vadd.f32 %v474, %v475
      %v477 = vsel %vm444, %v468, 0.0
      %v478 = vadd.f32 %v476, %v477
      %v479 = vsel %vm444, %v469, 0.0
      %v480 = vadd.f32 %v478, %v479
      %v481 = vsel %vm444, %v470, 0.0
      %v482 = vadd.f32 %v480, %v481
      %v483 = vsel %vm444, %v471, 0.0
      %v484 = vadd.f32 %v482, %v483
      %v485 = vsel %vm444, %v472, 0.0
      %v486 = vadd.f32 %v484, %v485
      %v487 = vsel %vm444, %v473, 0.0
      %v488 = vadd.f32 %v486, %v487
      %v489 = vrot.slane %v488, 4
      %v490 = vadd.f32 %v488, %v489
      %v491 = vrot.slane %v490, 2
      %v492 = vadd.f32 %v490, %v491
      %v493 = vrot.slane %v492, 1
      %v494 = vadd.f32 %v492, %v493
      %vm495 = vcmask 1040384
      %v496 = vsel %vm495, %v465, %v494
      %vm497 = vcmask 254976
      %498 = vst.msk [vmem:[%s208] sm:$0x3] %vm497, %v496
      %499 = vst.msk [vmem:[%s204] sm:$0xff] %vm444, %v421
      %500 = vst.msk [vmem:[%s204 + $0x8] sm:$0xff] %vm444, %v424
      %501 = vst.msk [vmem:[%s204 + $0x10] sm:$0xff] %vm444, %v427
      %502 = vst.msk [vmem:[%s204 + $0x18] sm:$0xff] %vm444, %v430
      %503 = vst.msk [vmem:[%s204 + $0x20] sm:$0xff] %vm444, %v433
      %504 = vst.msk [vmem:[%s204 + $0x28] sm:$0xff] %vm444, %v436
      %505 = vst.msk [vmem:[%s204 + $0x30] sm:$0xff] %vm444, %v439
      %506 = vst.msk [vmem:[%s204 + $0x38] sm:$0xff] %vm444, %v442
      %p507 = scmp.lt.s32.totalorder %s16, 1
      %s508 = scalar_select %p507, %s16, 1
      %s509 = smul.addr %s508, 8
      %s510 = smul.addr %s509, 8
      %s511 = scalar_lea.vmem %s3, %s510
      %p512 = scmp.lt.s32.totalorder %s16, 1
      %s513 = scalar_select %p512, %s16, 1
      %s514 = smul.addr %s513, 2
      %s515 = scalar_lea.vmem %s4, %s514
      // Predicated region
      $region33: #{head_layer_c.4} parent=31 // pred_check
        %p516 = pneg %p102
      $region34: #{head_layer_c.4} parent=31 // pred_check_branch
        %518 = sbr.rel (%p516) target = $region36
      $region35: #{head_layer_c.4} parent=31 // pred_region
        _
      $region36: #{head_layer_c.4} parent=31 // pred_fallthru
        _
      // Predicated region
      $region37: #{head_layer_c.4} parent=31 // pred_check
        %p519 = pneg %p128
      $region38: #{head_layer_c.4} parent=31 // pred_check_branch
        %521 = sbr.rel (%p519) target = $region40
      $region39: #{head_layer_c.4} parent=31 // pred_region
        _
      $region40: #{head_layer_c.4} parent=31 // pred_fallthru
        _
    $region32: #{head_layer_c.4} parent=5 // pred_fallthru
      _
    %p522 = scmp.le.s32.totalorder 2, %s11
    // Predicated region
    $region41: #{head_layer_c.4} parent=5 // pred_check
      %p523 = pneg %p522
    $region42: #{head_layer_c.4} parent=5 // pred_check_branch
      %525 = sbr.rel (%p523) target = $region44
    $region43: #{head_layer_c.4} parent=5 // pred_region
      %s526 = ssub.s32 %s11, 2
      // Predicated region
      $region45: #{head_layer_c.4} parent=43 // pred_check
        %p527 = pneg %p108
      $region46: #{head_layer_c.4} parent=43 // pred_check_branch
        %529 = sbr.rel (%p527) target = $region48
      $region47: #{head_layer_c.4} parent=43 // pred_region
        %p530 = scmp.lt.s32.totalorder %s17, 1
        %s531 = scalar_select %p530, %s17, 1
        %s532 = smul.addr %s531, 8
        %s533 = smul.addr %s532, 8
        %s534 = scalar_lea.vmem %s3, %s533
      $region48: #{head_layer_c.4} parent=43 // pred_fallthru
        _
      // Predicated region
      $region49: #{head_layer_c.4} parent=43 // pred_check
        %p535 = pneg %p134
      $region50: #{head_layer_c.4} parent=43 // pred_check_branch
        %537 = sbr.rel (%p535) target = $region52
      $region51: #{head_layer_c.4} parent=43 // pred_region
        %p538 = scmp.lt.s32.totalorder %s17, 1
        %s539 = scalar_select %p538, %s17, 1
        %s540 = smul.addr %s539, 2
        %s541 = scalar_lea.vmem %s4, %s540
      $region52: #{head_layer_c.4} parent=43 // pred_fallthru
        _
    $region44: #{head_layer_c.4} parent=5 // pred_fallthru
      _
  $region6: #{head_layer_c.4} parent=0 // loop_footer
    %s15 = sadd.s32 1, %s11
  $region7: #{head_layer_c.4} parent=0 // loop_footer_branch
    %10 = sbr.rel target = $region3
  $region8: #{head_layer_c.4} parent=0 // loop_exit
    _

// kernel: head_layer_c.5
$region0: #{head_layer_c.5}
  #allocation0 [shape = 'u32[]', space=smem, size = 0x4, offset = 0x4, fixed_abs, tag = 'smem constant byte address 0x4 - core index']
  #allocation1 [shape = 'u32[72,128]{1,0:T(1,128)}', space=vmem, size = 0x9000, scoped, tag = 'internal scratch']
  #allocation2 [shape = 'f32[10,10,32]{2,1,0:T(8,128)}', space=vmem, size = 0x14000, scoped, tag = 'scratch operand']
  %s0 = inlined_call_operand.vmem [shape: f32[2,8,8,32], index: 0, kind: input, shape index: {}]
  %s1 = inlined_call_operand.vmem [shape: f32[288,32], index: 1, kind: input, shape index: {}]
  %s2 = inlined_call_operand.vmem [shape: f32[2,32], index: 2, kind: input, shape index: {}]
  %s3 = inlined_call_operand.vmem [shape: f32[2,8,8,32], index: 3, kind: output, shape index: {0}]
  %s4 = inlined_call_operand.vmem [shape: f32[2,2,32], index: 4, kind: output, shape index: {1}]
  %5 = xla_tuple %s3, %s4
  %s6 = sld [smem:[#allocation0]]
  $region53: #{head_layer_c.5} parent=0
    _
  %s8 = ssub.s32 1, %s6
  %s9 = scalar_select 0, %s8, %s6
  loop: start=0, step=1, limit=4
  $region2: #{head_layer_c.5} parent=0 // loop_pre_header
    _
  $region3: #{head_layer_c.5} parent=0 // loop_header
    %s11 = sphi 0, %s15
    %p12 = scmp.ge.s32.totalorder %s11, 4
    %s21 = sphi 0, %s23
    %s24 = sphi 0, %s21
    %s25 = sphi 0, %s24
    %s41 = sphi 0, %s25
    %s45 = sphi 0, %s45
    %s47 = sphi 0, %s45
    %s48 = sphi 0, %s47
    %s62 = sphi 0, %s48
    %s66 = sphi 0, %s66
    %s68 = sphi 0, %s66
    %s69 = sphi 0, %s68
    %s83 = sphi 0, %s69
    %s89 = sphi 0, %s91
    %s92 = sphi 0, %s89
    %s93 = sphi 0, %s92
    %s109 = sphi 0, %s93
    %s115 = sphi 0, %s117
    %s118 = sphi 0, %s115
    %s119 = sphi 0, %s118
    %s135 = sphi 0, %s119
  $region4: #{head_layer_c.5} parent=0 // loop_header_branch
    %14 = sbr.rel (%p12) target = $region8
  $region5: #{head_layer_c.5} parent=0 // loop_body
    %s16 = ssub.s32 %s11, 1
    %s17 = ssub.s32 %s11, 2
    %s18 = sadd.s32 %s11, 1
    %s19 = ssub.s32 %s11, %s18
    %p20 = scmp.eq.s32.totalorder %s19, 0
    %s22 = sadd.s32 %s21, 1
    %s23 = scalar_select %p20, %s21, %s22
    %p26 = pneg %p20
    %p27 = scmp.eq.s32.totalorder %s11, 1
    %p28 = por %p26, %p27
    %p29 = scmp.ne.s32.totalorder %s21, %s24
    %p30 = scmp.eq.s32.totalorder %s11, 0
    %p31 = por %p29, %p30
    %p32 = scmp.ne.s32.totalorder %s21, %s24
    %p33 = scmp.eq.s32.totalorder %s16, 1
    %p34 = por %p32, %p33
    %p35 = scmp.ne.s32.totalorder %s24, %s25
    %p36 = scmp.eq.s32.totalorder %s16, 0
    %p37 = por %p35, %p36
    %p38 = scmp.ne.s32.totalorder %s24, %s25
    %p39 = scmp.eq.s32.totalorder %s17, 1
    %p40 = por %p38, %p39
    %p42 = scmp.ne.s32.totalorder %s25, %s41
    %p43 = scmp.eq.s32.totalorder %s17, 0
    %p44 = por %p42, %p43
    %s46 = sadd.s32 %s45, 1
    %p49 = scmp.eq.s32.totalorder %s11, 1
    %p50 = scmp.ne.s32.totalorder %s45, %s47
    %p51 = scmp.eq.s32.totalorder %s11, 0
    %p52 = por %p50, %p51
    %p53 = scmp.ne.s32.totalorder %s45, %s47
    %p54 = scmp.eq.s32.totalorder %s16, 1
    %p55 = por %p53, %p54
    %p56 = scmp.ne.s32.totalorder %s47, %s48
    %p57 = scmp.eq.s32.totalorder %s16, 0
    %p58 = por %p56, %p57
    %p59 = scmp.ne.s32.totalorder %s47, %s48
    %p60 = scmp.eq.s32.totalorder %s17, 1
    %p61 = por %p59, %p60
    %p63 = scmp.ne.s32.totalorder %s48, %s62
    %p64 = scmp.eq.s32.totalorder %s17, 0
    %p65 = por %p63, %p64
    %s67 = sadd.s32 %s66, 1
    %p70 = scmp.eq.s32.totalorder %s11, 1
    %p71 = scmp.ne.s32.totalorder %s66, %s68
    %p72 = scmp.eq.s32.totalorder %s11, 0
    %p73 = por %p71, %p72
    %p74 = scmp.ne.s32.totalorder %s66, %s68
    %p75 = scmp.eq.s32.totalorder %s16, 1
    %p76 = por %p74, %p75
    %p77 = scmp.ne.s32.totalorder %s68, %s69
    %p78 = scmp.eq.s32.totalorder %s16, 0
    %p79 = por %p77, %p78
    %p80 = scmp.ne.s32.totalorder %s68, %s69
    %p81 = scmp.eq.s32.totalorder %s17, 1
    %p82 = por %p80, %p81
    %p84 = scmp.ne.s32.totalorder %s69, %s83
    %p85 = scmp.eq.s32.totalorder %s17, 0
    %p86 = por %p84, %p85
    %s87 = ssub.s32 %s11, %s18
    %p88 = scmp.eq.s32.totalorder %s87, 0
    %s90 = sadd.s32 %s89, 1
    %s91 = scalar_select %p88, %s89, %s90
    %p94 = pneg %p88
    %p95 = scmp.eq.s32.totalorder %s11, 1
    %p96 = por %p94, %p95
    %p97 = scmp.ne.s32.totalorder %s89, %s92
    %p98 = scmp.eq.s32.totalorder %s11, 0
    %p99 = por %p97, %p98
    %p100 = scmp.ne.s32.totalorder %s89, %s92
    %p101 = scmp.eq.s32.totalorder %s16, 1
    %p102 = por %p100, %p101
    %p103 = scmp.ne.s32.totalorder %s92, %s93
    %p104 = scmp.eq.s32.totalorder %s16, 0
    %p105 = por %p103, %p104
    %p106 = scmp.ne.s32.totalorder %s92, %s93
    %p107 = scmp.eq.s32.totalorder %s17, 1
    %p108 = por %p106, %p107
    %p110 = scmp.ne.s32.totalorder %s93, %s109
    %p111 = scmp.eq.s32.totalorder %s17, 0
    %p112 = por %p110, %p111
    %s113 = ssub.s32 %s11, %s18
    %p114 = scmp.eq.s32.totalorder %s113, 0
    %s116 = sadd.s32 %s115, 1
    %s117 = scalar_select %p114, %s115, %s116
    %p120 = pneg %p114
    %p121 = scmp.eq.s32.totalorder %s11, 1
    %p122 = por %p120, %p121
    %p123 = scmp.ne.s32.totalorder %s115, %s118
    %p124 = scmp.eq.s32.totalorder %s11, 0
    %p125 = por %p123, %p124
    %p126 = scmp.ne.s32.totalorder %s115, %s118
    %p127 = scmp.eq.s32.totalorder %s16, 1
    %p128 = por %p126, %p127
    %p129 = scmp.ne.s32.totalorder %s118, %s119
    %p130 = scmp.eq.s32.totalorder %s16, 0
    %p131 = por %p129, %p130
    %p132 = scmp.ne.s32.totalorder %s118, %s119
    %p133 = scmp.eq.s32.totalorder %s17, 1
    %p134 = por %p132, %p133
    %p136 = scmp.ne.s32.totalorder %s119, %s135
    %p137 = scmp.eq.s32.totalorder %s17, 0
    %p138 = por %p136, %p137
    %p139 = scmp.le.s32.totalorder 1, %s11
    %p140 = scmp.lt.s32.totalorder %s11, 3
    %p141 = pnand %p139, %p140
    %p142 = pneg %p141
    // Predicated region
    $region9: #{head_layer_c.5} parent=5 // pred_check
      _
    $region10: #{head_layer_c.5} parent=5 // pred_check_branch
      %144 = sbr.rel (%p141) target = $region12
    $region11: #{head_layer_c.5} parent=5 // pred_region
      %s145 = ssub.s32 %s11, 1
      // Predicated region
      $region13: #{head_layer_c.5} parent=11 // pred_check
        %p146 = pneg %p58
      $region14: #{head_layer_c.5} parent=11 // pred_check_branch
        %148 = sbr.rel (%p146) target = $region16
      $region15: #{head_layer_c.5} parent=11 // pred_region
        _
      $region16: #{head_layer_c.5} parent=11 // pred_fallthru
        _
      // Predicated region
      $region17: #{head_layer_c.5} parent=11 // pred_check
        %p149 = pneg %p79
      $region18: #{head_layer_c.5} parent=11 // pred_check_branch
        %151 = sbr.rel (%p149) target = $region20
      $region19: #{head_layer_c.5} parent=11 // pred_region
        _
      $region20: #{head_layer_c.5} parent=11 // pred_fallthru
        _
    $region12: #{head_layer_c.5} parent=5 // pred_fallthru
      _
    %p152 = scmp.lt.s32.totalorder %s11, 2
    // Predicated region
    $region21: #{head_layer_c.5} parent=5 // pred_check
      %p153 = pneg %p152
    $region22: #{head_layer_c.5} parent=5 // pred_check_branch
      %155 = sbr.rel (%p153) target = $region24
    $region23: #{head_layer_c.5} parent=5 // pred_region
      // Predicated region
      $region25: #{head_layer_c.5} parent=23 // pred_check
        %p156 = pneg %p31
      $region26: #{head_layer_c.5} parent=23 // pred_check_branch
        %158 = sbr.rel (%p156) target = $region28
      $region27: #{head_layer_c.5} parent=23 // pred_region
        %p159 = scmp.lt.s32.totalorder %s11, 1
        %s160 = scalar_select %p159, %s11, 1
        %s161 = smul.addr %s160, 8
        %s162 = smul.addr %s161, 8
        %s163 = scalar_lea.vmem %s0, %s162
      $region28: #{head_layer_c.5} parent=23 // pred_fallthru
        _
    $region24: #{head_layer_c.5} parent=5 // pred_fallthru
      _
    %p164 = scmp.le.s32.totalorder 1, %s11
    %p165 = scmp.lt.s32.totalorder %s11, 3
    %p166 = pnand %p164, %p165
    %p167 = pneg %p166
    // Predicated region
    $region29: #{head_layer_c.5} parent=5 // pred_check
      _
    $region30: #{head_layer_c.5} parent=5 // pred_check_branch
      %169 = sbr.rel (%p166) target = $region32
    $region31: #{head_layer_c.5} parent=5 // pred_region
      %s170 = ssub.s32 %s11, 1
      %p171 = scmp.lt.s32.totalorder %s16, 1
      %s172 = scalar_select %p171, %s16, 1
      %s173 = smul.addr %s172, 8
      %s174 = smul.addr %s173, 8
      %s175 = scalar_lea.vmem %s0, %s174
      %p176 = pneg %p37
      %p177 = pneg %p34
      %p178 = pneg %p58
      %p179 = pneg %p55
      %p180 = pneg %p79
      %p181 = pneg %p76
      %p182 = pneg %p105
      %p183 = pneg %p102
      %p184 = scmp.lt.s32.totalorder %s16, 1
      %s185 = scalar_select %p184, %s16, 1
      %s186 = smul.addr %s185, 8
      %s187 = smul.addr %s186, 8
      %s188 = scalar_lea.vmem %s3, %s187
      %p189 = pneg %p131
      %p190 = pneg %p128
      %p191 = scmp.lt.s32.totalorder %s16, 1
      %s192 = scalar_select %p191, %s16, 1
      %s193 = smul.addr %s192, 2
      %s194 = scalar_lea.vmem %s4, %s193
      %p195 = scmp.lt.s32.totalorder %s16, 1
      %s196 = scalar_select %p195, %s16, 1
      %s197 = smul.addr %s196, 8
      %s198 = smul.addr %s197, 8
      %s199 = scalar_lea.vmem %s0, %s198
      %p200 = scmp.lt.s32.totalorder %s16, 1
      %s201 = scalar_select %p200, %s16, 1
      %s202 = smul.addr %s201, 8
      %s203 = smul.addr %s202, 8
      %s204 = scalar_lea.vmem %s3, %s203
      %p205 = scmp.lt.s32.totalorder %s16, 1
      %s206 = scalar_select %p205, %s16, 1
      %s207 = smul.addr %s206, 2
      %s208 = scalar_lea.vmem %s4, %s207
      %v209 = vld [vmem:[%s199] sm:$0xff]
      %v210 = vld [vmem:[%s199 + $0x8] sm:$0xff]
      %v211 = vld [vmem:[%s199 + $0x10] sm:$0xff]
      %v212 = vld [vmem:[%s199 + $0x18] sm:$0xff]
      %v213 = vld [vmem:[%s199 + $0x20] sm:$0xff]
      %v214 = vld [vmem:[%s199 + $0x28] sm:$0xff]
      %v215 = vld [vmem:[%s199 + $0x30] sm:$0xff]
      %v216 = vld [vmem:[%s199 + $0x38] sm:$0xff]
      %v217 = vld [vmem:[%s2] sm:$0x1]
      %v218 = vld [vmem:[%s2 + $0x1] sm:$0x1]
      %v219 = vperm.slane %v217, 0
      %v220 = vmul.f32 %v209, %v219
      %v221 = vmul.f32 %v210, %v219
      %v222 = vmul.f32 %v211, %v219
      %v223 = vmul.f32 %v212, %v219
      %v224 = vmul.f32 %v213, %v219
      %v225 = vmul.f32 %v214, %v219
      %v226 = vmul.f32 %v215, %v219
      %v227 = vmul.f32 %v216, %v219
      %v228 = vperm.slane %v218, 0
      %v229 = vadd.f32 %v220, %v228
      %v230 = vadd.f32 %v221, %v228
      %v231 = vadd.f32 %v222, %v228
      %v232 = vadd.f32 %v223, %v228
      %v233 = vadd.f32 %v224, %v228
      %v234 = vadd.f32 %v225, %v228
      %v235 = vadd.f32 %v226, %v228
      %v236 = vadd.f32 %v227, %v228
      %v237 = vmax.f32 %v229, 0.0
      %v238 = vmax.f32 %v230, 0.0
      %v239 = vmax.f32 %v231, 0.0
      %v240 = vmax.f32 %v232, 0.0
      %v241 = vmax.f32 %v233, 0.0
      %v242 = vmax.f32 %v234, 0.0
      %v243 = vmax.f32 %v235, 0.0
      %v244 = vmax.f32 %v236, 0.0
      %vm245 = vcmask 261120
      %246 = vst.msk [vmem:[#allocation2] sm:$0xff] %vm245, 0.0
      %vm247 = vcmask 254976
      %248 = vst.msk [vmem:[#allocation2 + $0x8] sm:$0x3] %vm247, 0.0
      %249 = vst.msk [vmem:[#allocation2 + $0x10] sm:$0xff] %vm245, 0.0
      %250 = vst.msk [vmem:[#allocation2 + $0x18] sm:$0x3] %vm247, 0.0
      %251 = vst.msk [vmem:[#allocation2 + $0x20] sm:$0xff] %vm245, 0.0
      %252 = vst.msk [vmem:[#allocation2 + $0x28] sm:$0x3] %vm247, 0.0
      %253 = vst.msk [vmem:[#allocation2 + $0x30] sm:$0xff] %vm245, 0.0
      %254 = vst.msk [vmem:[#allocation2 + $0x38] sm:$0x3] %vm247, 0.0
      %255 = vst.msk [vmem:[#allocation2 + $0x40] sm:$0xff] %vm245, 0.0
      %256 = vst.msk [vmem:[#allocation2 + $0x48] sm:$0x3] %vm247, 0.0
      %257 = vst.msk [vmem:[#allocation2 + $0x50] sm:$0xff] %vm245, 0.0
      %258 = vst.msk [vmem:[#allocation2 + $0x58] sm:$0x3] %vm247, 0.0
      %259 = vst.msk [vmem:[#allocation2 + $0x60] sm:$0xff] %vm245, 0.0
      %260 = vst.msk [vmem:[#allocation2 + $0x68] sm:$0x3] %vm247, 0.0
      %261 = vst.msk [vmem:[#allocation2 + $0x70] sm:$0xff] %vm245, 0.0
      %262 = vst.msk [vmem:[#allocation2 + $0x78] sm:$0x3] %vm247, 0.0
      %263 = vst.msk [vmem:[#allocation2 + $0x80] sm:$0xff] %vm245, 0.0
      %264 = vst.msk [vmem:[#allocation2 + $0x88] sm:$0x3] %vm247, 0.0
      %265 = vst.msk [vmem:[#allocation2 + $0x90] sm:$0xff] %vm245, 0.0
      %266 = vst.msk [vmem:[#allocation2 + $0x98] sm:$0x3] %vm247, 0.0
      %s267 = scalar_lea.vmem [#allocation2], 16
      %268 = vst.msk [vmem:[%s267 + $0x1] sm:$0xff] %vm245, %v237
      %269 = vst.msk [vmem:[%s267 + $0x11] sm:$0xff] %vm245, %v238
      %270 = vst.msk [vmem:[%s267 + $0x21] sm:$0xff] %vm245, %v239
      %271 = vst.msk [vmem:[%s267 + $0x31] sm:$0xff] %vm245, %v240
      %272 = vst.msk [vmem:[%s267 + $0x41] sm:$0xff] %vm245, %v241
      %273 = vst.msk [vmem:[%s267 + $0x51] sm:$0xff] %vm245, %v242
      %274 = vst.msk [vmem:[%s267 + $0x61] sm:$0xff] %vm245, %v243
      %275 = vst.msk [vmem:[%s267 + $0x71] sm:$0xff] %vm245, %v244
      %v276 = vld [vmem:[#allocation2] sm:$0xff]
      %v277 = vld [vmem:[#allocation2 + $0x8] sm:$0x3]
      %v278 = vld [vmem:[#allocation2 + $0x10] sm:$0xff]
      %v279 = vld [vmem:[#allocation2 + $0x18] sm:$0x3]
      %v280 = vld [vmem:[#allocation2 + $0x20] sm:$0xff]
      %v281 = vld [vmem:[#allocation2 + $0x28] sm:$0x3]
      %v282 = vld [vmem:[#allocation2 + $0x30] sm:$0xff]
      %v283 = vld [vmem:[#allocation2 + $0x38] sm:$0x3]
      %v284 = vld [vmem:[#allocation2 + $0x40] sm:$0xff]
      %v285 = vld [vmem:[#allocation2 + $0x48] sm:$0x3]
      %v286 = vld [vmem:[#allocation2 + $0x50] sm:$0xff]
      %v287 = vld [vmem:[#allocation2 + $0x58] sm:$0x3]
      %v288 = vld [vmem:[#allocation2 + $0x60] sm:$0xff]
      %v289 = vld [vmem:[#allocation2 + $0x68] sm:$0x3]
      %v290 = vld [vmem:[#allocation2 + $0x70] sm:$0xff]
      %v291 = vld [vmem:[#allocation2 + $0x78] sm:$0x3]
      %v292 = vld [vmem:[#allocation2 + $0x80] sm:$0xff]
      %v293 = vld [vmem:[#allocation2 + $0x88] sm:$0x3]
      %v294 = vld [vmem:[#allocation2 + $0x90] sm:$0xff]
      %v295 = vld [vmem:[#allocation2 + $0x98] sm:$0x3]
      %vm312 = vcmask 1046528
      %v313 = vrot.slane %v276, 1
      %v314 = vrot.slane %v277, 1
      %v315 = vsel %vm312, %v313, %v314
      %v316 = vrot.slane %v278, 1
      %v317 = vrot.slane %v279, 1
      %v318 = vsel %vm312, %v316, %v317
      %v319 = vrot.slane %v280, 1
      %v320 = vrot.slane %v281, 1
      %v321 = vsel %vm312, %v319, %v320
      %v322 = vrot.slane %v282, 1
      %v323 = vrot.slane %v283, 1
      %v324 = vsel %vm312, %v322, %v323
      %v325 = vrot.slane %v284, 1
      %v326 = vrot.slane %v285, 1
      %v327 = vsel %vm312, %v325, %v326
      %v328 = vrot.slane %v286, 1
      %v329 = vrot.slane %v287, 1
      %v330 = vsel %vm312, %v328, %v329
      %v331 = vrot.slane %v288, 1
      %v332 = vrot.slane %v289, 1
      %v333 = vsel %vm312, %v331, %v332
      %v334 = vrot.slane %v290, 1
      %v335 = vrot.slane %v291, 1
      %v336 = vsel %vm312, %v334, %v335
      %337 = vrot.lane.b32.xlu0 %v315, 32
      %v338 = vpop.permute.xlu0 %337
      %339 = vrot.lane.b32.xlu0 %v318, 32
      %v340 = vpop.permute.xlu0 %339
      %341 = vrot.lane.b32.xlu0 %v321, 32
      %v342 = vpop.permute.xlu0 %341
      %343 = vrot.lane.b32.xlu0 %v324, 32
      %v344 = vpop.permute.xlu0 %343
      %345 = vrot.lane.b32.xlu0 %v327, 32
      %v346 = vpop.permute.xlu0 %345
      %347 = vrot.lane.b32.xlu0 %v330, 32
      %v348 = vpop.permute.xlu0 %347
      %349 = vrot.lane.b32.xlu0 %v333, 32
      %v350 = vpop.permute.xlu0 %349
      %351 = vrot.lane.b32.xlu0 %v336, 32
      %v352 = vpop.permute.xlu0 %351
      %vm361 = vcmask 1045504
      %v362 = vrot.slane %v276, 2
      %v363 = vrot.slane %v277, 2
      %v364 = vsel %vm361, %v362, %v363
      %v365 = vrot.slane %v278, 2
      %v366 = vrot.slane %v279, 2
      %v367 = vsel %vm361, %v365, %v366
      %v368 = vrot.slane %v280, 2
      %v369 = vrot.slane %v281, 2
      %v370 = vsel %vm361, %v368, %v369
      %v371 = vrot.slane %v282, 2
      %v372 = vrot.slane %v283, 2
      %v373 = vsel %vm361, %v371, %v372
      %v374 = vrot.slane %v284, 2
      %v375 = vrot.slane %v285, 2
      %v376 = vsel %vm361, %v374, %v375
      %v377 = vrot.slane %v286, 2
      %v378 = vrot.slane %v287, 2
      %v379 = vsel %vm361, %v377, %v378
      %v380 = vrot.slane %v288, 2
      %v381 = vrot.slane %v289, 2
      %v382 = vsel %vm361, %v380, %v381
      %v383 = vrot.slane %v290, 2
      %v384 = vrot.slane %v291, 2
      %v385 = vsel %vm361, %v383, %v384
      %386 = vrot.lane.b32.xlu0 %v364, 64
      %v387 = vpop.permute.xlu0 %386
      %388 = vrot.lane.b32.xlu0 %v367, 64
      %v389 = vpop.permute.xlu0 %388
      %390 = vrot.lane.b32.xlu0 %v370, 64
      %v391 = vpop.permute.xlu0 %390
      %392 = vrot.lane.b32.xlu0 %v373, 64
      %v393 = vpop.permute.xlu0 %392
      %394 = vrot.lane.b32.xlu0 %v376, 64
      %v395 = vpop.permute.xlu0 %394
      %396 = vrot.lane.b32.xlu0 %v379, 64
      %v397 = vpop.permute.xlu0 %396
      %398 = vrot.lane.b32.xlu0 %v382, 64
      %v399 = vpop.permute.xlu0 %398
      %400 = vrot.lane.b32.xlu0 %v385, 64
      %v401 = vpop.permute.xlu0 %400
      %411 = vrot.lane.b32.xlu0 %v278, 96
      %v412 = vpop.permute.xlu0 %411
      %413 = vrot.lane.b32.xlu0 %v280, 96
      %v414 = vpop.permute.xlu0 %413
      %415 = vrot.lane.b32.xlu0 %v282, 96
      %v416 = vpop.permute.xlu0 %415
      %417 = vrot.lane.b32.xlu0 %v284, 96
      %v418 = vpop.permute.xlu0 %417
      %419 = vrot.lane.b32.xlu0 %v286, 96
      %v420 = vpop.permute.xlu0 %419
      %421 = vrot.lane.b32.xlu0 %v288, 96
      %v422 = vpop.permute.xlu0 %421
      %423 = vrot.lane.b32.xlu0 %v290, 96
      %v424 = vpop.permute.xlu0 %423
      %425 = vrot.lane.b32.xlu0 %v292, 96
      %v426 = vpop.permute.xlu0 %425
      %v436 = vrot.slane %v292, 1
      %v437 = vrot.slane %v293, 1
      %v438 = vsel %vm312, %v436, %v437
      %v447 = vrot.slane %v292, 2
      %v448 = vrot.slane %v293, 2
      %v449 = vsel %vm361, %v447, %v448
      %450 = vrot.lane.b32.xlu0 %v367, 32
      %v451 = vpop.permute.xlu0 %450
      %452 = vrot.lane.b32.xlu0 %v370, 32
      %v453 = vpop.permute.xlu0 %452
      %454 = vrot.lane.b32.xlu0 %v373, 32
      %v455 = vpop.permute.xlu0 %454
      %456 = vrot.lane.b32.xlu0 %v376, 32
      %v457 = vpop.permute.xlu0 %456
      %458 = vrot.lane.b32.xlu0 %v379, 32
      %v459 = vpop.permute.xlu0 %458
      %460 = vrot.lane.b32.xlu0 %v382, 32
      %v461 = vpop.permute.xlu0 %460
      %462 = vrot.lane.b32.xlu0 %v385, 32
      %v463 = vpop.permute.xlu0 %462
      %464 = vrot.lane.b32.xlu0 %v449, 32
      %v465 = vpop.permute.xlu0 %464
      %475 = vrot.lane.b32.xlu0 %v280, 64
      %v476 = vpop.permute.xlu0 %475
      %477 = vrot.lane.b32.xlu0 %v282, 64
      %v478 = vpop.permute.xlu0 %477
      %479 = vrot.lane.b32.xlu0 %v284, 64
      %v480 = vpop.permute.xlu0 %479
      %481 = vrot.lane.b32.xlu0 %v286, 64
      %v482 = vpop.permute.xlu0 %481
      %483 = vrot.lane.b32.xlu0 %v288, 64
      %v484 = vpop.permute.xlu0 %483
      %485 = vrot.lane.b32.xlu0 %v290, 64
      %v486 = vpop.permute.xlu0 %485
      %487 = vrot.lane.b32.xlu0 %v292, 64
      %v488 = vpop.permute.xlu0 %487
      %489 = vrot.lane.b32.xlu0 %v294, 64
      %v490 = vpop.permute.xlu0 %489
      %v500 = vrot.slane %v294, 1
      %v501 = vrot.slane %v295, 1
      %v502 = vsel %vm312, %v500, %v501
      %503 = vrot.lane.b32.xlu0 %v321, 96
      %v504 = vpop.permute.xlu0 %503
      %505 = vrot.lane.b32.xlu0 %v324, 96
      %v506 = vpop.permute.xlu0 %505
      %507 = vrot.lane.b32.xlu0 %v327, 96
      %v508 = vpop.permute.xlu0 %507
      %509 = vrot.lane.b32.xlu0 %v330, 96
      %v510 = vpop.permute.xlu0 %509
      %511 = vrot.lane.b32.xlu0 %v333, 96
      %v512 = vpop.permute.xlu0 %511
      %513 = vrot.lane.b32.xlu0 %v336, 96
      %v514 = vpop.permute.xlu0 %513
      %515 = vrot.lane.b32.xlu0 %v438, 96
      %v516 = vpop.permute.xlu0 %515
      %517 = vrot.lane.b32.xlu0 %v502, 96
      %v518 = vpop.permute.xlu0 %517
      %v527 = vrot.slane %v294, 2
      %v528 = vrot.slane %v295, 2
      %v529 = vsel %vm361, %v527, %v528
      %v530 = vsel %vm245, %v276, %v338
      %v531 = vsel %vm245, %v278, %v340
      %v532 = vsel %vm245, %v280, %v342
      %v533 = vsel %vm245, %v282, %v344
      %v534 = vsel %vm245, %v284, %v346
      %v535 = vsel %vm245, %v286, %v348
      %v536 = vsel %vm245, %v288, %v350
      %v537 = vsel %vm245, %v290, %v352
      %vm538 = vcmask 523264
      %v539 = vsel %vm538, %v530, %v387
      %v540 = vsel %vm538, %v531, %v389
      %v541 = vsel %vm538, %v532, %v391
      %v542 = vsel %vm538, %v533, %v393
      %v543 = vsel %vm538, %v534, %v395
      %v544 = vsel %vm538, %v535, %v397
      %v545 = vsel %vm538, %v536, %v399
      %v546 = vsel %vm538, %v537, %v401
      %vm547 = vcmask 785408
      %v548 = vsel %vm547, %v539, %v412
      %v549 = vsel %vm547, %v540, %v414
      %v550 = vsel %vm547, %v541, %v416
      %v551 = vsel %vm547, %v542, %v418
      %v552 = vsel %vm547, %v543, %v420
      %v553 = vsel %vm547, %v544, %v422
      %v554 = vsel %vm547, %v545, %v424
      %v555 = vsel %vm547, %v546, %v426
      %v556 = vsel %vm245, %v318, %v451
      %v557 = vsel %vm245, %v321, %v453
      %v558 = vsel %vm245, %v324, %v455
      %v559 = vsel %vm245, %v327, %v457
      %v560 = vsel %vm245, %v330, %v459
      %v561 = vsel %vm245, %v333, %v461
      %v562 = vsel %vm245, %v336, %v463
      %v563 = vsel %vm245, %v438, %v465
      %v564 = vsel %vm538, %v556, %v476
      %v565 = vsel %vm538, %v557, %v478
      %v566 = vsel %vm538, %v558, %v480
      %v567 = vsel %vm538, %v559, %v482
      %v568 = vsel %vm538, %v560, %v484
      %v569 = vsel %vm538, %v561, %v486
      %v570 = vsel %vm538, %v562, %v488
      %v571 = vsel %vm538, %v563, %v490
      %v572 = vsel %vm547, %v564, %v504
      %v573 = vsel %vm547, %v565, %v506
      %v574 = vsel %vm547, %v566, %v508
      %v575 = vsel %vm547, %v567, %v510
      %v576 = vsel %vm547, %v568, %v512
      %v577 = vsel %vm547, %v569, %v514
      %v578 = vsel %vm547, %v570, %v516
      %v579 = vsel %vm547, %v571, %v518
      %v580 = vld [vmem:[%s1] sm:$0xff]
      %v581 = vld [vmem:[%s1 + $0x8] sm:$0xff]
      %v582 = vld [vmem:[%s1 + $0x10] sm:$0xff]
      %v583 = vld [vmem:[%s1 + $0x18] sm:$0xff]
      %v584 = vld [vmem:[%s1 + $0x20] sm:$0xff]
      %v585 = vld [vmem:[%s1 + $0x28] sm:$0xff]
      %v586 = vld [vmem:[%s1 + $0x30] sm:$0xff]
      %v587 = vld [vmem:[%s1 + $0x38] sm:$0xff]
      %v588 = vld [vmem:[%s1 + $0x40] sm:$0xff]
      %v589 = vld [vmem:[%s1 + $0x48] sm:$0xff]
      %v590 = vld [vmem:[%s1 + $0x50] sm:$0xff]
      %v591 = vld [vmem:[%s1 + $0x58] sm:$0xff]
      %v592 = vld [vmem:[%s1 + $0x60] sm:$0xff]
      %v593 = vld [vmem:[%s1 + $0x68] sm:$0xff]
      %v594 = vld [vmem:[%s1 + $0x70] sm:$0xff]
      %v595 = vld [vmem:[%s1 + $0x78] sm:$0xff]
      %v596 = vld [vmem:[%s1 + $0x80] sm:$0xff]
      %v597 = vld [vmem:[%s1 + $0x88] sm:$0xff]
      %v598 = vld [vmem:[%s1 + $0x90] sm:$0xff]
      %v599 = vld [vmem:[%s1 + $0x98] sm:$0xff]
      %v600 = vld [vmem:[%s1 + $0xa0] sm:$0xff]
      %v601 = vld [vmem:[%s1 + $0xa8] sm:$0xff]
      %v602 = vld [vmem:[%s1 + $0xb0] sm:$0xff]
      %v603 = vld [vmem:[%s1 + $0xb8] sm:$0xff]
      %v604 = vld [vmem:[%s1 + $0xc0] sm:$0xff]
      %v605 = vld [vmem:[%s1 + $0xc8] sm:$0xff]
      %v606 = vld [vmem:[%s1 + $0xd0] sm:$0xff]
      %v607 = vld [vmem:[%s1 + $0xd8] sm:$0xff]
      %v608 = vld [vmem:[%s1 + $0xe0] sm:$0xff]
      %v609 = vld [vmem:[%s1 + $0xe8] sm:$0xff]
      %v610 = vld [vmem:[%s1 + $0xf0] sm:$0xff]
      %v611 = vld [vmem:[%s1 + $0xf8] sm:$0xff]
      %v612 = vld [vmem:[%s1 + $0x100] sm:$0xff]
      %v613 = vld [vmem:[%s1 + $0x108] sm:$0xff]
      %v614 = vld [vmem:[%s1 + $0x110] sm:$0xff]
      %v615 = vld [vmem:[%s1 + $0x118] sm:$0xff]
      %v616 = vsel %vm245, %v370, 0
      %v618 = vsel %vm245, %v373, 0
      %v620 = vsel %vm245, %v376, 0
      %v622 = vsel %vm245, %v379, 0
      %v624 = vsel %vm245, %v382, 0
      %v626 = vsel %vm245, %v385, 0
      %v628 = vsel %vm245, %v449, 0
      %v630 = vsel %vm245, %v529, 0
      %632 = vmatpush.msra.mxu0 %v595
      %633 = vmatpush.msra.mxu0 %v594
      %634 = vmatpush.msra.mxu0 %v593
      %635 = vmatpush.msra.mxu0 %v592
      %636 = vmatpush.msra.mxu0 %v591
      %637 = vmatpush.msra.mxu0 %v590
      %638 = vmatpush.msra.mxu0 %v589
      %639 = vmatpush.msra.mxu0 %v588
      %640 = vmatpush.msra.mxu0 %v587
      %641 = vmatpush.msra.mxu0 %v586
      %642 = vmatpush.msra.mxu0 %v585
      %643 = vmatpush.msra.mxu0 %v584
      %644 = vmatpush.msra.mxu0 %v583
      %645 = vmatpush.msra.mxu0 %v582
      %646 = vmatpush.msra.mxu0 %v581
      %647 = vmatpush.msra.mxu0 %v580
      %648 = vmatmul.f32.gmra.mxu0 %v548
      %v649 = vpop.f32.mrf.mxu0
      %v650 = vadd.f32 0.0, %v649
      %651 = vmatmul.f32.gmra.mxu0 %v549
      %v652 = vpop.f32.mrf.mxu0
      %v653 = vadd.f32 0.0, %v652
      %654 = vmatmul.f32.gmra.mxu0 %v550
      %v655 = vpop.f32.mrf.mxu0
      %v656 = vadd.f32 0.0, %v655
      %657 = vmatmul.f32.gmra.mxu0 %v551
      %v658 = vpop.f32.mrf.mxu0
      %v659 = vadd.f32 0.0, %v658
      %660 = vmatmul.f32.gmra.mxu0 %v552
      %v661 = vpop.f32.mrf.mxu0
      %v662 = vadd.f32 0.0, %v661
      %663 = vmatmul.f32.gmra.mxu0 %v553
      %v664 = vpop.f32.mrf.mxu0
      %v665 = vadd.f32 0.0, %v664
      %666 = vmatmul.f32.gmra.mxu0 %v554
      %v667 = vpop.f32.mrf.mxu0
      %v668 = vadd.f32 0.0, %v667
      %669 = vmatmul.f32.gmra.mxu0 %v555
      %v670 = vpop.f32.mrf.mxu0
      %v671 = vadd.f32 0.0, %v670
      %672 = vdwg.mxu0
      %673 = vmatpush.msra.mxu0 %v611
      %674 = vmatpush.msra.mxu0 %v610
      %675 = vmatpush.msra.mxu0 %v609
      %676 = vmatpush.msra.mxu0 %v608
      %677 = vmatpush.msra.mxu0 %v607
      %678 = vmatpush.msra.mxu0 %v606
      %679 = vmatpush.msra.mxu0 %v605
      %680 = vmatpush.msra.mxu0 %v604
      %681 = vmatpush.msra.mxu0 %v603
      %682 = vmatpush.msra.mxu0 %v602
      %683 = vmatpush.msra.mxu0 %v601
      %684 = vmatpush.msra.mxu0 %v600
      %685 = vmatpush.msra.mxu0 %v599
      %686 = vmatpush.msra.mxu0 %v598
      %687 = vmatpush.msra.mxu0 %v597
      %688 = vmatpush.msra.mxu0 %v596
      %689 = vmatmul.f32.gmra.mxu0 %v572
      %v690 = vpop.f32.mrf.mxu0
      %v691 = vadd.f32 %v650, %v690
      %692 = vmatmul.f32.gmra.mxu0 %v573
      %v693 = vpop.f32.mrf.mxu0
      %v694 = vadd.f32 %v653, %v693
      %695 = vmatmul.f32.gmra.mxu0 %v574
      %v696 = vpop.f32.mrf.mxu0
      %v697 = vadd.f32 %v656, %v696
      %698 = vmatmul.f32.gmra.mxu0 %v575
      %v699 = vpop.f32.mrf.mxu0
      %v700 = vadd.f32 %v659, %v699
      %701 = vmatmul.f32.gmra.mxu0 %v576
      %v702 = vpop.f32.mrf.mxu0
      %v703 = vadd.f32 %v662, %v702
      %704 = vmatmul.f32.gmra.mxu0 %v577
      %v705 = vpop.f32.mrf.mxu0
      %v706 = vadd.f32 %v665, %v705
      %707 = vmatmul.f32.gmra.mxu0 %v578
      %v708 = vpop.f32.mrf.mxu0
      %v709 = vadd.f32 %v668, %v708
      %710 = vmatmul.f32.gmra.mxu0 %v579
      %v711 = vpop.f32.mrf.mxu0
      %v712 = vadd.f32 %v671, %v711
      %713 = vdwg.mxu0
      %714 = vmatpush.msra.mxu0 0.0
      %715 = vmatpush.msra.mxu0 0.0
      %716 = vmatpush.msra.mxu0 0.0
      %717 = vmatpush.msra.mxu0 0.0
      %718 = vmatpush.msra.mxu0 0.0
      %719 = vmatpush.msra.mxu0 0.0
      %720 = vmatpush.msra.mxu0 0.0
      %721 = vmatpush.msra.mxu0 0.0
      %722 = vmatpush.msra.mxu0 0.0
      %723 = vmatpush.msra.mxu0 0.0
      %724 = vmatpush.msra.mxu0 0.0
      %725 = vmatpush.msra.mxu0 0.0
      %726 = vmatpush.msra.mxu0 %v615
      %727 = vmatpush.msra.mxu0 %v614
      %728 = vmatpush.msra.mxu0 %v613
      %729 = vmatpush.msra.mxu0 %v612
      %730 = vmatmul.f32.gmra.mxu0 %v616
      %v731 = vpop.f32.mrf.mxu0
      %v732 = vadd.f32 %v691, %v731
      %733 = vmatmul.f32.gmra.mxu0 %v618
      %v734 = vpop.f32.mrf.mxu0
      %v735 = vadd.f32 %v694, %v734
      %736 = vmatmul.f32.gmra.mxu0 %v620
      %v737 = vpop.f32.mrf.mxu0
      %v738 = vadd.f32 %v697, %v737
      %739 = vmatmul.f32.gmra.mxu0 %v622
      %v740 = vpop.f32.mrf.mxu0
      %v741 = vadd.f32 %v700, %v740
      %742 = vmatmul.f32.gmra.mxu0 %v624
      %v743 = vpop.f32.mrf.mxu0
      %v744 = vadd.f32 %v703, %v743
      %745 = vmatmul.f32.gmra.mxu0 %v626
      %v746 = vpop.f32.mrf.mxu0
      %v747 = vadd.f32 %v706, %v746
      %748 = vmatmul.f32.gmra.mxu0 %v628
      %v749 = vpop.f32.mrf.mxu0
      %v750 = vadd.f32 %v709, %v749
      %751 = vmatmul.f32.gmra.mxu0 %v630
      %v752 = vpop.f32.mrf.mxu0
      %v753 = vadd.f32 %v712, %v752
      %754 = vdwg.mxu0
      %v755 = vsel %vm245, %v732, 0.0
      %v756 = vsel %vm245, %v735, 0.0
      %v757 = vadd.f32 %v755, %v756
      %v758 = vsel %vm245, %v738, 0.0
      %v759 = vadd.f32 %v757, %v758
      %v760 = vsel %vm245, %v741, 0.0
      %v761 = vadd.f32 %v759, %v760
      %v762 = vsel %vm245, %v744, 0.0
      %v763 = vadd.f32 %v761, %v762
      %v764 = vsel %vm245, %v747, 0.0
      %v765 = vadd.f32 %v763, %v764
      %v766 = vsel %vm245, %v750, 0.0
      %v767 = vadd.f32 %v765, %v766
      %v768 = vsel %vm245, %v753, 0.0
      %v769 = vadd.f32 %v767, %v768
      %v770 = vrot.slane %v769, 4
      %v771 = vadd.f32 %v769, %v770
      %v772 = vrot.slane %v771, 2
      %v773 = vadd.f32 %v771, %v772
      %v774 = vrot.slane %v773, 1
      %v775 = vadd.f32 %v773, %v774
      %v776 = vmul.f32 %v732, %v732
      %v777 = vmul.f32 %v735, %v735
      %v778 = vmul.f32 %v738, %v738
      %v779 = vmul.f32 %v741, %v741
      %v780 = vmul.f32 %v744, %v744
      %v781 = vmul.f32 %v747, %v747
      %v782 = vmul.f32 %v750, %v750
      %v783 = vmul.f32 %v753, %v753
      %v784 = vsel %vm245, %v776, 0.0
      %v785 = vsel %vm245, %v777, 0.0
      %v786 = vadd.f32 %v784, %v785
      %v787 = vsel %vm245, %v778, 0.0
      %v788 = vadd.f32 %v786, %v787
      %v789 = vsel %vm245, %v779, 0.0
      %v790 = vadd.f32 %v788, %v789
      %v791 = vsel %vm245, %v780, 0.0
      %v792 = vadd.f32 %v790, %v791
      %v793 = vsel %vm245, %v781, 0.0
      %v794 = vadd.f32 %v792, %v793
      %v795 = vsel %vm245, %v782, 0.0
      %v796 = vadd.f32 %v794, %v795
      %v797 = vsel %vm245, %v783, 0.0
      %v798 = vadd.f32 %v796, %v797
      %v799 = vrot.slane %v798, 4
      %v800 = vadd.f32 %v798, %v799
      %v801 = vrot.slane %v800, 2
      %v802 = vadd.f32 %v800, %v801
      %v803 = vrot.slane %v802, 1
      %v804 = vadd.f32 %v802, %v803
      %vm805 = vcmask 1040384
      %v806 = vsel %vm805, %v775, %v804
      %807 = vst.msk [vmem:[%s208] sm:$0x3] %vm247, %v806
      %808 = vst.msk [vmem:[%s204] sm:$0xff] %vm245, %v732
      %809 = vst.msk [vmem:[%s204 + $0x8] sm:$0xff] %vm245, %v735
      %810 = vst.msk [vmem:[%s204 + $0x10] sm:$0xff] %vm245, %v738
      %811 = vst.msk [vmem:[%s204 + $0x18] sm:$0xff] %vm245, %v741
      %812 = vst.msk [vmem:[%s204 + $0x20] sm:$0xff] %vm245, %v744
      %813 = vst.msk [vmem:[%s204 + $0x28] sm:$0xff] %vm245, %v747
      %814 = vst.msk [vmem:[%s204 + $0x30] sm:$0xff] %vm245, %v750
      %815 = vst.msk [vmem:[%s204 + $0x38] sm:$0xff] %vm245, %v753
      %p816 = scmp.lt.s32.totalorder %s16, 1
      %s817 = scalar_select %p816, %s16, 1
      %s818 = smul.addr %s817, 8
      %s819 = smul.addr %s818, 8
      %s820 = scalar_lea.vmem %s3, %s819
      %p821 = scmp.lt.s32.totalorder %s16, 1
      %s822 = scalar_select %p821, %s16, 1
      %s823 = smul.addr %s822, 2
      %s824 = scalar_lea.vmem %s4, %s823
      // Predicated region
      $region33: #{head_layer_c.5} parent=31 // pred_check
        %p825 = pneg %p102
      $region34: #{head_layer_c.5} parent=31 // pred_check_branch
        %827 = sbr.rel (%p825) target = $region36
      $region35: #{head_layer_c.5} parent=31 // pred_region
        _
      $region36: #{head_layer_c.5} parent=31 // pred_fallthru
        _
      // Predicated region
      $region37: #{head_layer_c.5} parent=31 // pred_check
        %p828 = pneg %p128
      $region38: #{head_layer_c.5} parent=31 // pred_check_branch
        %830 = sbr.rel (%p828) target = $region40
      $region39: #{head_layer_c.5} parent=31 // pred_region
        _
      $region40: #{head_layer_c.5} parent=31 // pred_fallthru
        _
    $region32: #{head_layer_c.5} parent=5 // pred_fallthru
      _
    %p831 = scmp.le.s32.totalorder 2, %s11
    // Predicated region
    $region41: #{head_layer_c.5} parent=5 // pred_check
      %p832 = pneg %p831
    $region42: #{head_layer_c.5} parent=5 // pred_check_branch
      %834 = sbr.rel (%p832) target = $region44
    $region43: #{head_layer_c.5} parent=5 // pred_region
      %s835 = ssub.s32 %s11, 2
      // Predicated region
      $region45: #{head_layer_c.5} parent=43 // pred_check
        %p836 = pneg %p108
      $region46: #{head_layer_c.5} parent=43 // pred_check_branch
        %838 = sbr.rel (%p836) target = $region48
      $region47: #{head_layer_c.5} parent=43 // pred_region
        %p839 = scmp.lt.s32.totalorder %s17, 1
        %s840 = scalar_select %p839, %s17, 1
        %s841 = smul.addr %s840, 8
        %s842 = smul.addr %s841, 8
        %s843 = scalar_lea.vmem %s3, %s842
      $region48: #{head_layer_c.5} parent=43 // pred_fallthru
        _
      // Predicated region
      $region49: #{head_layer_c.5} parent=43 // pred_check
        %p844 = pneg %p134
      $region50: #{head_layer_c.5} parent=43 // pred_check_branch
        %846 = sbr.rel (%p844) target = $region52
      $region51: #{head_layer_c.5} parent=43 // pred_region
        %p847 = scmp.lt.s32.totalorder %s17, 1
        %s848 = scalar_select %p847, %s17, 1
        %s849 = smul.addr %s848, 2
        %s850 = scalar_lea.vmem %s4, %s849
      $region52: #{head_layer_c.5} parent=43 // pred_fallthru
        _
    $region44: #{head_layer_c.5} parent=5 // pred_fallthru
      _
  $region6: #{head_layer_c.5} parent=0 // loop_footer
    %s15 = sadd.s32 1, %s11
  $region7: #{head_layer_c.5} parent=0 // loop_footer_branch
    %10 = sbr.rel target = $region3
  $region8: #{head_layer_c.5} parent=0 // loop_exit
    _

// kernel: head_layer_c.6
$region0: #{head_layer_c.6}
  #allocation0 [shape = 'u32[]', space=smem, size = 0x4, offset = 0x4, fixed_abs, tag = 'smem constant byte address 0x4 - core index']
  #allocation1 [shape = 'u32[72,128]{1,0:T(1,128)}', space=vmem, size = 0x9000, scoped, tag = 'internal scratch']
  #allocation2 [shape = 'f32[10,10,32]{2,1,0:T(8,128)}', space=vmem, size = 0x14000, scoped, tag = 'scratch operand']
  %s0 = inlined_call_operand.vmem [shape: f32[2,8,8,32], index: 0, kind: input, shape index: {}]
  %s1 = inlined_call_operand.vmem [shape: f32[288,64], index: 1, kind: input, shape index: {}]
  %s2 = inlined_call_operand.vmem [shape: f32[2,32], index: 2, kind: input, shape index: {}]
  %s3 = inlined_call_operand.vmem [shape: f32[2,8,8,64], index: 3, kind: output, shape index: {0}]
  %s4 = inlined_call_operand.vmem [shape: f32[2,2,64], index: 4, kind: output, shape index: {1}]
  %5 = xla_tuple %s3, %s4
  %s6 = sld [smem:[#allocation0]]
  $region53: #{head_layer_c.6} parent=0
    _
  %s8 = ssub.s32 1, %s6
  %s9 = scalar_select 0, %s8, %s6
  loop: start=0, step=1, limit=4
  $region2: #{head_layer_c.6} parent=0 // loop_pre_header
    _
  $region3: #{head_layer_c.6} parent=0 // loop_header
    %s11 = sphi 0, %s15
    %p12 = scmp.ge.s32.totalorder %s11, 4
    %s21 = sphi 0, %s23
    %s24 = sphi 0, %s21
    %s25 = sphi 0, %s24
    %s41 = sphi 0, %s25
    %s45 = sphi 0, %s45
    %s47 = sphi 0, %s45
    %s48 = sphi 0, %s47
    %s62 = sphi 0, %s48
    %s66 = sphi 0, %s66
    %s68 = sphi 0, %s66
    %s69 = sphi 0, %s68
    %s83 = sphi 0, %s69
    %s89 = sphi 0, %s91
    %s92 = sphi 0, %s89
    %s93 = sphi 0, %s92
    %s109 = sphi 0, %s93
    %s115 = sphi 0, %s117
    %s118 = sphi 0, %s115
    %s119 = sphi 0, %s118
    %s135 = sphi 0, %s119
  $region4: #{head_layer_c.6} parent=0 // loop_header_branch
    %14 = sbr.rel (%p12) target = $region8
  $region5: #{head_layer_c.6} parent=0 // loop_body
    %s16 = ssub.s32 %s11, 1
    %s17 = ssub.s32 %s11, 2
    %s18 = sadd.s32 %s11, 1
    %s19 = ssub.s32 %s11, %s18
    %p20 = scmp.eq.s32.totalorder %s19, 0
    %s22 = sadd.s32 %s21, 1
    %s23 = scalar_select %p20, %s21, %s22
    %p26 = pneg %p20
    %p27 = scmp.eq.s32.totalorder %s11, 1
    %p28 = por %p26, %p27
    %p29 = scmp.ne.s32.totalorder %s21, %s24
    %p30 = scmp.eq.s32.totalorder %s11, 0
    %p31 = por %p29, %p30
    %p32 = scmp.ne.s32.totalorder %s21, %s24
    %p33 = scmp.eq.s32.totalorder %s16, 1
    %p34 = por %p32, %p33
    %p35 = scmp.ne.s32.totalorder %s24, %s25
    %p36 = scmp.eq.s32.totalorder %s16, 0
    %p37 = por %p35, %p36
    %p38 = scmp.ne.s32.totalorder %s24, %s25
    %p39 = scmp.eq.s32.totalorder %s17, 1
    %p40 = por %p38, %p39
    %p42 = scmp.ne.s32.totalorder %s25, %s41
    %p43 = scmp.eq.s32.totalorder %s17, 0
    %p44 = por %p42, %p43
    %s46 = sadd.s32 %s45, 1
    %p49 = scmp.eq.s32.totalorder %s11, 1
    %p50 = scmp.ne.s32.totalorder %s45, %s47
    %p51 = scmp.eq.s32.totalorder %s11, 0
    %p52 = por %p50, %p51
    %p53 = scmp.ne.s32.totalorder %s45, %s47
    %p54 = scmp.eq.s32.totalorder %s16, 1
    %p55 = por %p53, %p54
    %p56 = scmp.ne.s32.totalorder %s47, %s48
    %p57 = scmp.eq.s32.totalorder %s16, 0
    %p58 = por %p56, %p57
    %p59 = scmp.ne.s32.totalorder %s47, %s48
    %p60 = scmp.eq.s32.totalorder %s17, 1
    %p61 = por %p59, %p60
    %p63 = scmp.ne.s32.totalorder %s48, %s62
    %p64 = scmp.eq.s32.totalorder %s17, 0
    %p65 = por %p63, %p64
    %s67 = sadd.s32 %s66, 1
    %p70 = scmp.eq.s32.totalorder %s11, 1
    %p71 = scmp.ne.s32.totalorder %s66, %s68
    %p72 = scmp.eq.s32.totalorder %s11, 0
    %p73 = por %p71, %p72
    %p74 = scmp.ne.s32.totalorder %s66, %s68
    %p75 = scmp.eq.s32.totalorder %s16, 1
    %p76 = por %p74, %p75
    %p77 = scmp.ne.s32.totalorder %s68, %s69
    %p78 = scmp.eq.s32.totalorder %s16, 0
    %p79 = por %p77, %p78
    %p80 = scmp.ne.s32.totalorder %s68, %s69
    %p81 = scmp.eq.s32.totalorder %s17, 1
    %p82 = por %p80, %p81
    %p84 = scmp.ne.s32.totalorder %s69, %s83
    %p85 = scmp.eq.s32.totalorder %s17, 0
    %p86 = por %p84, %p85
    %s87 = ssub.s32 %s11, %s18
    %p88 = scmp.eq.s32.totalorder %s87, 0
    %s90 = sadd.s32 %s89, 1
    %s91 = scalar_select %p88, %s89, %s90
    %p94 = pneg %p88
    %p95 = scmp.eq.s32.totalorder %s11, 1
    %p96 = por %p94, %p95
    %p97 = scmp.ne.s32.totalorder %s89, %s92
    %p98 = scmp.eq.s32.totalorder %s11, 0
    %p99 = por %p97, %p98
    %p100 = scmp.ne.s32.totalorder %s89, %s92
    %p101 = scmp.eq.s32.totalorder %s16, 1
    %p102 = por %p100, %p101
    %p103 = scmp.ne.s32.totalorder %s92, %s93
    %p104 = scmp.eq.s32.totalorder %s16, 0
    %p105 = por %p103, %p104
    %p106 = scmp.ne.s32.totalorder %s92, %s93
    %p107 = scmp.eq.s32.totalorder %s17, 1
    %p108 = por %p106, %p107
    %p110 = scmp.ne.s32.totalorder %s93, %s109
    %p111 = scmp.eq.s32.totalorder %s17, 0
    %p112 = por %p110, %p111
    %s113 = ssub.s32 %s11, %s18
    %p114 = scmp.eq.s32.totalorder %s113, 0
    %s116 = sadd.s32 %s115, 1
    %s117 = scalar_select %p114, %s115, %s116
    %p120 = pneg %p114
    %p121 = scmp.eq.s32.totalorder %s11, 1
    %p122 = por %p120, %p121
    %p123 = scmp.ne.s32.totalorder %s115, %s118
    %p124 = scmp.eq.s32.totalorder %s11, 0
    %p125 = por %p123, %p124
    %p126 = scmp.ne.s32.totalorder %s115, %s118
    %p127 = scmp.eq.s32.totalorder %s16, 1
    %p128 = por %p126, %p127
    %p129 = scmp.ne.s32.totalorder %s118, %s119
    %p130 = scmp.eq.s32.totalorder %s16, 0
    %p131 = por %p129, %p130
    %p132 = scmp.ne.s32.totalorder %s118, %s119
    %p133 = scmp.eq.s32.totalorder %s17, 1
    %p134 = por %p132, %p133
    %p136 = scmp.ne.s32.totalorder %s119, %s135
    %p137 = scmp.eq.s32.totalorder %s17, 0
    %p138 = por %p136, %p137
    %p139 = scmp.le.s32.totalorder 1, %s11
    %p140 = scmp.lt.s32.totalorder %s11, 3
    %p141 = pnand %p139, %p140
    %p142 = pneg %p141
    // Predicated region
    $region9: #{head_layer_c.6} parent=5 // pred_check
      _
    $region10: #{head_layer_c.6} parent=5 // pred_check_branch
      %144 = sbr.rel (%p141) target = $region12
    $region11: #{head_layer_c.6} parent=5 // pred_region
      %s145 = ssub.s32 %s11, 1
      // Predicated region
      $region13: #{head_layer_c.6} parent=11 // pred_check
        %p146 = pneg %p58
      $region14: #{head_layer_c.6} parent=11 // pred_check_branch
        %148 = sbr.rel (%p146) target = $region16
      $region15: #{head_layer_c.6} parent=11 // pred_region
        _
      $region16: #{head_layer_c.6} parent=11 // pred_fallthru
        _
      // Predicated region
      $region17: #{head_layer_c.6} parent=11 // pred_check
        %p149 = pneg %p79
      $region18: #{head_layer_c.6} parent=11 // pred_check_branch
        %151 = sbr.rel (%p149) target = $region20
      $region19: #{head_layer_c.6} parent=11 // pred_region
        _
      $region20: #{head_layer_c.6} parent=11 // pred_fallthru
        _
    $region12: #{head_layer_c.6} parent=5 // pred_fallthru
      _
    %p152 = scmp.lt.s32.totalorder %s11, 2
    // Predicated region
    $region21: #{head_layer_c.6} parent=5 // pred_check
      %p153 = pneg %p152
    $region22: #{head_layer_c.6} parent=5 // pred_check_branch
      %155 = sbr.rel (%p153) target = $region24
    $region23: #{head_layer_c.6} parent=5 // pred_region
      // Predicated region
      $region25: #{head_layer_c.6} parent=23 // pred_check
        %p156 = pneg %p31
      $region26: #{head_layer_c.6} parent=23 // pred_check_branch
        %158 = sbr.rel (%p156) target = $region28
      $region27: #{head_layer_c.6} parent=23 // pred_region
        %p159 = scmp.lt.s32.totalorder %s11, 1
        %s160 = scalar_select %p159, %s11, 1
        %s161 = smul.addr %s160, 8
        %s162 = smul.addr %s161, 8
        %s163 = scalar_lea.vmem %s0, %s162
      $region28: #{head_layer_c.6} parent=23 // pred_fallthru
        _
    $region24: #{head_layer_c.6} parent=5 // pred_fallthru
      _
    %p164 = scmp.le.s32.totalorder 1, %s11
    %p165 = scmp.lt.s32.totalorder %s11, 3
    %p166 = pnand %p164, %p165
    %p167 = pneg %p166
    // Predicated region
    $region29: #{head_layer_c.6} parent=5 // pred_check
      _
    $region30: #{head_layer_c.6} parent=5 // pred_check_branch
      %169 = sbr.rel (%p166) target = $region32
    $region31: #{head_layer_c.6} parent=5 // pred_region
      %s170 = ssub.s32 %s11, 1
      %p171 = scmp.lt.s32.totalorder %s16, 1
      %s172 = scalar_select %p171, %s16, 1
      %s173 = smul.addr %s172, 8
      %s174 = smul.addr %s173, 8
      %s175 = scalar_lea.vmem %s0, %s174
      %p176 = pneg %p37
      %p177 = pneg %p34
      %p178 = pneg %p58
      %p179 = pneg %p55
      %p180 = pneg %p79
      %p181 = pneg %p76
      %p182 = pneg %p105
      %p183 = pneg %p102
      %p184 = scmp.lt.s32.totalorder %s16, 1
      %s185 = scalar_select %p184, %s16, 1
      %s186 = smul.addr %s185, 8
      %s187 = smul.addr %s186, 8
      %s188 = scalar_lea.vmem %s3, %s187
      %p189 = pneg %p131
      %p190 = pneg %p128
      %p191 = scmp.lt.s32.totalorder %s16, 1
      %s192 = scalar_select %p191, %s16, 1
      %s193 = smul.addr %s192, 2
      %s194 = scalar_lea.vmem %s4, %s193
      %p195 = scmp.lt.s32.totalorder %s16, 1
      %s196 = scalar_select %p195, %s16, 1
      %s197 = smul.addr %s196, 8
      %s198 = smul.addr %s197, 8
      %s199 = scalar_lea.vmem %s0, %s198
      %p200 = scmp.lt.s32.totalorder %s16, 1
      %s201 = scalar_select %p200, %s16, 1
      %s202 = smul.addr %s201, 8
      %s203 = smul.addr %s202, 8
      %s204 = scalar_lea.vmem %s3, %s203
      %p205 = scmp.lt.s32.totalorder %s16, 1
      %s206 = scalar_select %p205, %s16, 1
      %s207 = smul.addr %s206, 2
      %s208 = scalar_lea.vmem %s4, %s207
      %v209 = vld [vmem:[%s199] sm:$0xff]
      %v210 = vld [vmem:[%s199 + $0x8] sm:$0xff]
      %v211 = vld [vmem:[%s199 + $0x10] sm:$0xff]
      %v212 = vld [vmem:[%s199 + $0x18] sm:$0xff]
      %v213 = vld [vmem:[%s199 + $0x20] sm:$0xff]
      %v214 = vld [vmem:[%s199 + $0x28] sm:$0xff]
      %v215 = vld [vmem:[%s199 + $0x30] sm:$0xff]
      %v216 = vld [vmem:[%s199 + $0x38] sm:$0xff]
      %v217 = vld [vmem:[%s2] sm:$0x1]
      %v218 = vld [vmem:[%s2 + $0x1] sm:$0x1]
      %v219 = vperm.slane %v217, 0
      %v220 = vmul.f32 %v209, %v219
      %v221 = vmul.f32 %v210, %v219
      %v222 = vmul.f32 %v211, %v219
      %v223 = vmul.f32 %v212, %v219
      %v224 = vmul.f32 %v213, %v219
      %v225 = vmul.f32 %v214, %v219
      %v226 = vmul.f32 %v215, %v219
      %v227 = vmul.f32 %v216, %v219
      %v228 = vperm.slane %v218, 0
      %v229 = vadd.f32 %v220, %v228
      %v230 = vadd.f32 %v221, %v228
      %v231 = vadd.f32 %v222, %v228
      %v232 = vadd.f32 %v223, %v228
      %v233 = vadd.f32 %v224, %v228
      %v234 = vadd.f32 %v225, %v228
      %v235 = vadd.f32 %v226, %v228
      %v236 = vadd.f32 %v227, %v228
      %v237 = vmax.f32 %v229, 0.0
      %v238 = vmax.f32 %v230, 0.0
      %v239 = vmax.f32 %v231, 0.0
      %v240 = vmax.f32 %v232, 0.0
      %v241 = vmax.f32 %v233, 0.0
      %v242 = vmax.f32 %v234, 0.0
      %v243 = vmax.f32 %v235, 0.0
      %v244 = vmax.f32 %v236, 0.0
      %vm245 = vcmask 261120
      %246 = vst.msk [vmem:[#allocation2] sm:$0xff] %vm245, 0.0
      %vm247 = vcmask 254976
      %248 = vst.msk [vmem:[#allocation2 + $0x8] sm:$0x3] %vm247, 0.0
      %249 = vst.msk [vmem:[#allocation2 + $0x10] sm:$0xff] %vm245, 0.0
      %250 = vst.msk [vmem:[#allocation2 + $0x18] sm:$0x3] %vm247, 0.0
      %251 = vst.msk [vmem:[#allocation2 + $0x20] sm:$0xff] %vm245, 0.0
      %252 = vst.msk [vmem:[#allocation2 + $0x28] sm:$0x3] %vm247, 0.0
      %253 = vst.msk [vmem:[#allocation2 + $0x30] sm:$0xff] %vm245, 0.0
      %254 = vst.msk [vmem:[#allocation2 + $0x38] sm:$0x3] %vm247, 0.0
      %255 = vst.msk [vmem:[#allocation2 + $0x40] sm:$0xff] %vm245, 0.0
      %256 = vst.msk [vmem:[#allocation2 + $0x48] sm:$0x3] %vm247, 0.0
      %257 = vst.msk [vmem:[#allocation2 + $0x50] sm:$0xff] %vm245, 0.0
      %258 = vst.msk [vmem:[#allocation2 + $0x58] sm:$0x3] %vm247, 0.0
      %259 = vst.msk [vmem:[#allocation2 + $0x60] sm:$0xff] %vm245, 0.0
      %260 = vst.msk [vmem:[#allocation2 + $0x68] sm:$0x3] %vm247, 0.0
      %261 = vst.msk [vmem:[#allocation2 + $0x70] sm:$0xff] %vm245, 0.0
      %262 = vst.msk [vmem:[#allocation2 + $0x78] sm:$0x3] %vm247, 0.0
      %263 = vst.msk [vmem:[#allocation2 + $0x80] sm:$0xff] %vm245, 0.0
      %264 = vst.msk [vmem:[#allocation2 + $0x88] sm:$0x3] %vm247, 0.0
      %265 = vst.msk [vmem:[#allocation2 + $0x90] sm:$0xff] %vm245, 0.0
      %266 = vst.msk [vmem:[#allocation2 + $0x98] sm:$0x3] %vm247, 0.0
      %s267 = scalar_lea.vmem [#allocation2], 16
      %268 = vst.msk [vmem:[%s267 + $0x1] sm:$0xff] %vm245, %v237
      %269 = vst.msk [vmem:[%s267 + $0x11] sm:$0xff] %vm245, %v238
      %270 = vst.msk [vmem:[%s267 + $0x21] sm:$0xff] %vm245, %v239
      %271 = vst.msk [vmem:[%s267 + $0x31] sm:$0xff] %vm245, %v240
      %272 = vst.msk [vmem:[%s267 + $0x41] sm:$0xff] %vm245, %v241
      %273 = vst.msk [vmem:[%s267 + $0x51] sm:$0xff] %vm245, %v242
      %274 = vst.msk [vmem:[%s267 + $0x61] sm:$0xff] %vm245, %v243
      %275 = vst.msk [vmem:[%s267 + $0x71] sm:$0xff] %vm245, %v244
      %v276 = vld [vmem:[#allocation2] sm:$0xff]
      %v277 = vld [vmem:[#allocation2 + $0x8] sm:$0x3]
      %v278 = vld [vmem:[#allocation2 + $0x10] sm:$0xff]
      %v279 = vld [vmem:[#allocation2 + $0x18] sm:$0x3]
      %v280 = vld [vmem:[#allocation2 + $0x20] sm:$0xff]
      %v281 = vld [vmem:[#allocation2 + $0x28] sm:$0x3]
      %v282 = vld [vmem:[#allocation2 + $0x30] sm:$0xff]
      %v283 = vld [vmem:[#allocation2 + $0x38] sm:$0x3]
      %v284 = vld [vmem:[#allocation2 + $0x40] sm:$0xff]
      %v285 = vld [vmem:[#allocation2 + $0x48] sm:$0x3]
      %v286 = vld [vmem:[#allocation2 + $0x50] sm:$0xff]
      %v287 = vld [vmem:[#allocation2 + $0x58] sm:$0x3]
      %v288 = vld [vmem:[#allocation2 + $0x60] sm:$0xff]
      %v289 = vld [vmem:[#allocation2 + $0x68] sm:$0x3]
      %v290 = vld [vmem:[#allocation2 + $0x70] sm:$0xff]
      %v291 = vld [vmem:[#allocation2 + $0x78] sm:$0x3]
      %v292 = vld [vmem:[#allocation2 + $0x80] sm:$0xff]
      %v293 = vld [vmem:[#allocation2 + $0x88] sm:$0x3]
      %v294 = vld [vmem:[#allocation2 + $0x90] sm:$0xff]
      %v295 = vld [vmem:[#allocation2 + $0x98] sm:$0x3]
      %vm312 = vcmask 1046528
      %v313 = vrot.slane %v276, 1
      %v314 = vrot.slane %v277, 1
      %v315 = vsel %vm312, %v313, %v314
      %v316 = vrot.slane %v278, 1
      %v317 = vrot.slane %v279, 1
      %v318 = vsel %vm312, %v316, %v317
      %v319 = vrot.slane %v280, 1
      %v320 = vrot.slane %v281, 1
      %v321 = vsel %vm312, %v319, %v320
      %v322 = vrot.slane %v282, 1
      %v323 = vrot.slane %v283, 1
      %v324 = vsel %vm312, %v322, %v323
      %v325 = vrot.slane %v284, 1
      %v326 = vrot.slane %v285, 1
      %v327 = vsel %vm312, %v325, %v326
      %v328 = vrot.slane %v286, 1
      %v329 = vrot.slane %v287, 1
      %v330 = vsel %vm312, %v328, %v329
      %v331 = vrot.slane %v288, 1
      %v332 = vrot.slane %v289, 1
      %v333 = vsel %vm312, %v331, %v332
      %v334 = vrot.slane %v290, 1
      %v335 = vrot.slane %v291, 1
      %v336 = vsel %vm312, %v334, %v335
      %337 = vrot.lane.b32.xlu0 %v315, 32
      %v338 = vpop.permute.xlu0 %337
      %339 = vrot.lane.b32.xlu0 %v318, 32
      %v340 = vpop.permute.xlu0 %339
      %341 = vrot.lane.b32.xlu0 %v321, 32
      %v342 = vpop.permute.xlu0 %341
      %343 = vrot.lane.b32.xlu0 %v324, 32
      %v344 = vpop.permute.xlu0 %343
      %345 = vrot.lane.b32.xlu0 %v327, 32
      %v346 = vpop.permute.xlu0 %345
      %347 = vrot.lane.b32.xlu0 %v330, 32
      %v348 = vpop.permute.xlu0 %347
      %349 = vrot.lane.b32.xlu0 %v333, 32
      %v350 = vpop.permute.xlu0 %349
      %351 = vrot.lane.b32.xlu0 %v336, 32
      %v352 = vpop.permute.xlu0 %351
      %vm361 = vcmask 1045504
      %v362 = vrot.slane %v276, 2
      %v363 = vrot.slane %v277, 2
      %v364 = vsel %vm361, %v362, %v363
      %v365 = vrot.slane %v278, 2
      %v366 = vrot.slane %v279, 2
      %v367 = vsel %vm361, %v365, %v366
      %v368 = vrot.slane %v280, 2
      %v369 = vrot.slane %v281, 2
      %v370 = vsel %vm361, %v368, %v369
      %v371 = vrot.slane %v282, 2
      %v372 = vrot.slane %v283, 2
      %v373 = vsel %vm361, %v371, %v372
      %v374 = vrot.slane %v284, 2
      %v375 = vrot.slane %v285, 2
      %v376 = vsel %vm361, %v374, %v375
      %v377 = vrot.slane %v286, 2
      %v378 = vrot.slane %v287, 2
      %v379 = vsel %vm361, %v377, %v378
      %v380 = vrot.slane %v288, 2
      %v381 = vrot.slane %v289, 2
      %v382 = vsel %vm361, %v380, %v381
      %v383 = vrot.slane %v290, 2
      %v384 = vrot.slane %v291, 2
      %v385 = vsel %vm361, %v383, %v384
      %386 = vrot.lane.b32.xlu0 %v364, 64
      %v387 = vpop.permute.xlu0 %386
      %388 = vrot.lane.b32.xlu0 %v367, 64
      %v389 = vpop.permute.xlu0 %388
      %390 = vrot.lane.b32.xlu0 %v370, 64
      %v391 = vpop.permute.xlu0 %390
      %392 = vrot.lane.b32.xlu0 %v373, 64
      %v393 = vpop.permute.xlu0 %392
      %394 = vrot.lane.b32.xlu0 %v376, 64
      %v395 = vpop.permute.xlu0 %394
      %396 = vrot.lane.b32.xlu0 %v379, 64
      %v397 = vpop.permute.xlu0 %396
      %398 = vrot.lane.b32.xlu0 %v382, 64
      %v399 = vpop.permute.xlu0 %398
      %400 = vrot.lane.b32.xlu0 %v385, 64
      %v401 = vpop.permute.xlu0 %400
      %411 = vrot.lane.b32.xlu0 %v278, 96
      %v412 = vpop.permute.xlu0 %411
      %413 = vrot.lane.b32.xlu0 %v280, 96
      %v414 = vpop.permute.xlu0 %413
      %415 = vrot.lane.b32.xlu0 %v282, 96
      %v416 = vpop.permute.xlu0 %415
      %417 = vrot.lane.b32.xlu0 %v284, 96
      %v418 = vpop.permute.xlu0 %417
      %419 = vrot.lane.b32.xlu0 %v286, 96
      %v420 = vpop.permute.xlu0 %419
      %421 = vrot.lane.b32.xlu0 %v288, 96
      %v422 = vpop.permute.xlu0 %421
      %423 = vrot.lane.b32.xlu0 %v290, 96
      %v424 = vpop.permute.xlu0 %423
      %425 = vrot.lane.b32.xlu0 %v292, 96
      %v426 = vpop.permute.xlu0 %425
      %v436 = vrot.slane %v292, 1
      %v437 = vrot.slane %v293, 1
      %v438 = vsel %vm312, %v436, %v437
      %v447 = vrot.slane %v292, 2
      %v448 = vrot.slane %v293, 2
      %v449 = vsel %vm361, %v447, %v448
      %450 = vrot.lane.b32.xlu0 %v367, 32
      %v451 = vpop.permute.xlu0 %450
      %452 = vrot.lane.b32.xlu0 %v370, 32
      %v453 = vpop.permute.xlu0 %452
      %454 = vrot.lane.b32.xlu0 %v373, 32
      %v455 = vpop.permute.xlu0 %454
      %456 = vrot.lane.b32.xlu0 %v376, 32
      %v457 = vpop.permute.xlu0 %456
      %458 = vrot.lane.b32.xlu0 %v379, 32
      %v459 = vpop.permute.xlu0 %458
      %460 = vrot.lane.b32.xlu0 %v382, 32
      %v461 = vpop.permute.xlu0 %460
      %462 = vrot.lane.b32.xlu0 %v385, 32
      %v463 = vpop.permute.xlu0 %462
      %464 = vrot.lane.b32.xlu0 %v449, 32
      %v465 = vpop.permute.xlu0 %464
      %475 = vrot.lane.b32.xlu0 %v280, 64
      %v476 = vpop.permute.xlu0 %475
      %477 = vrot.lane.b32.xlu0 %v282, 64
      %v478 = vpop.permute.xlu0 %477
      %479 = vrot.lane.b32.xlu0 %v284, 64
      %v480 = vpop.permute.xlu0 %479
      %481 = vrot.lane.b32.xlu0 %v286, 64
      %v482 = vpop.permute.xlu0 %481
      %483 = vrot.lane.b32.xlu0 %v288, 64
      %v484 = vpop.permute.xlu0 %483
      %485 = vrot.lane.b32.xlu0 %v290, 64
      %v486 = vpop.permute.xlu0 %485
      %487 = vrot.lane.b32.xlu0 %v292, 64
      %v488 = vpop.permute.xlu0 %487
      %489 = vrot.lane.b32.xlu0 %v294, 64
      %v490 = vpop.permute.xlu0 %489
      %v500 = vrot.slane %v294, 1
      %v501 = vrot.slane %v295, 1
      %v502 = vsel %vm312, %v500, %v501
      %503 = vrot.lane.b32.xlu0 %v321, 96
      %v504 = vpop.permute.xlu0 %503
      %505 = vrot.lane.b32.xlu0 %v324, 96
      %v506 = vpop.permute.xlu0 %505
      %507 = vrot.lane.b32.xlu0 %v327, 96
      %v508 = vpop.permute.xlu0 %507
      %509 = vrot.lane.b32.xlu0 %v330, 96
      %v510 = vpop.permute.xlu0 %509
      %511 = vrot.lane.b32.xlu0 %v333, 96
      %v512 = vpop.permute.xlu0 %511
      %513 = vrot.lane.b32.xlu0 %v336, 96
      %v514 = vpop.permute.xlu0 %513
      %515 = vrot.lane.b32.xlu0 %v438, 96
      %v516 = vpop.permute.xlu0 %515
      %517 = vrot.lane.b32.xlu0 %v502, 96
      %v518 = vpop.permute.xlu0 %517
      %v527 = vrot.slane %v294, 2
      %v528 = vrot.slane %v295, 2
      %v529 = vsel %vm361, %v527, %v528
      %v530 = vsel %vm245, %v276, %v338
      %v531 = vsel %vm245, %v278, %v340
      %v532 = vsel %vm245, %v280, %v342
      %v533 = vsel %vm245, %v282, %v344
      %v534 = vsel %vm245, %v284, %v346
      %v535 = vsel %vm245, %v286, %v348
      %v536 = vsel %vm245, %v288, %v350
      %v537 = vsel %vm245, %v290, %v352
      %vm538 = vcmask 523264
      %v539 = vsel %vm538, %v530, %v387
      %v540 = vsel %vm538, %v531, %v389
      %v541 = vsel %vm538, %v532, %v391
      %v542 = vsel %vm538, %v533, %v393
      %v543 = vsel %vm538, %v534, %v395
      %v544 = vsel %vm538, %v535, %v397
      %v545 = vsel %vm538, %v536, %v399
      %v546 = vsel %vm538, %v537, %v401
      %vm547 = vcmask 785408
      %v548 = vsel %vm547, %v539, %v412
      %v549 = vsel %vm547, %v540, %v414
      %v550 = vsel %vm547, %v541, %v416
      %v551 = vsel %vm547, %v542, %v418
      %v552 = vsel %vm547, %v543, %v420
      %v553 = vsel %vm547, %v544, %v422
      %v554 = vsel %vm547, %v545, %v424
      %v555 = vsel %vm547, %v546, %v426
      %v556 = vsel %vm245, %v318, %v451
      %v557 = vsel %vm245, %v321, %v453
      %v558 = vsel %vm245, %v324, %v455
      %v559 = vsel %vm245, %v327, %v457
      %v560 = vsel %vm245, %v330, %v459
      %v561 = vsel %vm245, %v333, %v461
      %v562 = vsel %vm245, %v336, %v463
      %v563 = vsel %vm245, %v438, %v465
      %v564 = vsel %vm538, %v556, %v476
      %v565 = vsel %vm538, %v557, %v478
      %v566 = vsel %vm538, %v558, %v480
      %v567 = vsel %vm538, %v559, %v482
      %v568 = vsel %vm538, %v560, %v484
      %v569 = vsel %vm538, %v561, %v486
      %v570 = vsel %vm538, %v562, %v488
      %v571 = vsel %vm538, %v563, %v490
      %v572 = vsel %vm547, %v564, %v504
      %v573 = vsel %vm547, %v565, %v506
      %v574 = vsel %vm547, %v566, %v508
      %v575 = vsel %vm547, %v567, %v510
      %v576 = vsel %vm547, %v568, %v512
      %v577 = vsel %vm547, %v569, %v514
      %v578 = vsel %vm547, %v570, %v516
      %v579 = vsel %vm547, %v571, %v518
      %v580 = vld [vmem:[%s1] sm:$0xff]
      %v581 = vld [vmem:[%s1 + $0x8] sm:$0xff]
      %v582 = vld [vmem:[%s1 + $0x10] sm:$0xff]
      %v583 = vld [vmem:[%s1 + $0x18] sm:$0xff]
      %v584 = vld [vmem:[%s1 + $0x20] sm:$0xff]
      %v585 = vld [vmem:[%s1 + $0x28] sm:$0xff]
      %v586 = vld [vmem:[%s1 + $0x30] sm:$0xff]
      %v587 = vld [vmem:[%s1 + $0x38] sm:$0xff]
      %v588 = vld [vmem:[%s1 + $0x40] sm:$0xff]
      %v589 = vld [vmem:[%s1 + $0x48] sm:$0xff]
      %v590 = vld [vmem:[%s1 + $0x50] sm:$0xff]
      %v591 = vld [vmem:[%s1 + $0x58] sm:$0xff]
      %v592 = vld [vmem:[%s1 + $0x60] sm:$0xff]
      %v593 = vld [vmem:[%s1 + $0x68] sm:$0xff]
      %v594 = vld [vmem:[%s1 + $0x70] sm:$0xff]
      %v595 = vld [vmem:[%s1 + $0x78] sm:$0xff]
      %v596 = vld [vmem:[%s1 + $0x80] sm:$0xff]
      %v597 = vld [vmem:[%s1 + $0x88] sm:$0xff]
      %v598 = vld [vmem:[%s1 + $0x90] sm:$0xff]
      %v599 = vld [vmem:[%s1 + $0x98] sm:$0xff]
      %v600 = vld [vmem:[%s1 + $0xa0] sm:$0xff]
      %v601 = vld [vmem:[%s1 + $0xa8] sm:$0xff]
      %v602 = vld [vmem:[%s1 + $0xb0] sm:$0xff]
      %v603 = vld [vmem:[%s1 + $0xb8] sm:$0xff]
      %v604 = vld [vmem:[%s1 + $0xc0] sm:$0xff]
      %v605 = vld [vmem:[%s1 + $0xc8] sm:$0xff]
      %v606 = vld [vmem:[%s1 + $0xd0] sm:$0xff]
      %v607 = vld [vmem:[%s1 + $0xd8] sm:$0xff]
      %v608 = vld [vmem:[%s1 + $0xe0] sm:$0xff]
      %v609 = vld [vmem:[%s1 + $0xe8] sm:$0xff]
      %v610 = vld [vmem:[%s1 + $0xf0] sm:$0xff]
      %v611 = vld [vmem:[%s1 + $0xf8] sm:$0xff]
      %v612 = vld [vmem:[%s1 + $0x100] sm:$0xff]
      %v613 = vld [vmem:[%s1 + $0x108] sm:$0xff]
      %v614 = vld [vmem:[%s1 + $0x110] sm:$0xff]
      %v615 = vld [vmem:[%s1 + $0x118] sm:$0xff]
      %v616 = vsel %vm245, %v370, 0
      %v618 = vsel %vm245, %v373, 0
      %v620 = vsel %vm245, %v376, 0
      %v622 = vsel %vm245, %v379, 0
      %v624 = vsel %vm245, %v382, 0
      %v626 = vsel %vm245, %v385, 0
      %v628 = vsel %vm245, %v449, 0
      %v630 = vsel %vm245, %v529, 0
      %632 = vmatpush.msra.mxu0 %v595
      %633 = vmatpush.msra.mxu0 %v594
      %634 = vmatpush.msra.mxu0 %v593
      %635 = vmatpush.msra.mxu0 %v592
      %636 = vmatpush.msra.mxu0 %v591
      %637 = vmatpush.msra.mxu0 %v590
      %638 = vmatpush.msra.mxu0 %v589
      %639 = vmatpush.msra.mxu0 %v588
      %640 = vmatpush.msra.mxu0 %v587
      %641 = vmatpush.msra.mxu0 %v586
      %642 = vmatpush.msra.mxu0 %v585
      %643 = vmatpush.msra.mxu0 %v584
      %644 = vmatpush.msra.mxu0 %v583
      %645 = vmatpush.msra.mxu0 %v582
      %646 = vmatpush.msra.mxu0 %v581
      %647 = vmatpush.msra.mxu0 %v580
      %648 = vmatmul.f32.gmra.mxu0 %v548
      %v649 = vpop.f32.mrf.mxu0
      %v650 = vadd.f32 0.0, %v649
      %651 = vmatmul.f32.gmra.mxu0 %v549
      %v652 = vpop.f32.mrf.mxu0
      %v653 = vadd.f32 0.0, %v652
      %654 = vmatmul.f32.gmra.mxu0 %v550
      %v655 = vpop.f32.mrf.mxu0
      %v656 = vadd.f32 0.0, %v655
      %657 = vmatmul.f32.gmra.mxu0 %v551
      %v658 = vpop.f32.mrf.mxu0
      %v659 = vadd.f32 0.0, %v658
      %660 = vmatmul.f32.gmra.mxu0 %v552
      %v661 = vpop.f32.mrf.mxu0
      %v662 = vadd.f32 0.0, %v661
      %663 = vmatmul.f32.gmra.mxu0 %v553
      %v664 = vpop.f32.mrf.mxu0
      %v665 = vadd.f32 0.0, %v664
      %666 = vmatmul.f32.gmra.mxu0 %v554
      %v667 = vpop.f32.mrf.mxu0
      %v668 = vadd.f32 0.0, %v667
      %669 = vmatmul.f32.gmra.mxu0 %v555
      %v670 = vpop.f32.mrf.mxu0
      %v671 = vadd.f32 0.0, %v670
      %672 = vdwg.mxu0
      %673 = vmatpush.msra.mxu0 %v611
      %674 = vmatpush.msra.mxu0 %v610
      %675 = vmatpush.msra.mxu0 %v609
      %676 = vmatpush.msra.mxu0 %v608
      %677 = vmatpush.msra.mxu0 %v607
      %678 = vmatpush.msra.mxu0 %v606
      %679 = vmatpush.msra.mxu0 %v605
      %680 = vmatpush.msra.mxu0 %v604
      %681 = vmatpush.msra.mxu0 %v603
      %682 = vmatpush.msra.mxu0 %v602
      %683 = vmatpush.msra.mxu0 %v601
      %684 = vmatpush.msra.mxu0 %v600
      %685 = vmatpush.msra.mxu0 %v599
      %686 = vmatpush.msra.mxu0 %v598
      %687 = vmatpush.msra.mxu0 %v597
      %688 = vmatpush.msra.mxu0 %v596
      %689 = vmatmul.f32.gmra.mxu0 %v572
      %v690 = vpop.f32.mrf.mxu0
      %v691 = vadd.f32 %v650, %v690
      %692 = vmatmul.f32.gmra.mxu0 %v573
      %v693 = vpop.f32.mrf.mxu0
      %v694 = vadd.f32 %v653, %v693
      %695 = vmatmul.f32.gmra.mxu0 %v574
      %v696 = vpop.f32.mrf.mxu0
      %v697 = vadd.f32 %v656, %v696
      %698 = vmatmul.f32.gmra.mxu0 %v575
      %v699 = vpop.f32.mrf.mxu0
      %v700 = vadd.f32 %v659, %v699
      %701 = vmatmul.f32.gmra.mxu0 %v576
      %v702 = vpop.f32.mrf.mxu0
      %v703 = vadd.f32 %v662, %v702
      %704 = vmatmul.f32.gmra.mxu0 %v577
      %v705 = vpop.f32.mrf.mxu0
      %v706 = vadd.f32 %v665, %v705
      %707 = vmatmul.f32.gmra.mxu0 %v578
      %v708 = vpop.f32.mrf.mxu0
      %v709 = vadd.f32 %v668, %v708
      %710 = vmatmul.f32.gmra.mxu0 %v579
      %v711 = vpop.f32.mrf.mxu0
      %v712 = vadd.f32 %v671, %v711
      %713 = vdwg.mxu0
      %714 = vmatpush.msra.mxu0 0.0
      %715 = vmatpush.msra.mxu0 0.0
      %716 = vmatpush.msra.mxu0 0.0
      %717 = vmatpush.msra.mxu0 0.0
      %718 = vmatpush.msra.mxu0 0.0
      %719 = vmatpush.msra.mxu0 0.0
      %720 = vmatpush.msra.mxu0 0.0
      %721 = vmatpush.msra.mxu0 0.0
      %722 = vmatpush.msra.mxu0 0.0
      %723 = vmatpush.msra.mxu0 0.0
      %724 = vmatpush.msra.mxu0 0.0
      %725 = vmatpush.msra.mxu0 0.0
      %726 = vmatpush.msra.mxu0 %v615
      %727 = vmatpush.msra.mxu0 %v614
      %728 = vmatpush.msra.mxu0 %v613
      %729 = vmatpush.msra.mxu0 %v612
      %730 = vmatmul.f32.gmra.mxu0 %v616
      %v731 = vpop.f32.mrf.mxu0
      %v732 = vadd.f32 %v691, %v731
      %733 = vmatmul.f32.gmra.mxu0 %v618
      %v734 = vpop.f32.mrf.mxu0
      %v735 = vadd.f32 %v694, %v734
      %736 = vmatmul.f32.gmra.mxu0 %v620
      %v737 = vpop.f32.mrf.mxu0
      %v738 = vadd.f32 %v697, %v737
      %739 = vmatmul.f32.gmra.mxu0 %v622
      %v740 = vpop.f32.mrf.mxu0
      %v741 = vadd.f32 %v700, %v740
      %742 = vmatmul.f32.gmra.mxu0 %v624
      %v743 = vpop.f32.mrf.mxu0
      %v744 = vadd.f32 %v703, %v743
      %745 = vmatmul.f32.gmra.mxu0 %v626
      %v746 = vpop.f32.mrf.mxu0
      %v747 = vadd.f32 %v706, %v746
      %748 = vmatmul.f32.gmra.mxu0 %v628
      %v749 = vpop.f32.mrf.mxu0
      %v750 = vadd.f32 %v709, %v749
      %751 = vmatmul.f32.gmra.mxu0 %v630
      %v752 = vpop.f32.mrf.mxu0
      %v753 = vadd.f32 %v712, %v752
      %754 = vdwg.mxu0
      %v755 = vsel %vm538, %v732, 0.0
      %v756 = vsel %vm538, %v735, 0.0
      %v757 = vadd.f32 %v755, %v756
      %v758 = vsel %vm538, %v738, 0.0
      %v759 = vadd.f32 %v757, %v758
      %v760 = vsel %vm538, %v741, 0.0
      %v761 = vadd.f32 %v759, %v760
      %v762 = vsel %vm538, %v744, 0.0
      %v763 = vadd.f32 %v761, %v762
      %v764 = vsel %vm538, %v747, 0.0
      %v765 = vadd.f32 %v763, %v764
      %v766 = vsel %vm538, %v750, 0.0
      %v767 = vadd.f32 %v765, %v766
      %v768 = vsel %vm538, %v753, 0.0
      %v769 = vadd.f32 %v767, %v768
      %v770 = vrot.slane %v769, 4
      %v771 = vadd.f32 %v769, %v770
      %v772 = vrot.slane %v771, 2
      %v773 = vadd.f32 %v771, %v772
      %v774 = vrot.slane %v773, 1
      %v775 = vadd.f32 %v773, %v774
      %v776 = vmul.f32 %v732, %v732
      %v777 = vmul.f32 %v735, %v735
      %v778 = vmul.f32 %v738, %v738
      %v779 = vmul.f32 %v741, %v741
      %v780 = vmul.f32 %v744, %v744
      %v781 = vmul.f32 %v747, %v747
      %v782 = vmul.f32 %v750, %v750
      %v783 = vmul.f32 %v753, %v753
      %v784 = vsel %vm538, %v776, 0.0
      %v785 = vsel %vm538, %v777, 0.0
      %v786 = vadd.f32 %v784, %v785
      %v787 = vsel %vm538, %v778, 0.0
      %v788 = vadd.f32 %v786, %v787
      %v789 = vsel %vm538, %v779, 0.0
      %v790 = vadd.f32 %v788, %v789
      %v791 = vsel %vm538, %v780, 0.0
      %v792 = vadd.f32 %v790, %v791
      %v793 = vsel %vm538, %v781, 0.0
      %v794 = vadd.f32 %v792, %v793
      %v795 = vsel %vm538, %v782, 0.0
      %v796 = vadd.f32 %v794, %v795
      %v797 = vsel %vm538, %v783, 0.0
      %v798 = vadd.f32 %v796, %v797
      %v799 = vrot.slane %v798, 4
      %v800 = vadd.f32 %v798, %v799
      %v801 = vrot.slane %v800, 2
      %v802 = vadd.f32 %v800, %v801
      %v803 = vrot.slane %v802, 1
      %v804 = vadd.f32 %v802, %v803
      %vm805 = vcmask 1040384
      %v806 = vsel %vm805, %v775, %v804
      %vm807 = vcmask 517120
      %808 = vst.msk [vmem:[%s208] sm:$0x3] %vm807, %v806
      %809 = vst.msk [vmem:[%s204] sm:$0xff] %vm538, %v732
      %810 = vst.msk [vmem:[%s204 + $0x8] sm:$0xff] %vm538, %v735
      %811 = vst.msk [vmem:[%s204 + $0x10] sm:$0xff] %vm538, %v738
      %812 = vst.msk [vmem:[%s204 + $0x18] sm:$0xff] %vm538, %v741
      %813 = vst.msk [vmem:[%s204 + $0x20] sm:$0xff] %vm538, %v744
      %814 = vst.msk [vmem:[%s204 + $0x28] sm:$0xff] %vm538, %v747
      %815 = vst.msk [vmem:[%s204 + $0x30] sm:$0xff] %vm538, %v750
      %816 = vst.msk [vmem:[%s204 + $0x38] sm:$0xff] %vm538, %v753
      %p817 = scmp.lt.s32.totalorder %s16, 1
      %s818 = scalar_select %p817, %s16, 1
      %s819 = smul.addr %s818, 8
      %s820 = smul.addr %s819, 8
      %s821 = scalar_lea.vmem %s3, %s820
      %p822 = scmp.lt.s32.totalorder %s16, 1
      %s823 = scalar_select %p822, %s16, 1
      %s824 = smul.addr %s823, 2
      %s825 = scalar_lea.vmem %s4, %s824
      // Predicated region
      $region33: #{head_layer_c.6} parent=31 // pred_check
        %p826 = pneg %p102
      $region34: #{head_layer_c.6} parent=31 // pred_check_branch
        %828 = sbr.rel (%p826) target = $region36
      $region35: #{head_layer_c.6} parent=31 // pred_region
        _
      $region36: #{head_layer_c.6} parent=31 // pred_fallthru
        _
      // Predicated region
      $region37: #{head_layer_c.6} parent=31 // pred_check
        %p829 = pneg %p128
      $region38: #{head_layer_c.6} parent=31 // pred_check_branch
        %831 = sbr.rel (%p829) target = $region40
      $region39: #{head_layer_c.6} parent=31 // pred_region
        _
      $region40: #{head_layer_c.6} parent=31 // pred_fallthru
        _
    $region32: #{head_layer_c.6} parent=5 // pred_fallthru
      _
    %p832 = scmp.le.s32.totalorder 2, %s11
    // Predicated region
    $region41: #{head_layer_c.6} parent=5 // pred_check
      %p833 = pneg %p832
    $region42: #{head_layer_c.6} parent=5 // pred_check_branch
      %835 = sbr.rel (%p833) target = $region44
    $region43: #{head_layer_c.6} parent=5 // pred_region
      %s836 = ssub.s32 %s11, 2
      // Predicated region
      $region45: #{head_layer_c.6} parent=43 // pred_check
        %p837 = pneg %p108
      $region46: #{head_layer_c.6} parent=43 // pred_check_branch
        %839 = sbr.rel (%p837) target = $region48
      $region47: #{head_layer_c.6} parent=43 // pred_region
        %p840 = scmp.lt.s32.totalorder %s17, 1
        %s841 = scalar_select %p840, %s17, 1
        %s842 = smul.addr %s841, 8
        %s843 = smul.addr %s842, 8
        %s844 = scalar_lea.vmem %s3, %s843
      $region48: #{head_layer_c.6} parent=43 // pred_fallthru
        _
      // Predicated region
      $region49: #{head_layer_c.6} parent=43 // pred_check
        %p845 = pneg %p134
      $region50: #{head_layer_c.6} parent=43 // pred_check_branch
        %847 = sbr.rel (%p845) target = $region52
      $region51: #{head_layer_c.6} parent=43 // pred_region
        %p848 = scmp.lt.s32.totalorder %s17, 1
        %s849 = scalar_select %p848, %s17, 1
        %s850 = smul.addr %s849, 2
        %s851 = scalar_lea.vmem %s4, %s850
      $region52: #{head_layer_c.6} parent=43 // pred_fallthru
        _
    $region44: #{head_layer_c.6} parent=5 // pred_fallthru
      _
  $region6: #{head_layer_c.6} parent=0 // loop_footer
    %s15 = sadd.s32 1, %s11
  $region7: #{head_layer_c.6} parent=0 // loop_footer_branch
    %10 = sbr.rel target = $region3
  $region8: #{head_layer_c.6} parent=0 // loop_exit
    _

// kernel: head_layer_c.7
$region0: #{head_layer_c.7}
  #allocation0 [shape = 'u32[]', space=smem, size = 0x4, offset = 0x4, fixed_abs, tag = 'smem constant byte address 0x4 - core index']
  #allocation1 [shape = 'u32[72,128]{1,0:T(1,128)}', space=vmem, size = 0x9000, scoped, tag = 'internal scratch']
  #allocation2 [shape = 'f32[10,10,64]{2,1,0:T(8,128)}', space=vmem, size = 0x14000, scoped, tag = 'scratch operand']
  %s0 = inlined_call_operand.vmem [shape: f32[2,8,8,64], index: 0, kind: input, shape index: {}]
  %s1 = inlined_call_operand.vmem [shape: f32[2,64], index: 1, kind: input, shape index: {}]
  %s2 = inlined_call_operand.hbm [shape: f32[2,4,4,64], index: 2, kind: output, shape index: {}]
  %s3 = sld [smem:[#allocation0]]
  $region41: #{head_layer_c.7} parent=0
    _
  %s5 = ssub.s32 1, %s3
  %s6 = scalar_select 0, %s5, %s3
  $region1: #{head_layer_c.7} parent=0
    #allocation3 [shape = 'u8[16384]{0}', space=vmem, size = 0x4000, scoped, tag = 'output window, operand 0']
    #allocation4 [shape = 's32[2]{0}', space=sflag, size = 0x8, scoped, tag = 'scoped memory for head_layer_c.7']
    %7 = vsyncpa [#allocation4], 0
    %s8 = scalar_lea.sflag [#allocation4], 1
    %9 = vsyncpa %s8, 0
    loop: start=0, step=1, limit=4
    $region2: #{head_layer_c.7} parent=1 // loop_pre_header
      _
    $region3: #{head_layer_c.7} parent=1 // loop_header
      %s11 = sphi 0, %s15
      %p12 = scmp.ge.s32.totalorder %s11, 4
      %s21 = sphi 0, %s23
      %s24 = sphi 0, %s21
      %s25 = sphi 0, %s24
      %s41 = sphi 0, %s25
      %s45 = sphi 0, %s45
      %s47 = sphi 0, %s45
      %s48 = sphi 0, %s47
      %s62 = sphi 0, %s48
      %s68 = sphi 0, %s70
      %s71 = sphi 0, %s68
      %s72 = sphi 0, %s71
      %s88 = sphi 0, %s72
    $region4: #{head_layer_c.7} parent=1 // loop_header_branch
      %14 = sbr.rel (%p12) target = $region8
    $region5: #{head_layer_c.7} parent=1 // loop_body
      %s16 = ssub.s32 %s11, 1
      %s17 = ssub.s32 %s11, 2
      %s18 = sadd.s32 %s11, 1
      %s19 = ssub.s32 %s11, %s18
      %p20 = scmp.eq.s32.totalorder %s19, 0
      %s22 = sadd.s32 %s21, 1
      %s23 = scalar_select %p20, %s21, %s22
      %p26 = pneg %p20
      %p27 = scmp.eq.s32.totalorder %s11, 1
      %p28 = por %p26, %p27
      %p29 = scmp.ne.s32.totalorder %s21, %s24
      %p30 = scmp.eq.s32.totalorder %s11, 0
      %p31 = por %p29, %p30
      %p32 = scmp.ne.s32.totalorder %s21, %s24
      %p33 = scmp.eq.s32.totalorder %s16, 1
      %p34 = por %p32, %p33
      %p35 = scmp.ne.s32.totalorder %s24, %s25
      %p36 = scmp.eq.s32.totalorder %s16, 0
      %p37 = por %p35, %p36
      %p38 = scmp.ne.s32.totalorder %s24, %s25
      %p39 = scmp.eq.s32.totalorder %s17, 1
      %p40 = por %p38, %p39
      %p42 = scmp.ne.s32.totalorder %s25, %s41
      %p43 = scmp.eq.s32.totalorder %s17, 0
      %p44 = por %p42, %p43
      %s46 = sadd.s32 %s45, 1
      %p49 = scmp.eq.s32.totalorder %s11, 1
      %p50 = scmp.ne.s32.totalorder %s45, %s47
      %p51 = scmp.eq.s32.totalorder %s11, 0
      %p52 = por %p50, %p51
      %p53 = scmp.ne.s32.totalorder %s45, %s47
      %p54 = scmp.eq.s32.totalorder %s16, 1
      %p55 = por %p53, %p54
      %p56 = scmp.ne.s32.totalorder %s47, %s48
      %p57 = scmp.eq.s32.totalorder %s16, 0
      %p58 = por %p56, %p57
      %p59 = scmp.ne.s32.totalorder %s47, %s48
      %p60 = scmp.eq.s32.totalorder %s17, 1
      %p61 = por %p59, %p60
      %p63 = scmp.ne.s32.totalorder %s48, %s62
      %p64 = scmp.eq.s32.totalorder %s17, 0
      %p65 = por %p63, %p64
      %s66 = ssub.s32 %s11, %s18
      %p67 = scmp.eq.s32.totalorder %s66, 0
      %s69 = sadd.s32 %s68, 1
      %s70 = scalar_select %p67, %s68, %s69
      %p73 = pneg %p67
      %p74 = scmp.eq.s32.totalorder %s11, 1
      %p75 = por %p73, %p74
      %p76 = scmp.ne.s32.totalorder %s68, %s71
      %p77 = scmp.eq.s32.totalorder %s11, 0
      %p78 = por %p76, %p77
      %p79 = scmp.ne.s32.totalorder %s68, %s71
      %p80 = scmp.eq.s32.totalorder %s16, 1
      %p81 = por %p79, %p80
      %p82 = scmp.ne.s32.totalorder %s71, %s72
      %p83 = scmp.eq.s32.totalorder %s16, 0
      %p84 = por %p82, %p83
      %p85 = scmp.ne.s32.totalorder %s71, %s72
      %p86 = scmp.eq.s32.totalorder %s17, 1
      %p87 = por %p85, %p86
      %p89 = scmp.ne.s32.totalorder %s72, %s88
      %p90 = scmp.eq.s32.totalorder %s17, 0
      %p91 = por %p89, %p90
      %p92 = scmp.le.s32.totalorder 1, %s11
      %p93 = scmp.lt.s32.totalorder %s11, 3
      %p94 = pnand %p92, %p93
      %p95 = pneg %p94
      // Predicated region
      $region9: #{head_layer_c.7} parent=5 // pred_check
        _
      $region10: #{head_layer_c.7} parent=5 // pred_check_branch
        %97 = sbr.rel (%p94) target = $region12
      $region11: #{head_layer_c.7} parent=5 // pred_region
        %s98 = ssub.s32 %s11, 1
        // Predicated region
        $region13: #{head_layer_c.7} parent=11 // pred_check
          %p99 = pneg %p58
        $region14: #{head_layer_c.7} parent=11 // pred_check_branch
          %101 = sbr.rel (%p99) target = $region16
        $region15: #{head_layer_c.7} parent=11 // pred_region
          _
        $region16: #{head_layer_c.7} parent=11 // pred_fallthru
          _
      $region12: #{head_layer_c.7} parent=5 // pred_fallthru
        _
      %p102 = scmp.lt.s32.totalorder %s11, 2
      // Predicated region
      $region17: #{head_layer_c.7} parent=5 // pred_check
        %p103 = pneg %p102
      $region18: #{head_layer_c.7} parent=5 // pred_check_branch
        %105 = sbr.rel (%p103) target = $region20
      $region19: #{head_layer_c.7} parent=5 // pred_region
        // Predicated region
        $region21: #{head_layer_c.7} parent=19 // pred_check
          %p106 = pneg %p31
        $region22: #{head_layer_c.7} parent=19 // pred_check_branch
          %108 = sbr.rel (%p106) target = $region24
        $region23: #{head_layer_c.7} parent=19 // pred_region
          %p109 = scmp.lt.s32.totalorder %s11, 1
          %s110 = scalar_select %p109, %s11, 1
          %s111 = smul.addr %s110, 8
          %s112 = smul.addr %s111, 8
          %s113 = scalar_lea.vmem %s0, %s112
        $region24: #{head_layer_c.7} parent=19 // pred_fallthru
          _
      $region20: #{head_layer_c.7} parent=5 // pred_fallthru
        _
      %p114 = scmp.le.s32.totalorder 1, %s11
      %p115 = scmp.lt.s32.totalorder %s11, 3
      %p116 = pnand %p114, %p115
      %p117 = pneg %p116
      // Predicated region
      $region25: #{head_layer_c.7} parent=5 // pred_check
        _
      $region26: #{head_layer_c.7} parent=5 // pred_check_branch
        %119 = sbr.rel (%p116) target = $region28
      $region27: #{head_layer_c.7} parent=5 // pred_region
        %s120 = ssub.s32 %s11, 1
        %p121 = scmp.lt.s32.totalorder %s16, 1
        %s122 = scalar_select %p121, %s16, 1
        %s123 = smul.addr %s122, 8
        %s124 = smul.addr %s123, 8
        %s125 = scalar_lea.vmem %s0, %s124
        %p126 = pneg %p37
        %p127 = pneg %p34
        %p128 = pneg %p58
        %p129 = pneg %p55
        %p130 = pneg %p84
        %p131 = pneg %p81
        %s132 = sand.u32 %s71, 1
        %s133 = scalar_lea.sflag [#allocation4], %s132
        %s134 = sand.u32 %s71, 1
        %s135 = smul.addr %s134, 16
        %s136 = scalar_lea.vmem [#allocation3], %s135
        %p137 = scmp.lt.s32.totalorder %s16, 1
        %s138 = scalar_select %p137, %s16, 1
        %s139 = smul.addr %s138, 8
        %s140 = smul.addr %s139, 8
        %s141 = scalar_lea.vmem %s0, %s140
        %v142 = vld [vmem:[%s1] sm:$0x1]
        %v143 = vld [vmem:[%s1 + $0x1] sm:$0x1]
        %v144 = vld [vmem:[%s141] sm:$0xff]
        %v145 = vld [vmem:[%s141 + $0x8] sm:$0xff]
        %v146 = vld [vmem:[%s141 + $0x10] sm:$0xff]
        %v147 = vld [vmem:[%s141 + $0x18] sm:$0xff]
        %v148 = vld [vmem:[%s141 + $0x20] sm:$0xff]
        %v149 = vld [vmem:[%s141 + $0x28] sm:$0xff]
        %v150 = vld [vmem:[%s141 + $0x30] sm:$0xff]
        %v151 = vld [vmem:[%s141 + $0x38] sm:$0xff]
        %v152 = vperm.slane %v142, 0
        %v153 = vmul.f32 %v144, %v152
        %v154 = vmul.f32 %v145, %v152
        %v155 = vmul.f32 %v146, %v152
        %v156 = vmul.f32 %v147, %v152
        %v157 = vmul.f32 %v148, %v152
        %v158 = vmul.f32 %v149, %v152
        %v159 = vmul.f32 %v150, %v152
        %v160 = vmul.f32 %v151, %v152
        %v161 = vperm.slane %v143, 0
        %v162 = vadd.f32 %v153, %v161
        %v163 = vadd.f32 %v154, %v161
        %v164 = vadd.f32 %v155, %v161
        %v165 = vadd.f32 %v156, %v161
        %v166 = vadd.f32 %v157, %v161
        %v167 = vadd.f32 %v158, %v161
        %v168 = vadd.f32 %v159, %v161
        %v169 = vadd.f32 %v160, %v161
        %v170 = vmax.f32 %v162, 0.0
        %v171 = vmax.f32 %v163, 0.0
        %v172 = vmax.f32 %v164, 0.0
        %v173 = vmax.f32 %v165, 0.0
        %v174 = vmax.f32 %v166, 0.0
        %v175 = vmax.f32 %v167, 0.0
        %v176 = vmax.f32 %v168, 0.0
        %v177 = vmax.f32 %v169, 0.0
        %vm178 = vcmask 523264
        %179 = vst.msk [vmem:[#allocation2] sm:$0xff] %vm178, 0.0
        %vm180 = vcmask 517120
        %181 = vst.msk [vmem:[#allocation2 + $0x8] sm:$0x3] %vm180, 0.0
        %182 = vst.msk [vmem:[#allocation2 + $0x10] sm:$0xff] %vm178, 0.0
        %183 = vst.msk [vmem:[#allocation2 + $0x18] sm:$0x3] %vm180, 0.0
        %184 = vst.msk [vmem:[#allocation2 + $0x20] sm:$0xff] %vm178, 0.0
        %185 = vst.msk [vmem:[#allocation2 + $0x28] sm:$0x3] %vm180, 0.0
        %186 = vst.msk [vmem:[#allocation2 + $0x30] sm:$0xff] %vm178, 0.0
        %187 = vst.msk [vmem:[#allocation2 + $0x38] sm:$0x3] %vm180, 0.0
        %188 = vst.msk [vmem:[#allocation2 + $0x40] sm:$0xff] %vm178, 0.0
        %189 = vst.msk [vmem:[#allocation2 + $0x48] sm:$0x3] %vm180, 0.0
        %190 = vst.msk [vmem:[#allocation2 + $0x50] sm:$0xff] %vm178, 0.0
        %191 = vst.msk [vmem:[#allocation2 + $0x58] sm:$0x3] %vm180, 0.0
        %192 = vst.msk [vmem:[#allocation2 + $0x60] sm:$0xff] %vm178, 0.0
        %193 = vst.msk [vmem:[#allocation2 + $0x68] sm:$0x3] %vm180, 0.0
        %194 = vst.msk [vmem:[#allocation2 + $0x70] sm:$0xff] %vm178, 0.0
        %195 = vst.msk [vmem:[#allocation2 + $0x78] sm:$0x3] %vm180, 0.0
        %196 = vst.msk [vmem:[#allocation2 + $0x80] sm:$0xff] %vm178, 0.0
        %197 = vst.msk [vmem:[#allocation2 + $0x88] sm:$0x3] %vm180, 0.0
        %198 = vst.msk [vmem:[#allocation2 + $0x90] sm:$0xff] %vm178, 0.0
        %199 = vst.msk [vmem:[#allocation2 + $0x98] sm:$0x3] %vm180, 0.0
        %s200 = scalar_lea.vmem [#allocation2], 16
        %201 = vst.msk [vmem:[%s200 + $0x1] sm:$0xff] %vm178, %v170
        %202 = vst.msk [vmem:[%s200 + $0x11] sm:$0xff] %vm178, %v171
        %203 = vst.msk [vmem:[%s200 + $0x21] sm:$0xff] %vm178, %v172
        %204 = vst.msk [vmem:[%s200 + $0x31] sm:$0xff] %vm178, %v173
        %205 = vst.msk [vmem:[%s200 + $0x41] sm:$0xff] %vm178, %v174
        %206 = vst.msk [vmem:[%s200 + $0x51] sm:$0xff] %vm178, %v175
        %207 = vst.msk [vmem:[%s200 + $0x61] sm:$0xff] %vm178, %v176
        %208 = vst.msk [vmem:[%s200 + $0x71] sm:$0xff] %vm178, %v177
        %v209 = vld [vmem:[#allocation2] sm:$0xff]
        %v210 = vld [vmem:[#allocation2 + $0x8] sm:$0x3]
        %v211 = vld [vmem:[#allocation2 + $0x10] sm:$0xff]
        %v212 = vld [vmem:[#allocation2 + $0x18] sm:$0x3]
        %v213 = vld [vmem:[#allocation2 + $0x20] sm:$0xff]
        %v214 = vld [vmem:[#allocation2 + $0x28] sm:$0x3]
        %v215 = vld [vmem:[#allocation2 + $0x30] sm:$0xff]
        %v216 = vld [vmem:[#allocation2 + $0x38] sm:$0x3]
        %v217 = vld [vmem:[#allocation2 + $0x40] sm:$0xff]
        %v218 = vld [vmem:[#allocation2 + $0x48] sm:$0x3]
        %v219 = vld [vmem:[#allocation2 + $0x50] sm:$0xff]
        %v220 = vld [vmem:[#allocation2 + $0x58] sm:$0x3]
        %v221 = vld [vmem:[#allocation2 + $0x60] sm:$0xff]
        %v222 = vld [vmem:[#allocation2 + $0x68] sm:$0x3]
        %v223 = vld [vmem:[#allocation2 + $0x70] sm:$0xff]
        %v224 = vld [vmem:[#allocation2 + $0x78] sm:$0x3]
        %v225 = vld [vmem:[#allocation2 + $0x80] sm:$0xff]
        %v226 = vld [vmem:[#allocation2 + $0x88] sm:$0x3]
        %v236 = vrot.slane %v209, 2
        %v237 = vrot.slane %v209, 4
        %v238 = vrot.slane %v209, 6
        %v239 = vrot.slane %v211, 2
        %v240 = vrot.slane %v211, 4
        %v241 = vrot.slane %v211, 6
        %v242 = vrot.slane %v213, 2
        %v243 = vrot.slane %v213, 4
        %v244 = vrot.slane %v213, 6
        %v245 = vrot.slane %v215, 2
        %v246 = vrot.slane %v215, 4
        %v247 = vrot.slane %v215, 6
        %v248 = vrot.slane %v217, 2
        %v249 = vrot.slane %v217, 4
        %v250 = vrot.slane %v217, 6
        %v251 = vrot.slane %v219, 2
        %v252 = vrot.slane %v219, 4
        %v253 = vrot.slane %v219, 6
        %v254 = vrot.slane %v221, 2
        %v255 = vrot.slane %v221, 4
        %v256 = vrot.slane %v221, 6
        %v257 = vrot.slane %v223, 2
        %v258 = vrot.slane %v223, 4
        %v259 = vrot.slane %v223, 6
        %v260 = vrot.slane %v225, 2
        %v261 = vrot.slane %v225, 4
        %v262 = vrot.slane %v225, 6
        %v290 = vrot.slane %v209, 7
        %v291 = vrot.slane %v290, 2
        %v292 = vrot.slane %v236, 7
        %v293 = vrot.slane %v292, 2
        %v294 = vrot.slane %v237, 7
        %v295 = vrot.slane %v294, 2
        %v296 = vrot.slane %v238, 7
        %v297 = vrot.slane %v296, 2
        %v298 = vrot.slane %v211, 7
        %v299 = vrot.slane %v298, 2
        %v300 = vrot.slane %v239, 7
        %v301 = vrot.slane %v300, 2
        %v302 = vrot.slane %v240, 7
        %v303 = vrot.slane %v302, 2
        %v304 = vrot.slane %v241, 7
        %v305 = vrot.slane %v304, 2
        %v306 = vrot.slane %v213, 7
        %v307 = vrot.slane %v306, 2
        %v308 = vrot.slane %v242, 7
        %v309 = vrot.slane %v308, 2
        %v310 = vrot.slane %v243, 7
        %v311 = vrot.slane %v310, 2
        %v312 = vrot.slane %v244, 7
        %v313 = vrot.slane %v312, 2
        %v314 = vrot.slane %v215, 7
        %v315 = vrot.slane %v314, 2
        %v316 = vrot.slane %v245, 7
        %v317 = vrot.slane %v316, 2
        %v318 = vrot.slane %v246, 7
        %v319 = vrot.slane %v318, 2
        %v320 = vrot.slane %v247, 7
        %v321 = vrot.slane %v320, 2
        %v322 = vrot.slane %v217, 7
        %v323 = vrot.slane %v322, 2
        %v324 = vrot.slane %v248, 7
        %v325 = vrot.slane %v324, 2
        %v326 = vrot.slane %v249, 7
        %v327 = vrot.slane %v326, 2
        %v328 = vrot.slane %v250, 7
        %v329 = vrot.slane %v328, 2
        %v330 = vrot.slane %v219, 7
        %v331 = vrot.slane %v330, 2
        %v332 = vrot.slane %v251, 7
        %v333 = vrot.slane %v332, 2
        %v334 = vrot.slane %v252, 7
        %v335 = vrot.slane %v334, 2
        %v336 = vrot.slane %v253, 7
        %v337 = vrot.slane %v336, 2
        %v338 = vrot.slane %v221, 7
        %v339 = vrot.slane %v338, 2
        %v340 = vrot.slane %v254, 7
        %v341 = vrot.slane %v340, 2
        %v342 = vrot.slane %v255, 7
        %v343 = vrot.slane %v342, 2
        %v344 = vrot.slane %v256, 7
        %v345 = vrot.slane %v344, 2
        %v346 = vrot.slane %v223, 7
        %v347 = vrot.slane %v346, 2
        %v348 = vrot.slane %v257, 7
        %v349 = vrot.slane %v348, 2
        %v350 = vrot.slane %v258, 7
        %v351 = vrot.slane %v350, 2
        %v352 = vrot.slane %v259, 7
        %v353 = vrot.slane %v352, 2
        %v354 = vrot.slane %v225, 7
        %v355 = vrot.slane %v354, 2
        %v356 = vrot.slane %v260, 7
        %v357 = vrot.slane %v356, 2
        %v358 = vrot.slane %v261, 7
        %v359 = vrot.slane %v358, 2
        %v360 = vrot.slane %v262, 7
        %v361 = vrot.slane %v360, 2
        %v398 = vmax.f32 %v209, %v291
        %v399 = vmax.f32 %v236, %v293
        %v400 = vmax.f32 %v237, %v295
        %v401 = vmax.f32 %v238, %v297
        %v402 = vmax.f32 %v211, %v299
        %v403 = vmax.f32 %v239, %v301
        %v404 = vmax.f32 %v240, %v303
        %v405 = vmax.f32 %v241, %v305
        %v406 = vmax.f32 %v213, %v307
        %v407 = vmax.f32 %v242, %v309
        %v408 = vmax.f32 %v243, %v311
        %v409 = vmax.f32 %v244, %v313
        %v410 = vmax.f32 %v215, %v315
        %v411 = vmax.f32 %v245, %v317
        %v412 = vmax.f32 %v246, %v319
        %v413 = vmax.f32 %v247, %v321
        %v414 = vmax.f32 %v217, %v323
        %v415 = vmax.f32 %v248, %v325
        %v416 = vmax.f32 %v249, %v327
        %v417 = vmax.f32 %v250, %v329
        %v418 = vmax.f32 %v219, %v331
        %v419 = vmax.f32 %v251, %v333
        %v420 = vmax.f32 %v252, %v335
        %v421 = vmax.f32 %v253, %v337
        %v422 = vmax.f32 %v221, %v339
        %v423 = vmax.f32 %v254, %v341
        %v424 = vmax.f32 %v255, %v343
        %v425 = vmax.f32 %v256, %v345
        %v426 = vmax.f32 %v223, %v347
        %v427 = vmax.f32 %v257, %v349
        %v428 = vmax.f32 %v258, %v351
        %v429 = vmax.f32 %v259, %v353
        %v430 = vmax.f32 %v225, %v355
        %v431 = vmax.f32 %v260, %v357
        %v432 = vmax.f32 %v261, %v359
        %v433 = vmax.f32 %v262, %v361
        %v434 = vmax.f32 %v398, %v236
        %v435 = vmax.f32 %v399, %v237
        %v436 = vmax.f32 %v400, %v238
        %v437 = vmax.f32 %v401, %v210
        %v438 = vmax.f32 %v402, %v239
        %v439 = vmax.f32 %v403, %v240
        %v440 = vmax.f32 %v404, %v241
        %v441 = vmax.f32 %v405, %v212
        %v442 = vmax.f32 %v406, %v242
        %v443 = vmax.f32 %v407, %v243
        %v444 = vmax.f32 %v408, %v244
        %v445 = vmax.f32 %v409, %v214
        %v446 = vmax.f32 %v410, %v245
        %v447 = vmax.f32 %v411, %v246
        %v448 = vmax.f32 %v412, %v247
        %v449 = vmax.f32 %v413, %v216
        %v450 = vmax.f32 %v414, %v248
        %v451 = vmax.f32 %v415, %v249
        %v452 = vmax.f32 %v416, %v250
        %v453 = vmax.f32 %v417, %v218
        %v454 = vmax.f32 %v418, %v251
        %v455 = vmax.f32 %v419, %v252
        %v456 = vmax.f32 %v420, %v253
        %v457 = vmax.f32 %v421, %v220
        %v458 = vmax.f32 %v422, %v254
        %v459 = vmax.f32 %v423, %v255
        %v460 = vmax.f32 %v424, %v256
        %v461 = vmax.f32 %v425, %v222
        %v462 = vmax.f32 %v426, %v257
        %v463 = vmax.f32 %v427, %v258
        %v464 = vmax.f32 %v428, %v259
        %v465 = vmax.f32 %v429, %v224
        %v466 = vmax.f32 %v430, %v260
        %v467 = vmax.f32 %v431, %v261
        %v468 = vmax.f32 %v432, %v262
        %v469 = vmax.f32 %v433, %v226
        %v470 = vmax.f32 %v434, %v438
        %v471 = vmax.f32 %v435, %v439
        %v472 = vmax.f32 %v436, %v440
        %v473 = vmax.f32 %v437, %v441
        %v474 = vmax.f32 %v442, %v446
        %v475 = vmax.f32 %v443, %v447
        %v476 = vmax.f32 %v444, %v448
        %v477 = vmax.f32 %v445, %v449
        %v478 = vmax.f32 %v450, %v454
        %v479 = vmax.f32 %v451, %v455
        %v480 = vmax.f32 %v452, %v456
        %v481 = vmax.f32 %v453, %v457
        %v482 = vmax.f32 %v458, %v462
        %v483 = vmax.f32 %v459, %v463
        %v484 = vmax.f32 %v460, %v464
        %v485 = vmax.f32 %v461, %v465
        %v486 = vmax.f32 %v470, %v442
        %v487 = vmax.f32 %v471, %v443
        %v488 = vmax.f32 %v472, %v444
        %v489 = vmax.f32 %v473, %v445
        %v490 = vmax.f32 %v474, %v450
        %v491 = vmax.f32 %v475, %v451
        %v492 = vmax.f32 %v476, %v452
        %v493 = vmax.f32 %v477, %v453
        %v494 = vmax.f32 %v478, %v458
        %v495 = vmax.f32 %v479, %v459
        %v496 = vmax.f32 %v480, %v460
        %v497 = vmax.f32 %v481, %v461
        %v498 = vmax.f32 %v482, %v466
        %v499 = vmax.f32 %v483, %v467
        %v500 = vmax.f32 %v484, %v468
        %v501 = vmax.f32 %v485, %v469
        %v518 = vperm.slane %v486, 0
        %v519 = vperm.slane %v487, 0
        %v520 = vperm.slane %v488, 0
        %v521 = vperm.slane %v489, 0
        %v522 = vperm.slane %v490, 0
        %v523 = vperm.slane %v491, 0
        %v524 = vperm.slane %v492, 0
        %v525 = vperm.slane %v493, 0
        %v526 = vperm.slane %v494, 0
        %v527 = vperm.slane %v495, 0
        %v528 = vperm.slane %v496, 0
        %v529 = vperm.slane %v497, 0
        %v530 = vperm.slane %v498, 0
        %v531 = vperm.slane %v499, 0
        %v532 = vperm.slane %v500, 0
        %v533 = vperm.slane %v501, 0
        %vm534 = vcmask 1041409
        %v535 = vsel %vm534, %v519, %v518
        %vm536 = vcmask 1042434
        %v537 = vsel %vm536, %v520, %v535
        %vm538 = vcmask 1043459
        %v539 = vsel %vm538, %v521, %v537
        %v540 = vsel %vm534, %v523, %v522
        %v541 = vsel %vm536, %v524, %v540
        %v542 = vsel %vm538, %v525, %v541
        %v543 = vsel %vm534, %v527, %v526
        %v544 = vsel %vm536, %v528, %v543
        %v545 = vsel %vm538, %v529, %v544
        %v546 = vsel %vm534, %v531, %v530
        %v547 = vsel %vm536, %v532, %v546
        %v548 = vsel %vm538, %v533, %v547
        %vm553 = vcmask 519168
        %554 = vst.msk [vmem:[%s136] sm:$0xf] %vm553, %v539
        %555 = vst.msk [vmem:[%s136 + $0x4] sm:$0xf] %vm553, %v542
        %556 = vst.msk [vmem:[%s136 + $0x8] sm:$0xf] %vm553, %v545
        %557 = vst.msk [vmem:[%s136 + $0xc] sm:$0xf] %vm553, %v548
        %s558 = sand.u32 %s71, 1
        %s559 = scalar_lea.sflag [#allocation4], %s558
        %s560 = sand.u32 %s71, 1
        %s561 = smul.addr %s560, 16
        %s562 = scalar_lea.vmem [#allocation3], %s561
        // Predicated region
        $region29: #{head_layer_c.7} parent=27 // pred_check
          %p563 = pneg %p81
        $region30: #{head_layer_c.7} parent=27 // pred_check_branch
          %565 = sbr.rel (%p563) target = $region32
        $region31: #{head_layer_c.7} parent=27 // pred_region
          %567 = vsyncadd %s559, 0
          %s568 = smul.addr %s16, 4
          %s569 = smul.addr %s568, 4
          %s570 = scalar_lea.hbm %s2, %s569
          %s571 = sshll.u32 %s562, 4
          %s572 = int_to_ptr.vmem [resolvable:$true] %s571
          %s573 = sshll.u32 %s570, 4
          %s574 = int_to_ptr.hbm [resolvable:$true] %s573
          %579 = dma.vmem_to_hbm [thread:$0]  %s572, 256, %s574, %s559, 64, 64, 4
        $region32: #{head_layer_c.7} parent=27 // pred_fallthru
          _
      $region28: #{head_layer_c.7} parent=5 // pred_fallthru
        _
      %p580 = scmp.le.s32.totalorder 2, %s11
      // Predicated region
      $region33: #{head_layer_c.7} parent=5 // pred_check
        %p581 = pneg %p580
      $region34: #{head_layer_c.7} parent=5 // pred_check_branch
        %583 = sbr.rel (%p581) target = $region36
      $region35: #{head_layer_c.7} parent=5 // pred_region
        %s584 = ssub.s32 %s11, 2
        // Predicated region
        $region37: #{head_layer_c.7} parent=35 // pred_check
          %p585 = pneg %p87
        $region38: #{head_layer_c.7} parent=35 // pred_check_branch
          %587 = sbr.rel (%p585) target = $region40
        $region39: #{head_layer_c.7} parent=35 // pred_region
          %s588 = sand.u32 %s72, 1
          %s589 = scalar_lea.sflag [#allocation4], %s588
          %s590 = sand.u32 %s72, 1
          %s591 = smul.addr %s590, 16
          %s592 = scalar_lea.vmem [#allocation3], %s591
          %594 = dma.done %s589, 256
        $region40: #{head_layer_c.7} parent=35 // pred_fallthru
          _
      $region36: #{head_layer_c.7} parent=5 // pred_fallthru
        _
    $region6: #{head_layer_c.7} parent=1 // loop_footer
      %s15 = sadd.s32 1, %s11
    $region7: #{head_layer_c.7} parent=1 // loop_footer_branch
      %10 = sbr.rel target = $region3
    $region8: #{head_layer_c.7} parent=1 // loop_exit
      _
    %595 = vsyncpa [#allocation4], 1
    %s596 = scalar_lea.sflag [#allocation4], 1
    %597 = vsyncpa %s596, 1

</llo_original>
